<compile_context>
chip_gen: v7x
topology: tpu7x:2x2x1
jax: 0.10.0
libtpu: 0.0.40
codegen_flags: <defaults>
</compile_context>

<pallas_src>
import math

import jax
import jax.numpy as jnp
from jax import lax
from jax.experimental import pallas as pl
from jax.experimental.pallas import tpu as pltpu

LANES = 128      # vreg lane count -> per-gate column padding target
BT = 8           # batch-tile rows -> f32 sublane count


def make_gru_kernel(n_layers, S, Bt, Hp):
    """Fused multi-layer GRU for one batch tile (time-major, tile-flat layout).

    Positional refs:
      refs[0]              : x       (S*Bt, D0)   bf16   time-major flat input
      refs[1+4l .. 4+4l]   : wih_l   (D_l, 3Hp)   bf16   (gate blocks lane-padded)
                             whh_l   (Hp, 3Hp)    bf16
                             bih_l   (1, 3Hp)     f32    (b_ih + r/z part of b_hh folded)
                             bhn_l   (1, Hp)      f32
      refs[1+4L]           : out     (S*Bt, Hp)   f32
      refs[2+4L]           : ih_sc   (S*Bt, 3Hp)  f32  VMEM (hoisted input projection)
      refs[3+4L]           : seq_sc  (S*Bt, Hp)   bf16 VMEM (inter-layer sequence)
    """

    def kernel(*refs):
        x_ref = refs[0]
        out_ref = refs[1 + 4 * n_layers]
        ih_sc = refs[2 + 4 * n_layers]
        seq_sc = refs[3 + 4 * n_layers]

        cur_ref = x_ref
        for layer in range(n_layers):
            wih_ref, whh_ref, bih_ref, bhn_ref = refs[1 + 4 * layer: 5 + 4 * layer]
            # Last layer writes straight into the output block; intermediate layers
            # write into the bf16 VMEM scratch (no HBM round-trip between layers).
            dst_ref = out_ref if layer == n_layers - 1 else seq_sc

            # Hoisted non-recurrent projection for ALL timesteps: one big MXU matmul.
            # NOTE: for layers >= 2 cur_ref aliases seq_sc; this is safe only because
            # the whole previous sequence is consumed into ih_sc HERE, before the time
            # loop overwrites seq_sc.  (If this projection is ever chunked over time,
            # add a ping-pong second sequence scratch.)
            ih_sc[...] = (
                jnp.dot(cur_ref[...], wih_ref[...],
                        preferred_element_type=jnp.float32)
                + bih_ref[...]
            )

            b_hn = bhn_ref[...]                                    # (1, Hp) f32

            def step(t, h_prev):
                row = t * Bt
                if not isinstance(row, int):
                    row = pl.multiple_of(row, Bt)
                ih_t = ih_sc[pl.ds(row, Bt), :]                    # (Bt, 3Hp) f32
                # whh loaded inside the step: a hoisted (Hp,3Hp) value would spill the
                # vreg file at large H; the in-loop vld hides under the matmul.
                # TODO(synk): pin whh in MXU weight regs via pltpu.matmul_push_rhs/
                # matmul_acc_lhs/matmul_pop for production H (left as jnp.dot here).
                hh = jnp.dot(h_prev.astype(jnp.bfloat16), whh_ref[...],
                             preferred_element_type=jnp.float32)   # (Bt, 3Hp) f32
                # One fused sigmoid for r and z (single EUP push); slices are
                # 128-lane-aligned vreg picks.
                rz = jax.nn.sigmoid(ih_t[:, : 2 * Hp] + hh[:, : 2 * Hp])
                r = rz[:, :Hp]
                z = rz[:, Hp:]
                n = jnp.tanh(ih_t[:, 2 * Hp:] + r * (hh[:, 2 * Hp:] + b_hn))
                h_new = n + z * (h_prev - n)           # == (1-z)*n + z*h_prev
                dst_ref[pl.ds(row, Bt), :] = h_new.astype(dst_ref.dtype)
                return h_new

            h0 = jnp.zeros((Bt, Hp), jnp.float32)
            if S <= 32:
                # Short sequence: full trace-time unroll (static addressing, full LLO
                # scheduler visibility across the serial dependence chain).
                h = h0
                for t in range(S):
                    h = step(t, h)
            else:
                # Partial unroll bounds vreg pressure while cutting loop-control cost.
                lax.fori_loop(0, S, step, h0, unroll=8)

            cur_ref = dst_ref

    return kernel


def _pad_gate_cols(w, H, Hp):
    """(rows, 3H) gate-blocked (r,z,n) -> (rows, 3Hp): each gate zero-padded to Hp lanes."""
    parts = [w[:, g * H:(g + 1) * H] for g in range(3)]
    parts = [jnp.pad(p, ((0, 0), (0, Hp - H))) for p in parts]
    return jnp.concatenate(parts, axis=1)


def init_gru_params(key, in_dim, hid_dim, n_layers):
    """nn.GRU-style U(-1/sqrt(H), 1/sqrt(H)) init, pre-fused & lane-padded layout."""
    H = hid_dim
    Hp = -(-H // LANES) * LANES
    stdv = 1.0 / math.sqrt(H)
    params = []
    for layer in range(n_layers):
        d_in = in_dim if layer == 0 else H
        d_in_p = in_dim if layer == 0 else Hp   # layers >= 1 consume Hp-padded activations
        key, k1, k2, k3, k4 = jax.random.split(key, 5)
        w_ih = jax.random.uniform(k1, (3 * H, d_in), jnp.float32, -stdv, stdv)
        w_hh = jax.random.uniform(k2, (3 * H, H), jnp.float32, -stdv, stdv)
        b_ih = jax.random.uniform(k3, (3 * H,), jnp.float32, -stdv, stdv)
        b_hh = jax.random.uniform(k4, (3 * H,), jnp.float32, -stdv, stdv)
        # PyTorch rows are gate-blocked (r,z,n); transpose so gates block the columns,
        # pad each gate block to Hp lanes, zero-pad input rows to the padded width.
        wih = _pad_gate_cols(jnp.transpose(w_ih), H, Hp)                 # (d_in, 3Hp)
        wih = jnp.pad(wih, ((0, d_in_p - d_in), (0, 0)))                 # (d_in_p, 3Hp)
        whh = _pad_gate_cols(jnp.transpose(w_hh), H, Hp)                 # (H, 3Hp)
        whh = jnp.pad(whh, ((0, Hp - H), (0, 0)))                        # (Hp, 3Hp)
        # Fold b_ih + (r,z part of b_hh) into the hoisted projection bias; keep b_hn
        # separate (PyTorch: n = tanh(Wx + b_in + r * (Wh h + b_hn))).
        bih = _pad_gate_cols(
            (b_ih + jnp.concatenate([b_hh[:2 * H], jnp.zeros((H,), jnp.float32)])
             ).reshape(1, 3 * H), H, Hp)                                 # (1, 3Hp)
        bhn = jnp.pad(b_hh[2 * H:].reshape(1, H), ((0, 0), (0, Hp - H)))  # (1, Hp)
        params.append((wih.astype(jnp.bfloat16), whh.astype(jnp.bfloat16),
                       bih.astype(jnp.float32), bhn.astype(jnp.float32)))
    return params


def gru_layer_forward(x, params, hid_dim):
    """Equivalent of GRULayer.forward (eval mode).

    x: (batch, seq, in_dim) float32, PyTorch batch_first layout
    returns (out[-1, :, :] -> (seq, hid_dim), h[-1, :, :] -> (batch, hid_dim))
    """
    B, S, D = x.shape
    n_layers = len(params)
    H = hid_dim
    Hp = params[0][1].shape[0]          # whh rows = lane-padded hidden width

    # ---- wrapper-side layout plumbing (pure JAX, outside the kernel) ----
    # Pad batch to full 8-row sublane tiles, cast to bf16 (halves input DMA), and go
    # time-major + tile-flat: (n_batch_tiles, S*Bt, D) so every per-timestep slice in
    # the kernel is a contiguous full-sublane (Bt, feat) tile.
    n_bt = -(-B // BT)
    B_pad = n_bt * BT
    x_p = jnp.pad(x, ((0, B_pad - B), (0, 0), (0, 0))).astype(jnp.bfloat16)
    x_tm = (x_p.reshape(n_bt, BT, S, D)
               .transpose(0, 2, 1, 3)                 # (n_bt, S, Bt, D) time-major
               .reshape(n_bt, S * BT, D))

    in_specs = [pl.BlockSpec((None, S * BT, D), lambda b: (b, 0, 0))]
    args = [x_tm]
    for (wih, whh, bih, bhn) in params:
        # Resident weight/bias blocks (same block index every grid step).
        # TODO(synk): for production-sized H on v7x (64 MiB VMEM) add
        # pipeline_mode=pl.Buffered(1) on these constant specs so the weights are not
        # double-buffered, and chunk ih_sc over time.
        in_specs += [
            pl.BlockSpec(wih.shape, lambda b: (0, 0)),
            pl.BlockSpec(whh.shape, lambda b: (0, 0)),
            pl.BlockSpec(bih.shape, lambda b: (0, 0)),
            pl.BlockSpec(bhn.shape, lambda b: (0, 0)),
        ]
        args += [wih, whh, bih, bhn]

    out_tm = pl.pallas_call(
        make_gru_kernel(n_layers, S, BT, Hp),
        out_shape=jax.ShapeDtypeStruct((n_bt, S * BT, Hp), jnp.float32),
        grid_spec=pltpu.PrefetchScalarGridSpec(
            num_scalar_prefetch=0,
            grid=(n_bt,),                                   # independent batch tiles
            in_specs=in_specs,
            out_specs=pl.BlockSpec((None, S * BT, Hp), lambda b: (b, 0, 0)),
            scratch_shapes=[
                pltpu.VMEM((S * BT, 3 * Hp), jnp.float32),  # hoisted ih projection
                pltpu.VMEM((S * BT, Hp), jnp.bfloat16),     # inter-layer sequence (bf16)
            ],
        ),
        compiler_params=pltpu.CompilerParams(
            dimension_semantics=("parallel",),   # batch tiles shard across TCs on v7x
            vmem_limit_bytes=32 * 1024 * 1024,   # explicit: v5e scoped default is 16 MiB
        ),
    )(*args)

    # Undo wrapper layout: (n_bt, S*Bt, Hp) -> (B, S, H), dropping lane/batch padding.
    out_bsh = (out_tm.reshape(n_bt, S, BT, Hp)
                     .transpose(0, 2, 1, 3)
                     .reshape(B_pad, S, Hp)[:B, :, :H])

    # PyTorch: out is (B, S, H) batch_first; out[-1, :, :] is the LAST batch sample's
    # full sequence (intentional reproduction of the module's indexing); h[-1, :, :] is
    # the last layer's final hidden state == out[:, -1, :].
    return out_bsh[B - 1], out_bsh[:, S - 1, :]


if __name__ == "__main__":
    # Small shapes consistent with the module: batch=2, seq=8, in_dim=16, hid=32, 2 layers.
    batch, seq, in_dim, hid_dim, n_layers = 2, 8, 16, 32, 2

    key = jax.random.PRNGKey(0)
    k_x, k_p = jax.random.split(key)
    x = jax.random.normal(k_x, (batch, seq, in_dim), dtype=jnp.float32)
    params = init_gru_params(k_p, in_dim, hid_dim, n_layers)
    # TODO(synk): nn.GRU inter-layer dropout is training-only; eval-mode forward skips it.

    out, h = gru_layer_forward(x, params, hid_dim)
    jax.block_until_ready((out, h))

    assert out.shape == (seq, hid_dim), out.shape
    assert h.shape == (batch, hid_dim), h.shape
    assert bool(jnp.all(jnp.isfinite(out))) and bool(jnp.all(jnp.isfinite(h)))
    print("KERNEL_OK")
</pallas_src>

<mosaic_0001>
module attributes {stable_mosaic.version = 11 : i64} {
  func.func @kernel(%arg0: i32, %arg1: memref<1x64x16xbf16, #tpu.memory_space<vmem>>, %arg2: memref<16x384xbf16, #tpu.memory_space<vmem>>, %arg3: memref<128x384xbf16, #tpu.memory_space<vmem>>, %arg4: memref<1x384xf32, #tpu.memory_space<vmem>>, %arg5: memref<1x128xf32, #tpu.memory_space<vmem>>, %arg6: memref<128x384xbf16, #tpu.memory_space<vmem>>, %arg7: memref<128x384xbf16, #tpu.memory_space<vmem>>, %arg8: memref<1x384xf32, #tpu.memory_space<vmem>>, %arg9: memref<1x128xf32, #tpu.memory_space<vmem>>, %arg10: memref<1x64x128xf32, #tpu.memory_space<vmem>>, %arg11: memref<64x384xf32, #tpu.memory_space<vmem>>, %arg12: memref<64x128xbf16, #tpu.memory_space<vmem>>) attributes {dimension_semantics = [#tpu.dimension_semantics<parallel>], iteration_bounds = array<i64: 1>, scalar_prefetch = 0 : i64, scratch_operands = 2 : i64, tpu.core_type = #tpu.core_type<tc>, window_params = [{transform_indices = @transform_0, window_bounds = array<i64: 1, 64, 16>}, {pipeline_mode = #tpu.pipeline_mode<synchronous>, transform_indices = @transform_1, window_bounds = array<i64: 16, 384>}, {pipeline_mode = #tpu.pipeline_mode<synchronous>, transform_indices = @transform_2, window_bounds = array<i64: 128, 384>}, {pipeline_mode = #tpu.pipeline_mode<synchronous>, transform_indices = @transform_3, window_bounds = array<i64: 1, 384>}, {pipeline_mode = #tpu.pipeline_mode<synchronous>, transform_indices = @transform_4, window_bounds = array<i64: 1, 128>}, {pipeline_mode = #tpu.pipeline_mode<synchronous>, transform_indices = @transform_5, window_bounds = array<i64: 128, 384>}, {pipeline_mode = #tpu.pipeline_mode<synchronous>, transform_indices = @transform_6, window_bounds = array<i64: 128, 384>}, {pipeline_mode = #tpu.pipeline_mode<synchronous>, transform_indices = @transform_7, window_bounds = array<i64: 1, 384>}, {pipeline_mode = #tpu.pipeline_mode<synchronous>, transform_indices = @transform_8, window_bounds = array<i64: 1, 128>}, {transform_indices = @transform_9, window_bounds = array<i64: 1, 64, 128>}]} {
    %c0 = arith.constant 0 : index
    %c0_0 = arith.constant 0 : index
    %c0_1 = arith.constant 0 : index
    %0 = vector.load %arg1[%c0, %c0_0, %c0_1] : memref<1x64x16xbf16, #tpu.memory_space<vmem>>, vector<1x64x16xbf16>
    %1 = vector.shape_cast %0 : vector<1x64x16xbf16> to vector<64x16xbf16>
    %c0_2 = arith.constant 0 : index
    %c0_3 = arith.constant 0 : index
    %2 = vector.load %arg2[%c0_2, %c0_3] : memref<16x384xbf16, #tpu.memory_space<vmem>>, vector<16x384xbf16>
    %cst = arith.constant dense<0.000000e+00> : vector<64x384xf32>
    %3 = tpu.matmul %1, %2, %cst {dimension_numbers = #tpu.dot_dimension_numbers<[1], [0], [0], [1], [0, 0, 1, 1], [], []>} : vector<64x16xbf16>, vector<16x384xbf16>, vector<64x384xf32> -> vector<64x384xf32>
    %c0_4 = arith.constant 0 : index
    %c0_5 = arith.constant 0 : index
    %4 = vector.load %arg4[%c0_4, %c0_5] : memref<1x384xf32, #tpu.memory_space<vmem>>, vector<1x384xf32>
    %5 = vector.broadcast %4 : vector<1x384xf32> to vector<64x384xf32>
    %6 = arith.addf %3, %5 : vector<64x384xf32>
    %c0_6 = arith.constant 0 : index
    %c0_7 = arith.constant 0 : index
    %7 = vector.load %arg11[%c0_6, %c0_7] : memref<64x384xf32, #tpu.memory_space<vmem>>, vector<64x384xf32>
    tpu.vector_store %arg11[%c0_6, %c0_7], %6 {strides = array<i32>} : memref<64x384xf32, #tpu.memory_space<vmem>>, vector<64x384xf32>,
    %c0_8 = arith.constant 0 : index
    %c0_9 = arith.constant 0 : index
    %8 = vector.load %arg5[%c0_8, %c0_9] : memref<1x128xf32, #tpu.memory_space<vmem>>, vector<1x128xf32>
    %cst_10 = arith.constant 0.000000e+00 : f32
    %9 = vector.broadcast %cst_10 : f32 to vector<8x128xf32>
    %c0_11 = arith.constant 0 : index
    %c0_12 = arith.constant 0 : index
    %10 = vector.load %arg11[%c0_11, %c0_12] : memref<64x384xf32, #tpu.memory_space<vmem>>, vector<8x384xf32>
    %11 = arith.truncf %9 : vector<8x128xf32> to vector<8x128xbf16>
    %c0_13 = arith.constant 0 : index
    %c0_14 = arith.constant 0 : index
    %12 = vector.load %arg3[%c0_13, %c0_14] : memref<128x384xbf16, #tpu.memory_space<vmem>>, vector<128x384xbf16>
    %cst_15 = arith.constant dense<0.000000e+00> : vector<8x384xf32>
    %13 = tpu.matmul %11, %12, %cst_15 {dimension_numbers = #tpu.dot_dimension_numbers<[1], [0], [0], [1], [0, 0, 1, 1], [], []>} : vector<8x128xbf16>, vector<128x384xbf16>, vector<8x384xf32> -> vector<8x384xf32>
    %14 = vector.extract_strided_slice %10 {offsets = [0, 0], sizes = [8, 256], strides = [1, 1]} : vector<8x384xf32> to vector<8x256xf32>
    %15 = vector.extract_strided_slice %13 {offsets = [0, 0], sizes = [8, 256], strides = [1, 1]} : vector<8x384xf32> to vector<8x256xf32>
    %16 = arith.addf %14, %15 : vector<8x256xf32>
    %17 = arith.negf %16 : vector<8x256xf32>
    %18 = math.exp %17 : vector<8x256xf32>
    %cst_16 = arith.constant 1.000000e+00 : f32
    %19 = vector.broadcast %cst_16 : f32 to vector<8x256xf32>
    %20 = arith.addf %19, %18 : vector<8x256xf32>
    %21 = arith.divf %19, %20 : vector<8x256xf32>
    %22 = vector.extract_strided_slice %21 {offsets = [0, 0], sizes = [8, 128], strides = [1, 1]} : vector<8x256xf32> to vector<8x128xf32>
    %23 = vector.extract_strided_slice %21 {offsets = [0, 128], sizes = [8, 128], strides = [1, 1]} : vector<8x256xf32> to vector<8x128xf32>
    %24 = vector.extract_strided_slice %10 {offsets = [0, 256], sizes = [8, 128], strides = [1, 1]} : vector<8x384xf32> to vector<8x128xf32>
    %25 = vector.extract_strided_slice %13 {offsets = [0, 256], sizes = [8, 128], strides = [1, 1]} : vector<8x384xf32> to vector<8x128xf32>
    %26 = vector.broadcast %8 : vector<1x128xf32> to vector<8x128xf32>
    %27 = arith.addf %25, %26 : vector<8x128xf32>
    %28 = arith.mulf %22, %27 : vector<8x128xf32>
    %29 = arith.addf %24, %28 : vector<8x128xf32>
    %30 = math.tanh %29 : vector<8x128xf32>
    %31 = arith.subf %9, %30 : vector<8x128xf32>
    %32 = arith.mulf %23, %31 : vector<8x128xf32>
    %33 = arith.addf %30, %32 : vector<8x128xf32>
    %34 = arith.truncf %33 : vector<8x128xf32> to vector<8x128xbf16>
    %c0_17 = arith.constant 0 : index
    %c0_18 = arith.constant 0 : index
    %35 = vector.load %arg12[%c0_17, %c0_18] : memref<64x128xbf16, #tpu.memory_space<vmem>>, vector<8x128xbf16>
    tpu.vector_store %arg12[%c0_17, %c0_18], %34 {strides = array<i32>} : memref<64x128xbf16, #tpu.memory_space<vmem>>, vector<8x128xbf16>,
    %c8 = arith.constant 8 : index
    %c0_19 = arith.constant 0 : index
    %36 = vector.load %arg11[%c8, %c0_19] : memref<64x384xf32, #tpu.memory_space<vmem>>, vector<8x384xf32>
    %37 = arith.truncf %33 : vector<8x128xf32> to vector<8x128xbf16>
    %c0_20 = arith.constant 0 : index
    %c0_21 = arith.constant 0 : index
    %38 = vector.load %arg3[%c0_20, %c0_21] : memref<128x384xbf16, #tpu.memory_space<vmem>>, vector<128x384xbf16>
    %cst_22 = arith.constant dense<0.000000e+00> : vector<8x384xf32>
    %39 = tpu.matmul %37, %38, %cst_22 {dimension_numbers = #tpu.dot_dimension_numbers<[1], [0], [0], [1], [0, 0, 1, 1], [], []>} : vector<8x128xbf16>, vector<128x384xbf16>, vector<8x384xf32> -> vector<8x384xf32>
    %40 = vector.extract_strided_slice %36 {offsets = [0, 0], sizes = [8, 256], strides = [1, 1]} : vector<8x384xf32> to vector<8x256xf32>
    %41 = vector.extract_strided_slice %39 {offsets = [0, 0], sizes = [8, 256], strides = [1, 1]} : vector<8x384xf32> to vector<8x256xf32>
    %42 = arith.addf %40, %41 : vector<8x256xf32>
    %43 = arith.negf %42 : vector<8x256xf32>
    %44 = math.exp %43 : vector<8x256xf32>
    %cst_23 = arith.constant 1.000000e+00 : f32
    %45 = vector.broadcast %cst_23 : f32 to vector<8x256xf32>
    %46 = arith.addf %45, %44 : vector<8x256xf32>
    %47 = arith.divf %45, %46 : vector<8x256xf32>
    %48 = vector.extract_strided_slice %47 {offsets = [0, 0], sizes = [8, 128], strides = [1, 1]} : vector<8x256xf32> to vector<8x128xf32>
    %49 = vector.extract_strided_slice %47 {offsets = [0, 128], sizes = [8, 128], strides = [1, 1]} : vector<8x256xf32> to vector<8x128xf32>
    %50 = vector.extract_strided_slice %36 {offsets = [0, 256], sizes = [8, 128], strides = [1, 1]} : vector<8x384xf32> to vector<8x128xf32>
    %51 = vector.extract_strided_slice %39 {offsets = [0, 256], sizes = [8, 128], strides = [1, 1]} : vector<8x384xf32> to vector<8x128xf32>
    %52 = vector.broadcast %8 : vector<1x128xf32> to vector<8x128xf32>
    %53 = arith.addf %51, %52 : vector<8x128xf32>
    %54 = arith.mulf %48, %53 : vector<8x128xf32>
    %55 = arith.addf %50, %54 : vector<8x128xf32>
    %56 = math.tanh %55 : vector<8x128xf32>
    %57 = arith.subf %33, %56 : vector<8x128xf32>
    %58 = arith.mulf %49, %57 : vector<8x128xf32>
    %59 = arith.addf %56, %58 : vector<8x128xf32>
    %60 = arith.truncf %59 : vector<8x128xf32> to vector<8x128xbf16>
    %c8_24 = arith.constant 8 : index
    %c0_25 = arith.constant 0 : index
    %61 = vector.load %arg12[%c8_24, %c0_25] : memref<64x128xbf16, #tpu.memory_space<vmem>>, vector<8x128xbf16>
    tpu.vector_store %arg12[%c8_24, %c0_25], %60 {strides = array<i32>} : memref<64x128xbf16, #tpu.memory_space<vmem>>, vector<8x128xbf16>,
    %c16 = arith.constant 16 : index
    %c0_26 = arith.constant 0 : index
    %62 = vector.load %arg11[%c16, %c0_26] : memref<64x384xf32, #tpu.memory_space<vmem>>, vector<8x384xf32>
    %63 = arith.truncf %59 : vector<8x128xf32> to vector<8x128xbf16>
    %c0_27 = arith.constant 0 : index
    %c0_28 = arith.constant 0 : index
    %64 = vector.load %arg3[%c0_27, %c0_28] : memref<128x384xbf16, #tpu.memory_space<vmem>>, vector<128x384xbf16>
    %cst_29 = arith.constant dense<0.000000e+00> : vector<8x384xf32>
    %65 = tpu.matmul %63, %64, %cst_29 {dimension_numbers = #tpu.dot_dimension_numbers<[1], [0], [0], [1], [0, 0, 1, 1], [], []>} : vector<8x128xbf16>, vector<128x384xbf16>, vector<8x384xf32> -> vector<8x384xf32>
    %66 = vector.extract_strided_slice %62 {offsets = [0, 0], sizes = [8, 256], strides = [1, 1]} : vector<8x384xf32> to vector<8x256xf32>
    %67 = vector.extract_strided_slice %65 {offsets = [0, 0], sizes = [8, 256], strides = [1, 1]} : vector<8x384xf32> to vector<8x256xf32>
    %68 = arith.addf %66, %67 : vector<8x256xf32>
    %69 = arith.negf %68 : vector<8x256xf32>
    %70 = math.exp %69 : vector<8x256xf32>
    %cst_30 = arith.constant 1.000000e+00 : f32
    %71 = vector.broadcast %cst_30 : f32 to vector<8x256xf32>
    %72 = arith.addf %71, %70 : vector<8x256xf32>
    %73 = arith.divf %71, %72 : vector<8x256xf32>
    %74 = vector.extract_strided_slice %73 {offsets = [0, 0], sizes = [8, 128], strides = [1, 1]} : vector<8x256xf32> to vector<8x128xf32>
    %75 = vector.extract_strided_slice %73 {offsets = [0, 128], sizes = [8, 128], strides = [1, 1]} : vector<8x256xf32> to vector<8x128xf32>
    %76 = vector.extract_strided_slice %62 {offsets = [0, 256], sizes = [8, 128], strides = [1, 1]} : vector<8x384xf32> to vector<8x128xf32>
    %77 = vector.extract_strided_slice %65 {offsets = [0, 256], sizes = [8, 128], strides = [1, 1]} : vector<8x384xf32> to vector<8x128xf32>
    %78 = vector.broadcast %8 : vector<1x128xf32> to vector<8x128xf32>
    %79 = arith.addf %77, %78 : vector<8x128xf32>
    %80 = arith.mulf %74, %79 : vector<8x128xf32>
    %81 = arith.addf %76, %80 : vector<8x128xf32>
    %82 = math.tanh %81 : vector<8x128xf32>
    %83 = arith.subf %59, %82 : vector<8x128xf32>
    %84 = arith.mulf %75, %83 : vector<8x128xf32>
    %85 = arith.addf %82, %84 : vector<8x128xf32>
    %86 = arith.truncf %85 : vector<8x128xf32> to vector<8x128xbf16>
    %c16_31 = arith.constant 16 : index
    %c0_32 = arith.constant 0 : index
    %87 = vector.load %arg12[%c16_31, %c0_32] : memref<64x128xbf16, #tpu.memory_space<vmem>>, vector<8x128xbf16>
    tpu.vector_store %arg12[%c16_31, %c0_32], %86 {strides = array<i32>} : memref<64x128xbf16, #tpu.memory_space<vmem>>, vector<8x128xbf16>,
    %c24 = arith.constant 24 : index
    %c0_33 = arith.constant 0 : index
    %88 = vector.load %arg11[%c24, %c0_33] : memref<64x384xf32, #tpu.memory_space<vmem>>, vector<8x384xf32>
    %89 = arith.truncf %85 : vector<8x128xf32> to vector<8x128xbf16>
    %c0_34 = arith.constant 0 : index
    %c0_35 = arith.constant 0 : index
    %90 = vector.load %arg3[%c0_34, %c0_35] : memref<128x384xbf16, #tpu.memory_space<vmem>>, vector<128x384xbf16>
    %cst_36 = arith.constant dense<0.000000e+00> : vector<8x384xf32>
    %91 = tpu.matmul %89, %90, %cst_36 {dimension_numbers = #tpu.dot_dimension_numbers<[1], [0], [0], [1], [0, 0, 1, 1], [], []>} : vector<8x128xbf16>, vector<128x384xbf16>, vector<8x384xf32> -> vector<8x384xf32>
    %92 = vector.extract_strided_slice %88 {offsets = [0, 0], sizes = [8, 256], strides = [1, 1]} : vector<8x384xf32> to vector<8x256xf32>
    %93 = vector.extract_strided_slice %91 {offsets = [0, 0], sizes = [8, 256], strides = [1, 1]} : vector<8x384xf32> to vector<8x256xf32>
    %94 = arith.addf %92, %93 : vector<8x256xf32>
    %95 = arith.negf %94 : vector<8x256xf32>
    %96 = math.exp %95 : vector<8x256xf32>
    %cst_37 = arith.constant 1.000000e+00 : f32
    %97 = vector.broadcast %cst_37 : f32 to vector<8x256xf32>
    %98 = arith.addf %97, %96 : vector<8x256xf32>
    %99 = arith.divf %97, %98 : vector<8x256xf32>
    %100 = vector.extract_strided_slice %99 {offsets = [0, 0], sizes = [8, 128], strides = [1, 1]} : vector<8x256xf32> to vector<8x128xf32>
    %101 = vector.extract_strided_slice %99 {offsets = [0, 128], sizes = [8, 128], strides = [1, 1]} : vector<8x256xf32> to vector<8x128xf32>
    %102 = vector.extract_strided_slice %88 {offsets = [0, 256], sizes = [8, 128], strides = [1, 1]} : vector<8x384xf32> to vector<8x128xf32>
    %103 = vector.extract_strided_slice %91 {offsets = [0, 256], sizes = [8, 128], strides = [1, 1]} : vector<8x384xf32> to vector<8x128xf32>
    %104 = vector.broadcast %8 : vector<1x128xf32> to vector<8x128xf32>
    %105 = arith.addf %103, %104 : vector<8x128xf32>
    %106 = arith.mulf %100, %105 : vector<8x128xf32>
    %107 = arith.addf %102, %106 : vector<8x128xf32>
    %108 = math.tanh %107 : vector<8x128xf32>
    %109 = arith.subf %85, %108 : vector<8x128xf32>
    %110 = arith.mulf %101, %109 : vector<8x128xf32>
    %111 = arith.addf %108, %110 : vector<8x128xf32>
    %112 = arith.truncf %111 : vector<8x128xf32> to vector<8x128xbf16>
    %c24_38 = arith.constant 24 : index
    %c0_39 = arith.constant 0 : index
    %113 = vector.load %arg12[%c24_38, %c0_39] : memref<64x128xbf16, #tpu.memory_space<vmem>>, vector<8x128xbf16>
    tpu.vector_store %arg12[%c24_38, %c0_39], %112 {strides = array<i32>} : memref<64x128xbf16, #tpu.memory_space<vmem>>, vector<8x128xbf16>,
    %c32 = arith.constant 32 : index
    %c0_40 = arith.constant 0 : index
    %114 = vector.load %arg11[%c32, %c0_40] : memref<64x384xf32, #tpu.memory_space<vmem>>, vector<8x384xf32>
    %115 = arith.truncf %111 : vector<8x128xf32> to vector<8x128xbf16>
    %c0_41 = arith.constant 0 : index
    %c0_42 = arith.constant 0 : index
    %116 = vector.load %arg3[%c0_41, %c0_42] : memref<128x384xbf16, #tpu.memory_space<vmem>>, vector<128x384xbf16>
    %cst_43 = arith.constant dense<0.000000e+00> : vector<8x384xf32>
    %117 = tpu.matmul %115, %116, %cst_43 {dimension_numbers = #tpu.dot_dimension_numbers<[1], [0], [0], [1], [0, 0, 1, 1], [], []>} : vector<8x128xbf16>, vector<128x384xbf16>, vector<8x384xf32> -> vector<8x384xf32>
    %118 = vector.extract_strided_slice %114 {offsets = [0, 0], sizes = [8, 256], strides = [1, 1]} : vector<8x384xf32> to vector<8x256xf32>
    %119 = vector.extract_strided_slice %117 {offsets = [0, 0], sizes = [8, 256], strides = [1, 1]} : vector<8x384xf32> to vector<8x256xf32>
    %120 = arith.addf %118, %119 : vector<8x256xf32>
    %121 = arith.negf %120 : vector<8x256xf32>
    %122 = math.exp %121 : vector<8x256xf32>
    %cst_44 = arith.constant 1.000000e+00 : f32
    %123 = vector.broadcast %cst_44 : f32 to vector<8x256xf32>
    %124 = arith.addf %123, %122 : vector<8x256xf32>
    %125 = arith.divf %123, %124 : vector<8x256xf32>
    %126 = vector.extract_strided_slice %125 {offsets = [0, 0], sizes = [8, 128], strides = [1, 1]} : vector<8x256xf32> to vector<8x128xf32>
    %127 = vector.extract_strided_slice %125 {offsets = [0, 128], sizes = [8, 128], strides = [1, 1]} : vector<8x256xf32> to vector<8x128xf32>
    %128 = vector.extract_strided_slice %114 {offsets = [0, 256], sizes = [8, 128], strides = [1, 1]} : vector<8x384xf32> to vector<8x128xf32>
    %129 = vector.extract_strided_slice %117 {offsets = [0, 256], sizes = [8, 128], strides = [1, 1]} : vector<8x384xf32> to vector<8x128xf32>
    %130 = vector.broadcast %8 : vector<1x128xf32> to vector<8x128xf32>
    %131 = arith.addf %129, %130 : vector<8x128xf32>
    %132 = arith.mulf %126, %131 : vector<8x128xf32>
    %133 = arith.addf %128, %132 : vector<8x128xf32>
    %134 = math.tanh %133 : vector<8x128xf32>
    %135 = arith.subf %111, %134 : vector<8x128xf32>
    %136 = arith.mulf %127, %135 : vector<8x128xf32>
    %137 = arith.addf %134, %136 : vector<8x128xf32>
    %138 = arith.truncf %137 : vector<8x128xf32> to vector<8x128xbf16>
    %c32_45 = arith.constant 32 : index
    %c0_46 = arith.constant 0 : index
    %139 = vector.load %arg12[%c32_45, %c0_46] : memref<64x128xbf16, #tpu.memory_space<vmem>>, vector<8x128xbf16>
    tpu.vector_store %arg12[%c32_45, %c0_46], %138 {strides = array<i32>} : memref<64x128xbf16, #tpu.memory_space<vmem>>, vector<8x128xbf16>,
    %c40 = arith.constant 40 : index
    %c0_47 = arith.constant 0 : index
    %140 = vector.load %arg11[%c40, %c0_47] : memref<64x384xf32, #tpu.memory_space<vmem>>, vector<8x384xf32>
    %141 = arith.truncf %137 : vector<8x128xf32> to vector<8x128xbf16>
    %c0_48 = arith.constant 0 : index
    %c0_49 = arith.constant 0 : index
    %142 = vector.load %arg3[%c0_48, %c0_49] : memref<128x384xbf16, #tpu.memory_space<vmem>>, vector<128x384xbf16>
    %cst_50 = arith.constant dense<0.000000e+00> : vector<8x384xf32>
    %143 = tpu.matmul %141, %142, %cst_50 {dimension_numbers = #tpu.dot_dimension_numbers<[1], [0], [0], [1], [0, 0, 1, 1], [], []>} : vector<8x128xbf16>, vector<128x384xbf16>, vector<8x384xf32> -> vector<8x384xf32>
    %144 = vector.extract_strided_slice %140 {offsets = [0, 0], sizes = [8, 256], strides = [1, 1]} : vector<8x384xf32> to vector<8x256xf32>
    %145 = vector.extract_strided_slice %143 {offsets = [0, 0], sizes = [8, 256], strides = [1, 1]} : vector<8x384xf32> to vector<8x256xf32>
    %146 = arith.addf %144, %145 : vector<8x256xf32>
    %147 = arith.negf %146 : vector<8x256xf32>
    %148 = math.exp %147 : vector<8x256xf32>
    %cst_51 = arith.constant 1.000000e+00 : f32
    %149 = vector.broadcast %cst_51 : f32 to vector<8x256xf32>
    %150 = arith.addf %149, %148 : vector<8x256xf32>
    %151 = arith.divf %149, %150 : vector<8x256xf32>
    %152 = vector.extract_strided_slice %151 {offsets = [0, 0], sizes = [8, 128], strides = [1, 1]} : vector<8x256xf32> to vector<8x128xf32>
    %153 = vector.extract_strided_slice %151 {offsets = [0, 128], sizes = [8, 128], strides = [1, 1]} : vector<8x256xf32> to vector<8x128xf32>
    %154 = vector.extract_strided_slice %140 {offsets = [0, 256], sizes = [8, 128], strides = [1, 1]} : vector<8x384xf32> to vector<8x128xf32>
    %155 = vector.extract_strided_slice %143 {offsets = [0, 256], sizes = [8, 128], strides = [1, 1]} : vector<8x384xf32> to vector<8x128xf32>
    %156 = vector.broadcast %8 : vector<1x128xf32> to vector<8x128xf32>
    %157 = arith.addf %155, %156 : vector<8x128xf32>
    %158 = arith.mulf %152, %157 : vector<8x128xf32>
    %159 = arith.addf %154, %158 : vector<8x128xf32>
    %160 = math.tanh %159 : vector<8x128xf32>
    %161 = arith.subf %137, %160 : vector<8x128xf32>
    %162 = arith.mulf %153, %161 : vector<8x128xf32>
    %163 = arith.addf %160, %162 : vector<8x128xf32>
    %164 = arith.truncf %163 : vector<8x128xf32> to vector<8x128xbf16>
    %c40_52 = arith.constant 40 : index
    %c0_53 = arith.constant 0 : index
    %165 = vector.load %arg12[%c40_52, %c0_53] : memref<64x128xbf16, #tpu.memory_space<vmem>>, vector<8x128xbf16>
    tpu.vector_store %arg12[%c40_52, %c0_53], %164 {strides = array<i32>} : memref<64x128xbf16, #tpu.memory_space<vmem>>, vector<8x128xbf16>,
    %c48 = arith.constant 48 : index
    %c0_54 = arith.constant 0 : index
    %166 = vector.load %arg11[%c48, %c0_54] : memref<64x384xf32, #tpu.memory_space<vmem>>, vector<8x384xf32>
    %167 = arith.truncf %163 : vector<8x128xf32> to vector<8x128xbf16>
    %c0_55 = arith.constant 0 : index
    %c0_56 = arith.constant 0 : index
    %168 = vector.load %arg3[%c0_55, %c0_56] : memref<128x384xbf16, #tpu.memory_space<vmem>>, vector<128x384xbf16>
    %cst_57 = arith.constant dense<0.000000e+00> : vector<8x384xf32>
    %169 = tpu.matmul %167, %168, %cst_57 {dimension_numbers = #tpu.dot_dimension_numbers<[1], [0], [0], [1], [0, 0, 1, 1], [], []>} : vector<8x128xbf16>, vector<128x384xbf16>, vector<8x384xf32> -> vector<8x384xf32>
    %170 = vector.extract_strided_slice %166 {offsets = [0, 0], sizes = [8, 256], strides = [1, 1]} : vector<8x384xf32> to vector<8x256xf32>
    %171 = vector.extract_strided_slice %169 {offsets = [0, 0], sizes = [8, 256], strides = [1, 1]} : vector<8x384xf32> to vector<8x256xf32>
    %172 = arith.addf %170, %171 : vector<8x256xf32>
    %173 = arith.negf %172 : vector<8x256xf32>
    %174 = math.exp %173 : vector<8x256xf32>
    %cst_58 = arith.constant 1.000000e+00 : f32
    %175 = vector.broadcast %cst_58 : f32 to vector<8x256xf32>
    %176 = arith.addf %175, %174 : vector<8x256xf32>
    %177 = arith.divf %175, %176 : vector<8x256xf32>
    %178 = vector.extract_strided_slice %177 {offsets = [0, 0], sizes = [8, 128], strides = [1, 1]} : vector<8x256xf32> to vector<8x128xf32>
    %179 = vector.extract_strided_slice %177 {offsets = [0, 128], sizes = [8, 128], strides = [1, 1]} : vector<8x256xf32> to vector<8x128xf32>
    %180 = vector.extract_strided_slice %166 {offsets = [0, 256], sizes = [8, 128], strides = [1, 1]} : vector<8x384xf32> to vector<8x128xf32>
    %181 = vector.extract_strided_slice %169 {offsets = [0, 256], sizes = [8, 128], strides = [1, 1]} : vector<8x384xf32> to vector<8x128xf32>
    %182 = vector.broadcast %8 : vector<1x128xf32> to vector<8x128xf32>
    %183 = arith.addf %181, %182 : vector<8x128xf32>
    %184 = arith.mulf %178, %183 : vector<8x128xf32>
    %185 = arith.addf %180, %184 : vector<8x128xf32>
    %186 = math.tanh %185 : vector<8x128xf32>
    %187 = arith.subf %163, %186 : vector<8x128xf32>
    %188 = arith.mulf %179, %187 : vector<8x128xf32>
    %189 = arith.addf %186, %188 : vector<8x128xf32>
    %190 = arith.truncf %189 : vector<8x128xf32> to vector<8x128xbf16>
    %c48_59 = arith.constant 48 : index
    %c0_60 = arith.constant 0 : index
    %191 = vector.load %arg12[%c48_59, %c0_60] : memref<64x128xbf16, #tpu.memory_space<vmem>>, vector<8x128xbf16>
    tpu.vector_store %arg12[%c48_59, %c0_60], %190 {strides = array<i32>} : memref<64x128xbf16, #tpu.memory_space<vmem>>, vector<8x128xbf16>,
    %c56 = arith.constant 56 : index
    %c0_61 = arith.constant 0 : index
    %192 = vector.load %arg11[%c56, %c0_61] : memref<64x384xf32, #tpu.memory_space<vmem>>, vector<8x384xf32>
    %193 = arith.truncf %189 : vector<8x128xf32> to vector<8x128xbf16>
    %c0_62 = arith.constant 0 : index
    %c0_63 = arith.constant 0 : index
    %194 = vector.load %arg3[%c0_62, %c0_63] : memref<128x384xbf16, #tpu.memory_space<vmem>>, vector<128x384xbf16>
    %cst_64 = arith.constant dense<0.000000e+00> : vector<8x384xf32>
    %195 = tpu.matmul %193, %194, %cst_64 {dimension_numbers = #tpu.dot_dimension_numbers<[1], [0], [0], [1], [0, 0, 1, 1], [], []>} : vector<8x128xbf16>, vector<128x384xbf16>, vector<8x384xf32> -> vector<8x384xf32>
    %196 = vector.extract_strided_slice %192 {offsets = [0, 0], sizes = [8, 256], strides = [1, 1]} : vector<8x384xf32> to vector<8x256xf32>
    %197 = vector.extract_strided_slice %195 {offsets = [0, 0], sizes = [8, 256], strides = [1, 1]} : vector<8x384xf32> to vector<8x256xf32>
    %198 = arith.addf %196, %197 : vector<8x256xf32>
    %199 = arith.negf %198 : vector<8x256xf32>
    %200 = math.exp %199 : vector<8x256xf32>
    %cst_65 = arith.constant 1.000000e+00 : f32
    %201 = vector.broadcast %cst_65 : f32 to vector<8x256xf32>
    %202 = arith.addf %201, %200 : vector<8x256xf32>
    %203 = arith.divf %201, %202 : vector<8x256xf32>
    %204 = vector.extract_strided_slice %203 {offsets = [0, 0], sizes = [8, 128], strides = [1, 1]} : vector<8x256xf32> to vector<8x128xf32>
    %205 = vector.extract_strided_slice %203 {offsets = [0, 128], sizes = [8, 128], strides = [1, 1]} : vector<8x256xf32> to vector<8x128xf32>
    %206 = vector.extract_strided_slice %192 {offsets = [0, 256], sizes = [8, 128], strides = [1, 1]} : vector<8x384xf32> to vector<8x128xf32>
    %207 = vector.extract_strided_slice %195 {offsets = [0, 256], sizes = [8, 128], strides = [1, 1]} : vector<8x384xf32> to vector<8x128xf32>
    %208 = vector.broadcast %8 : vector<1x128xf32> to vector<8x128xf32>
    %209 = arith.addf %207, %208 : vector<8x128xf32>
    %210 = arith.mulf %204, %209 : vector<8x128xf32>
    %211 = arith.addf %206, %210 : vector<8x128xf32>
    %212 = math.tanh %211 : vector<8x128xf32>
    %213 = arith.subf %189, %212 : vector<8x128xf32>
    %214 = arith.mulf %205, %213 : vector<8x128xf32>
    %215 = arith.addf %212, %214 : vector<8x128xf32>
    %216 = arith.truncf %215 : vector<8x128xf32> to vector<8x128xbf16>
    %c56_66 = arith.constant 56 : index
    %c0_67 = arith.constant 0 : index
    %217 = vector.load %arg12[%c56_66, %c0_67] : memref<64x128xbf16, #tpu.memory_space<vmem>>, vector<8x128xbf16>
    tpu.vector_store %arg12[%c56_66, %c0_67], %216 {strides = array<i32>} : memref<64x128xbf16, #tpu.memory_space<vmem>>, vector<8x128xbf16>,
    %c0_68 = arith.constant 0 : index
    %c0_69 = arith.constant 0 : index
    %218 = vector.load %arg12[%c0_68, %c0_69] : memref<64x128xbf16, #tpu.memory_space<vmem>>, vector<64x128xbf16>
    %c0_70 = arith.constant 0 : index
    %c0_71 = arith.constant 0 : index
    %219 = vector.load %arg6[%c0_70, %c0_71] : memref<128x384xbf16, #tpu.memory_space<vmem>>, vector<128x384xbf16>
    %cst_72 = arith.constant dense<0.000000e+00> : vector<64x384xf32>
    %220 = tpu.matmul %218, %219, %cst_72 {dimension_numbers = #tpu.dot_dimension_numbers<[1], [0], [0], [1], [0, 0, 1, 1], [], []>} : vector<64x128xbf16>, vector<128x384xbf16>, vector<64x384xf32> -> vector<64x384xf32>
    %c0_73 = arith.constant 0 : index
    %c0_74 = arith.constant 0 : index
    %221 = vector.load %arg8[%c0_73, %c0_74] : memref<1x384xf32, #tpu.memory_space<vmem>>, vector<1x384xf32>
    %222 = vector.broadcast %221 : vector<1x384xf32> to vector<64x384xf32>
    %223 = arith.addf %220, %222 : vector<64x384xf32>
    %c0_75 = arith.constant 0 : index
    %c0_76 = arith.constant 0 : index
    %224 = vector.load %arg11[%c0_75, %c0_76] : memref<64x384xf32, #tpu.memory_space<vmem>>, vector<64x384xf32>
    tpu.vector_store %arg11[%c0_75, %c0_76], %223 {strides = array<i32>} : memref<64x384xf32, #tpu.memory_space<vmem>>, vector<64x384xf32>,
    %c0_77 = arith.constant 0 : index
    %c0_78 = arith.constant 0 : index
    %225 = vector.load %arg9[%c0_77, %c0_78] : memref<1x128xf32, #tpu.memory_space<vmem>>, vector<1x128xf32>
    %cst_79 = arith.constant 0.000000e+00 : f32
    %226 = vector.broadcast %cst_79 : f32 to vector<8x128xf32>
    %c0_80 = arith.constant 0 : index
    %c0_81 = arith.constant 0 : index
    %227 = vector.load %arg11[%c0_80, %c0_81] : memref<64x384xf32, #tpu.memory_space<vmem>>, vector<8x384xf32>
    %228 = arith.truncf %226 : vector<8x128xf32> to vector<8x128xbf16>
    %c0_82 = arith.constant 0 : index
    %c0_83 = arith.constant 0 : index
    %229 = vector.load %arg7[%c0_82, %c0_83] : memref<128x384xbf16, #tpu.memory_space<vmem>>, vector<128x384xbf16>
    %cst_84 = arith.constant dense<0.000000e+00> : vector<8x384xf32>
    %230 = tpu.matmul %228, %229, %cst_84 {dimension_numbers = #tpu.dot_dimension_numbers<[1], [0], [0], [1], [0, 0, 1, 1], [], []>} : vector<8x128xbf16>, vector<128x384xbf16>, vector<8x384xf32> -> vector<8x384xf32>
    %231 = vector.extract_strided_slice %227 {offsets = [0, 0], sizes = [8, 256], strides = [1, 1]} : vector<8x384xf32> to vector<8x256xf32>
    %232 = vector.extract_strided_slice %230 {offsets = [0, 0], sizes = [8, 256], strides = [1, 1]} : vector<8x384xf32> to vector<8x256xf32>
    %233 = arith.addf %231, %232 : vector<8x256xf32>
    %234 = arith.negf %233 : vector<8x256xf32>
    %235 = math.exp %234 : vector<8x256xf32>
    %cst_85 = arith.constant 1.000000e+00 : f32
    %236 = vector.broadcast %cst_85 : f32 to vector<8x256xf32>
    %237 = arith.addf %236, %235 : vector<8x256xf32>
    %238 = arith.divf %236, %237 : vector<8x256xf32>
    %239 = vector.extract_strided_slice %238 {offsets = [0, 0], sizes = [8, 128], strides = [1, 1]} : vector<8x256xf32> to vector<8x128xf32>
    %240 = vector.extract_strided_slice %238 {offsets = [0, 128], sizes = [8, 128], strides = [1, 1]} : vector<8x256xf32> to vector<8x128xf32>
    %241 = vector.extract_strided_slice %227 {offsets = [0, 256], sizes = [8, 128], strides = [1, 1]} : vector<8x384xf32> to vector<8x128xf32>
    %242 = vector.extract_strided_slice %230 {offsets = [0, 256], sizes = [8, 128], strides = [1, 1]} : vector<8x384xf32> to vector<8x128xf32>
    %243 = vector.broadcast %225 : vector<1x128xf32> to vector<8x128xf32>
    %244 = arith.addf %242, %243 : vector<8x128xf32>
    %245 = arith.mulf %239, %244 : vector<8x128xf32>
    %246 = arith.addf %241, %245 : vector<8x128xf32>
    %247 = math.tanh %246 : vector<8x128xf32>
    %248 = arith.subf %226, %247 : vector<8x128xf32>
    %249 = arith.mulf %240, %248 : vector<8x128xf32>
    %250 = arith.addf %247, %249 : vector<8x128xf32>
    %c0_86 = arith.constant 0 : index
    %c0_87 = arith.constant 0 : index
    %c0_88 = arith.constant 0 : index
    %251 = vector.load %arg10[%c0_86, %c0_87, %c0_88] : memref<1x64x128xf32, #tpu.memory_space<vmem>>, vector<1x8x128xf32>
    %252 = vector.shape_cast %251 : vector<1x8x128xf32> to vector<8x128xf32>
    %253 = vector.shape_cast %250 : vector<8x128xf32> to vector<1x8x128xf32>
    tpu.vector_store %arg10[%c0_86, %c0_87, %c0_88], %253 {strides = array<i32>} : memref<1x64x128xf32, #tpu.memory_space<vmem>>, vector<1x8x128xf32>,
    %c8_89 = arith.constant 8 : index
    %c0_90 = arith.constant 0 : index
    %254 = vector.load %arg11[%c8_89, %c0_90] : memref<64x384xf32, #tpu.memory_space<vmem>>, vector<8x384xf32>
    %255 = arith.truncf %250 : vector<8x128xf32> to vector<8x128xbf16>
    %c0_91 = arith.constant 0 : index
    %c0_92 = arith.constant 0 : index
    %256 = vector.load %arg7[%c0_91, %c0_92] : memref<128x384xbf16, #tpu.memory_space<vmem>>, vector<128x384xbf16>
    %cst_93 = arith.constant dense<0.000000e+00> : vector<8x384xf32>
    %257 = tpu.matmul %255, %256, %cst_93 {dimension_numbers = #tpu.dot_dimension_numbers<[1], [0], [0], [1], [0, 0, 1, 1], [], []>} : vector<8x128xbf16>, vector<128x384xbf16>, vector<8x384xf32> -> vector<8x384xf32>
    %258 = vector.extract_strided_slice %254 {offsets = [0, 0], sizes = [8, 256], strides = [1, 1]} : vector<8x384xf32> to vector<8x256xf32>
    %259 = vector.extract_strided_slice %257 {offsets = [0, 0], sizes = [8, 256], strides = [1, 1]} : vector<8x384xf32> to vector<8x256xf32>
    %260 = arith.addf %258, %259 : vector<8x256xf32>
    %261 = arith.negf %260 : vector<8x256xf32>
    %262 = math.exp %261 : vector<8x256xf32>
    %cst_94 = arith.constant 1.000000e+00 : f32
    %263 = vector.broadcast %cst_94 : f32 to vector<8x256xf32>
    %264 = arith.addf %263, %262 : vector<8x256xf32>
    %265 = arith.divf %263, %264 : vector<8x256xf32>
    %266 = vector.extract_strided_slice %265 {offsets = [0, 0], sizes = [8, 128], strides = [1, 1]} : vector<8x256xf32> to vector<8x128xf32>
    %267 = vector.extract_strided_slice %265 {offsets = [0, 128], sizes = [8, 128], strides = [1, 1]} : vector<8x256xf32> to vector<8x128xf32>
    %268 = vector.extract_strided_slice %254 {offsets = [0, 256], sizes = [8, 128], strides = [1, 1]} : vector<8x384xf32> to vector<8x128xf32>
    %269 = vector.extract_strided_slice %257 {offsets = [0, 256], sizes = [8, 128], strides = [1, 1]} : vector<8x384xf32> to vector<8x128xf32>
    %270 = vector.broadcast %225 : vector<1x128xf32> to vector<8x128xf32>
    %271 = arith.addf %269, %270 : vector<8x128xf32>
    %272 = arith.mulf %266, %271 : vector<8x128xf32>
    %273 = arith.addf %268, %272 : vector<8x128xf32>
    %274 = math.tanh %273 : vector<8x128xf32>
    %275 = arith.subf %250, %274 : vector<8x128xf32>
    %276 = arith.mulf %267, %275 : vector<8x128xf32>
    %277 = arith.addf %274, %276 : vector<8x128xf32>
    %c0_95 = arith.constant 0 : index
    %c8_96 = arith.constant 8 : index
    %c0_97 = arith.constant 0 : index
    %278 = vector.load %arg10[%c0_95, %c8_96, %c0_97] : memref<1x64x128xf32, #tpu.memory_space<vmem>>, vector<1x8x128xf32>
    %279 = vector.shape_cast %278 : vector<1x8x128xf32> to vector<8x128xf32>
    %280 = vector.shape_cast %277 : vector<8x128xf32> to vector<1x8x128xf32>
    tpu.vector_store %arg10[%c0_95, %c8_96, %c0_97], %280 {strides = array<i32>} : memref<1x64x128xf32, #tpu.memory_space<vmem>>, vector<1x8x128xf32>,
    %c16_98 = arith.constant 16 : index
    %c0_99 = arith.constant 0 : index
    %281 = vector.load %arg11[%c16_98, %c0_99] : memref<64x384xf32, #tpu.memory_space<vmem>>, vector<8x384xf32>
    %282 = arith.truncf %277 : vector<8x128xf32> to vector<8x128xbf16>
    %c0_100 = arith.constant 0 : index
    %c0_101 = arith.constant 0 : index
    %283 = vector.load %arg7[%c0_100, %c0_101] : memref<128x384xbf16, #tpu.memory_space<vmem>>, vector<128x384xbf16>
    %cst_102 = arith.constant dense<0.000000e+00> : vector<8x384xf32>
    %284 = tpu.matmul %282, %283, %cst_102 {dimension_numbers = #tpu.dot_dimension_numbers<[1], [0], [0], [1], [0, 0, 1, 1], [], []>} : vector<8x128xbf16>, vector<128x384xbf16>, vector<8x384xf32> -> vector<8x384xf32>
    %285 = vector.extract_strided_slice %281 {offsets = [0, 0], sizes = [8, 256], strides = [1, 1]} : vector<8x384xf32> to vector<8x256xf32>
    %286 = vector.extract_strided_slice %284 {offsets = [0, 0], sizes = [8, 256], strides = [1, 1]} : vector<8x384xf32> to vector<8x256xf32>
    %287 = arith.addf %285, %286 : vector<8x256xf32>
    %288 = arith.negf %287 : vector<8x256xf32>
    %289 = math.exp %288 : vector<8x256xf32>
    %cst_103 = arith.constant 1.000000e+00 : f32
    %290 = vector.broadcast %cst_103 : f32 to vector<8x256xf32>
    %291 = arith.addf %290, %289 : vector<8x256xf32>
    %292 = arith.divf %290, %291 : vector<8x256xf32>
    %293 = vector.extract_strided_slice %292 {offsets = [0, 0], sizes = [8, 128], strides = [1, 1]} : vector<8x256xf32> to vector<8x128xf32>
    %294 = vector.extract_strided_slice %292 {offsets = [0, 128], sizes = [8, 128], strides = [1, 1]} : vector<8x256xf32> to vector<8x128xf32>
    %295 = vector.extract_strided_slice %281 {offsets = [0, 256], sizes = [8, 128], strides = [1, 1]} : vector<8x384xf32> to vector<8x128xf32>
    %296 = vector.extract_strided_slice %284 {offsets = [0, 256], sizes = [8, 128], strides = [1, 1]} : vector<8x384xf32> to vector<8x128xf32>
    %297 = vector.broadcast %225 : vector<1x128xf32> to vector<8x128xf32>
    %298 = arith.addf %296, %297 : vector<8x128xf32>
    %299 = arith.mulf %293, %298 : vector<8x128xf32>
    %300 = arith.addf %295, %299 : vector<8x128xf32>
    %301 = math.tanh %300 : vector<8x128xf32>
    %302 = arith.subf %277, %301 : vector<8x128xf32>
    %303 = arith.mulf %294, %302 : vector<8x128xf32>
    %304 = arith.addf %301, %303 : vector<8x128xf32>
    %c0_104 = arith.constant 0 : index
    %c16_105 = arith.constant 16 : index
    %c0_106 = arith.constant 0 : index
    %305 = vector.load %arg10[%c0_104, %c16_105, %c0_106] : memref<1x64x128xf32, #tpu.memory_space<vmem>>, vector<1x8x128xf32>
    %306 = vector.shape_cast %305 : vector<1x8x128xf32> to vector<8x128xf32>
    %307 = vector.shape_cast %304 : vector<8x128xf32> to vector<1x8x128xf32>
    tpu.vector_store %arg10[%c0_104, %c16_105, %c0_106], %307 {strides = array<i32>} : memref<1x64x128xf32, #tpu.memory_space<vmem>>, vector<1x8x128xf32>,
    %c24_107 = arith.constant 24 : index
    %c0_108 = arith.constant 0 : index
    %308 = vector.load %arg11[%c24_107, %c0_108] : memref<64x384xf32, #tpu.memory_space<vmem>>, vector<8x384xf32>
    %309 = arith.truncf %304 : vector<8x128xf32> to vector<8x128xbf16>
    %c0_109 = arith.constant 0 : index
    %c0_110 = arith.constant 0 : index
    %310 = vector.load %arg7[%c0_109, %c0_110] : memref<128x384xbf16, #tpu.memory_space<vmem>>, vector<128x384xbf16>
    %cst_111 = arith.constant dense<0.000000e+00> : vector<8x384xf32>
    %311 = tpu.matmul %309, %310, %cst_111 {dimension_numbers = #tpu.dot_dimension_numbers<[1], [0], [0], [1], [0, 0, 1, 1], [], []>} : vector<8x128xbf16>, vector<128x384xbf16>, vector<8x384xf32> -> vector<8x384xf32>
    %312 = vector.extract_strided_slice %308 {offsets = [0, 0], sizes = [8, 256], strides = [1, 1]} : vector<8x384xf32> to vector<8x256xf32>
    %313 = vector.extract_strided_slice %311 {offsets = [0, 0], sizes = [8, 256], strides = [1, 1]} : vector<8x384xf32> to vector<8x256xf32>
    %314 = arith.addf %312, %313 : vector<8x256xf32>
    %315 = arith.negf %314 : vector<8x256xf32>
    %316 = math.exp %315 : vector<8x256xf32>
    %cst_112 = arith.constant 1.000000e+00 : f32
    %317 = vector.broadcast %cst_112 : f32 to vector<8x256xf32>
    %318 = arith.addf %317, %316 : vector<8x256xf32>
    %319 = arith.divf %317, %318 : vector<8x256xf32>
    %320 = vector.extract_strided_slice %319 {offsets = [0, 0], sizes = [8, 128], strides = [1, 1]} : vector<8x256xf32> to vector<8x128xf32>
    %321 = vector.extract_strided_slice %319 {offsets = [0, 128], sizes = [8, 128], strides = [1, 1]} : vector<8x256xf32> to vector<8x128xf32>
    %322 = vector.extract_strided_slice %308 {offsets = [0, 256], sizes = [8, 128], strides = [1, 1]} : vector<8x384xf32> to vector<8x128xf32>
    %323 = vector.extract_strided_slice %311 {offsets = [0, 256], sizes = [8, 128], strides = [1, 1]} : vector<8x384xf32> to vector<8x128xf32>
    %324 = vector.broadcast %225 : vector<1x128xf32> to vector<8x128xf32>
    %325 = arith.addf %323, %324 : vector<8x128xf32>
    %326 = arith.mulf %320, %325 : vector<8x128xf32>
    %327 = arith.addf %322, %326 : vector<8x128xf32>
    %328 = math.tanh %327 : vector<8x128xf32>
    %329 = arith.subf %304, %328 : vector<8x128xf32>
    %330 = arith.mulf %321, %329 : vector<8x128xf32>
    %331 = arith.addf %328, %330 : vector<8x128xf32>
    %c0_113 = arith.constant 0 : index
    %c24_114 = arith.constant 24 : index
    %c0_115 = arith.constant 0 : index
    %332 = vector.load %arg10[%c0_113, %c24_114, %c0_115] : memref<1x64x128xf32, #tpu.memory_space<vmem>>, vector<1x8x128xf32>
    %333 = vector.shape_cast %332 : vector<1x8x128xf32> to vector<8x128xf32>
    %334 = vector.shape_cast %331 : vector<8x128xf32> to vector<1x8x128xf32>
    tpu.vector_store %arg10[%c0_113, %c24_114, %c0_115], %334 {strides = array<i32>} : memref<1x64x128xf32, #tpu.memory_space<vmem>>, vector<1x8x128xf32>,
    %c32_116 = arith.constant 32 : index
    %c0_117 = arith.constant 0 : index
    %335 = vector.load %arg11[%c32_116, %c0_117] : memref<64x384xf32, #tpu.memory_space<vmem>>, vector<8x384xf32>
    %336 = arith.truncf %331 : vector<8x128xf32> to vector<8x128xbf16>
    %c0_118 = arith.constant 0 : index
    %c0_119 = arith.constant 0 : index
    %337 = vector.load %arg7[%c0_118, %c0_119] : memref<128x384xbf16, #tpu.memory_space<vmem>>, vector<128x384xbf16>
    %cst_120 = arith.constant dense<0.000000e+00> : vector<8x384xf32>
    %338 = tpu.matmul %336, %337, %cst_120 {dimension_numbers = #tpu.dot_dimension_numbers<[1], [0], [0], [1], [0, 0, 1, 1], [], []>} : vector<8x128xbf16>, vector<128x384xbf16>, vector<8x384xf32> -> vector<8x384xf32>
    %339 = vector.extract_strided_slice %335 {offsets = [0, 0], sizes = [8, 256], strides = [1, 1]} : vector<8x384xf32> to vector<8x256xf32>
    %340 = vector.extract_strided_slice %338 {offsets = [0, 0], sizes = [8, 256], strides = [1, 1]} : vector<8x384xf32> to vector<8x256xf32>
    %341 = arith.addf %339, %340 : vector<8x256xf32>
    %342 = arith.negf %341 : vector<8x256xf32>
    %343 = math.exp %342 : vector<8x256xf32>
    %cst_121 = arith.constant 1.000000e+00 : f32
    %344 = vector.broadcast %cst_121 : f32 to vector<8x256xf32>
    %345 = arith.addf %344, %343 : vector<8x256xf32>
    %346 = arith.divf %344, %345 : vector<8x256xf32>
    %347 = vector.extract_strided_slice %346 {offsets = [0, 0], sizes = [8, 128], strides = [1, 1]} : vector<8x256xf32> to vector<8x128xf32>
    %348 = vector.extract_strided_slice %346 {offsets = [0, 128], sizes = [8, 128], strides = [1, 1]} : vector<8x256xf32> to vector<8x128xf32>
    %349 = vector.extract_strided_slice %335 {offsets = [0, 256], sizes = [8, 128], strides = [1, 1]} : vector<8x384xf32> to vector<8x128xf32>
    %350 = vector.extract_strided_slice %338 {offsets = [0, 256], sizes = [8, 128], strides = [1, 1]} : vector<8x384xf32> to vector<8x128xf32>
    %351 = vector.broadcast %225 : vector<1x128xf32> to vector<8x128xf32>
    %352 = arith.addf %350, %351 : vector<8x128xf32>
    %353 = arith.mulf %347, %352 : vector<8x128xf32>
    %354 = arith.addf %349, %353 : vector<8x128xf32>
    %355 = math.tanh %354 : vector<8x128xf32>
    %356 = arith.subf %331, %355 : vector<8x128xf32>
    %357 = arith.mulf %348, %356 : vector<8x128xf32>
    %358 = arith.addf %355, %357 : vector<8x128xf32>
    %c0_122 = arith.constant 0 : index
    %c32_123 = arith.constant 32 : index
    %c0_124 = arith.constant 0 : index
    %359 = vector.load %arg10[%c0_122, %c32_123, %c0_124] : memref<1x64x128xf32, #tpu.memory_space<vmem>>, vector<1x8x128xf32>
    %360 = vector.shape_cast %359 : vector<1x8x128xf32> to vector<8x128xf32>
    %361 = vector.shape_cast %358 : vector<8x128xf32> to vector<1x8x128xf32>
    tpu.vector_store %arg10[%c0_122, %c32_123, %c0_124], %361 {strides = array<i32>} : memref<1x64x128xf32, #tpu.memory_space<vmem>>, vector<1x8x128xf32>,
    %c40_125 = arith.constant 40 : index
    %c0_126 = arith.constant 0 : index
    %362 = vector.load %arg11[%c40_125, %c0_126] : memref<64x384xf32, #tpu.memory_space<vmem>>, vector<8x384xf32>
    %363 = arith.truncf %358 : vector<8x128xf32> to vector<8x128xbf16>
    %c0_127 = arith.constant 0 : index
    %c0_128 = arith.constant 0 : index
    %364 = vector.load %arg7[%c0_127, %c0_128] : memref<128x384xbf16, #tpu.memory_space<vmem>>, vector<128x384xbf16>
    %cst_129 = arith.constant dense<0.000000e+00> : vector<8x384xf32>
    %365 = tpu.matmul %363, %364, %cst_129 {dimension_numbers = #tpu.dot_dimension_numbers<[1], [0], [0], [1], [0, 0, 1, 1], [], []>} : vector<8x128xbf16>, vector<128x384xbf16>, vector<8x384xf32> -> vector<8x384xf32>
    %366 = vector.extract_strided_slice %362 {offsets = [0, 0], sizes = [8, 256], strides = [1, 1]} : vector<8x384xf32> to vector<8x256xf32>
    %367 = vector.extract_strided_slice %365 {offsets = [0, 0], sizes = [8, 256], strides = [1, 1]} : vector<8x384xf32> to vector<8x256xf32>
    %368 = arith.addf %366, %367 : vector<8x256xf32>
    %369 = arith.negf %368 : vector<8x256xf32>
    %370 = math.exp %369 : vector<8x256xf32>
    %cst_130 = arith.constant 1.000000e+00 : f32
    %371 = vector.broadcast %cst_130 : f32 to vector<8x256xf32>
    %372 = arith.addf %371, %370 : vector<8x256xf32>
    %373 = arith.divf %371, %372 : vector<8x256xf32>
    %374 = vector.extract_strided_slice %373 {offsets = [0, 0], sizes = [8, 128], strides = [1, 1]} : vector<8x256xf32> to vector<8x128xf32>
    %375 = vector.extract_strided_slice %373 {offsets = [0, 128], sizes = [8, 128], strides = [1, 1]} : vector<8x256xf32> to vector<8x128xf32>
    %376 = vector.extract_strided_slice %362 {offsets = [0, 256], sizes = [8, 128], strides = [1, 1]} : vector<8x384xf32> to vector<8x128xf32>
    %377 = vector.extract_strided_slice %365 {offsets = [0, 256], sizes = [8, 128], strides = [1, 1]} : vector<8x384xf32> to vector<8x128xf32>
    %378 = vector.broadcast %225 : vector<1x128xf32> to vector<8x128xf32>
    %379 = arith.addf %377, %378 : vector<8x128xf32>
    %380 = arith.mulf %374, %379 : vector<8x128xf32>
    %381 = arith.addf %376, %380 : vector<8x128xf32>
    %382 = math.tanh %381 : vector<8x128xf32>
    %383 = arith.subf %358, %382 : vector<8x128xf32>
    %384 = arith.mulf %375, %383 : vector<8x128xf32>
    %385 = arith.addf %382, %384 : vector<8x128xf32>
    %c0_131 = arith.constant 0 : index
    %c40_132 = arith.constant 40 : index
    %c0_133 = arith.constant 0 : index
    %386 = vector.load %arg10[%c0_131, %c40_132, %c0_133] : memref<1x64x128xf32, #tpu.memory_space<vmem>>, vector<1x8x128xf32>
    %387 = vector.shape_cast %386 : vector<1x8x128xf32> to vector<8x128xf32>
    %388 = vector.shape_cast %385 : vector<8x128xf32> to vector<1x8x128xf32>
    tpu.vector_store %arg10[%c0_131, %c40_132, %c0_133], %388 {strides = array<i32>} : memref<1x64x128xf32, #tpu.memory_space<vmem>>, vector<1x8x128xf32>,
    %c48_134 = arith.constant 48 : index
    %c0_135 = arith.constant 0 : index
    %389 = vector.load %arg11[%c48_134, %c0_135] : memref<64x384xf32, #tpu.memory_space<vmem>>, vector<8x384xf32>
    %390 = arith.truncf %385 : vector<8x128xf32> to vector<8x128xbf16>
    %c0_136 = arith.constant 0 : index
    %c0_137 = arith.constant 0 : index
    %391 = vector.load %arg7[%c0_136, %c0_137] : memref<128x384xbf16, #tpu.memory_space<vmem>>, vector<128x384xbf16>
    %cst_138 = arith.constant dense<0.000000e+00> : vector<8x384xf32>
    %392 = tpu.matmul %390, %391, %cst_138 {dimension_numbers = #tpu.dot_dimension_numbers<[1], [0], [0], [1], [0, 0, 1, 1], [], []>} : vector<8x128xbf16>, vector<128x384xbf16>, vector<8x384xf32> -> vector<8x384xf32>
    %393 = vector.extract_strided_slice %389 {offsets = [0, 0], sizes = [8, 256], strides = [1, 1]} : vector<8x384xf32> to vector<8x256xf32>
    %394 = vector.extract_strided_slice %392 {offsets = [0, 0], sizes = [8, 256], strides = [1, 1]} : vector<8x384xf32> to vector<8x256xf32>
    %395 = arith.addf %393, %394 : vector<8x256xf32>
    %396 = arith.negf %395 : vector<8x256xf32>
    %397 = math.exp %396 : vector<8x256xf32>
    %cst_139 = arith.constant 1.000000e+00 : f32
    %398 = vector.broadcast %cst_139 : f32 to vector<8x256xf32>
    %399 = arith.addf %398, %397 : vector<8x256xf32>
    %400 = arith.divf %398, %399 : vector<8x256xf32>
    %401 = vector.extract_strided_slice %400 {offsets = [0, 0], sizes = [8, 128], strides = [1, 1]} : vector<8x256xf32> to vector<8x128xf32>
    %402 = vector.extract_strided_slice %400 {offsets = [0, 128], sizes = [8, 128], strides = [1, 1]} : vector<8x256xf32> to vector<8x128xf32>
    %403 = vector.extract_strided_slice %389 {offsets = [0, 256], sizes = [8, 128], strides = [1, 1]} : vector<8x384xf32> to vector<8x128xf32>
    %404 = vector.extract_strided_slice %392 {offsets = [0, 256], sizes = [8, 128], strides = [1, 1]} : vector<8x384xf32> to vector<8x128xf32>
    %405 = vector.broadcast %225 : vector<1x128xf32> to vector<8x128xf32>
    %406 = arith.addf %404, %405 : vector<8x128xf32>
    %407 = arith.mulf %401, %406 : vector<8x128xf32>
    %408 = arith.addf %403, %407 : vector<8x128xf32>
    %409 = math.tanh %408 : vector<8x128xf32>
    %410 = arith.subf %385, %409 : vector<8x128xf32>
    %411 = arith.mulf %402, %410 : vector<8x128xf32>
    %412 = arith.addf %409, %411 : vector<8x128xf32>
    %c0_140 = arith.constant 0 : index
    %c48_141 = arith.constant 48 : index
    %c0_142 = arith.constant 0 : index
    %413 = vector.load %arg10[%c0_140, %c48_141, %c0_142] : memref<1x64x128xf32, #tpu.memory_space<vmem>>, vector<1x8x128xf32>
    %414 = vector.shape_cast %413 : vector<1x8x128xf32> to vector<8x128xf32>
    %415 = vector.shape_cast %412 : vector<8x128xf32> to vector<1x8x128xf32>
    tpu.vector_store %arg10[%c0_140, %c48_141, %c0_142], %415 {strides = array<i32>} : memref<1x64x128xf32, #tpu.memory_space<vmem>>, vector<1x8x128xf32>,
    %c56_143 = arith.constant 56 : index
    %c0_144 = arith.constant 0 : index
    %416 = vector.load %arg11[%c56_143, %c0_144] : memref<64x384xf32, #tpu.memory_space<vmem>>, vector<8x384xf32>
    %417 = arith.truncf %412 : vector<8x128xf32> to vector<8x128xbf16>
    %c0_145 = arith.constant 0 : index
    %c0_146 = arith.constant 0 : index
    %418 = vector.load %arg7[%c0_145, %c0_146] : memref<128x384xbf16, #tpu.memory_space<vmem>>, vector<128x384xbf16>
    %cst_147 = arith.constant dense<0.000000e+00> : vector<8x384xf32>
    %419 = tpu.matmul %417, %418, %cst_147 {dimension_numbers = #tpu.dot_dimension_numbers<[1], [0], [0], [1], [0, 0, 1, 1], [], []>} : vector<8x128xbf16>, vector<128x384xbf16>, vector<8x384xf32> -> vector<8x384xf32>
    %420 = vector.extract_strided_slice %416 {offsets = [0, 0], sizes = [8, 256], strides = [1, 1]} : vector<8x384xf32> to vector<8x256xf32>
    %421 = vector.extract_strided_slice %419 {offsets = [0, 0], sizes = [8, 256], strides = [1, 1]} : vector<8x384xf32> to vector<8x256xf32>
    %422 = arith.addf %420, %421 : vector<8x256xf32>
    %423 = arith.negf %422 : vector<8x256xf32>
    %424 = math.exp %423 : vector<8x256xf32>
    %cst_148 = arith.constant 1.000000e+00 : f32
    %425 = vector.broadcast %cst_148 : f32 to vector<8x256xf32>
    %426 = arith.addf %425, %424 : vector<8x256xf32>
    %427 = arith.divf %425, %426 : vector<8x256xf32>
    %428 = vector.extract_strided_slice %427 {offsets = [0, 0], sizes = [8, 128], strides = [1, 1]} : vector<8x256xf32> to vector<8x128xf32>
    %429 = vector.extract_strided_slice %427 {offsets = [0, 128], sizes = [8, 128], strides = [1, 1]} : vector<8x256xf32> to vector<8x128xf32>
    %430 = vector.extract_strided_slice %416 {offsets = [0, 256], sizes = [8, 128], strides = [1, 1]} : vector<8x384xf32> to vector<8x128xf32>
    %431 = vector.extract_strided_slice %419 {offsets = [0, 256], sizes = [8, 128], strides = [1, 1]} : vector<8x384xf32> to vector<8x128xf32>
    %432 = vector.broadcast %225 : vector<1x128xf32> to vector<8x128xf32>
    %433 = arith.addf %431, %432 : vector<8x128xf32>
    %434 = arith.mulf %428, %433 : vector<8x128xf32>
    %435 = arith.addf %430, %434 : vector<8x128xf32>
    %436 = math.tanh %435 : vector<8x128xf32>
    %437 = arith.subf %412, %436 : vector<8x128xf32>
    %438 = arith.mulf %429, %437 : vector<8x128xf32>
    %439 = arith.addf %436, %438 : vector<8x128xf32>
    %c0_149 = arith.constant 0 : index
    %c56_150 = arith.constant 56 : index
    %c0_151 = arith.constant 0 : index
    %440 = vector.load %arg10[%c0_149, %c56_150, %c0_151] : memref<1x64x128xf32, #tpu.memory_space<vmem>>, vector<1x8x128xf32>
    %441 = vector.shape_cast %440 : vector<1x8x128xf32> to vector<8x128xf32>
    %442 = vector.shape_cast %439 : vector<8x128xf32> to vector<1x8x128xf32>
    tpu.vector_store %arg10[%c0_149, %c56_150, %c0_151], %442 {strides = array<i32>} : memref<1x64x128xf32, #tpu.memory_space<vmem>>, vector<1x8x128xf32>,
    return
  }
  func.func @transform_0(%arg0: i32) -> (i32, i32, i32) {
    %c0_i32 = arith.constant 0 : i32
    %c0_i32_0 = arith.constant 0 : i32
    %c0_i32_1 = arith.constant 0 : i32
    return %arg0, %c0_i32, %c0_i32_0 : i32, i32, i32
  }
  func.func @transform_1(%arg0: i32) -> (i32, i32) {
    %c0_i32 = arith.constant 0 : i32
    %c0_i32_0 = arith.constant 0 : i32
    %c0_i32_1 = arith.constant 0 : i32
    return %c0_i32, %c0_i32_0 : i32, i32
  }
  func.func @transform_2(%arg0: i32) -> (i32, i32) {
    %c0_i32 = arith.constant 0 : i32
    %c0_i32_0 = arith.constant 0 : i32
    %c0_i32_1 = arith.constant 0 : i32
    return %c0_i32, %c0_i32_0 : i32, i32
  }
  func.func @transform_3(%arg0: i32) -> (i32, i32) {
    %c0_i32 = arith.constant 0 : i32
    %c0_i32_0 = arith.constant 0 : i32
    %c0_i32_1 = arith.constant 0 : i32
    return %c0_i32, %c0_i32_0 : i32, i32
  }
  func.func @transform_4(%arg0: i32) -> (i32, i32) {
    %c0_i32 = arith.constant 0 : i32
    %c0_i32_0 = arith.constant 0 : i32
    %c0_i32_1 = arith.constant 0 : i32
    return %c0_i32, %c0_i32_0 : i32, i32
  }
  func.func @transform_5(%arg0: i32) -> (i32, i32) {
    %c0_i32 = arith.constant 0 : i32
    %c0_i32_0 = arith.constant 0 : i32
    %c0_i32_1 = arith.constant 0 : i32
    return %c0_i32, %c0_i32_0 : i32, i32
  }
  func.func @transform_6(%arg0: i32) -> (i32, i32) {
    %c0_i32 = arith.constant 0 : i32
    %c0_i32_0 = arith.constant 0 : i32
    %c0_i32_1 = arith.constant 0 : i32
    return %c0_i32, %c0_i32_0 : i32, i32
  }
  func.func @transform_7(%arg0: i32) -> (i32, i32) {
    %c0_i32 = arith.constant 0 : i32
    %c0_i32_0 = arith.constant 0 : i32
    %c0_i32_1 = arith.constant 0 : i32
    return %c0_i32, %c0_i32_0 : i32, i32
  }
  func.func @transform_8(%arg0: i32) -> (i32, i32) {
    %c0_i32 = arith.constant 0 : i32
    %c0_i32_0 = arith.constant 0 : i32
    %c0_i32_1 = arith.constant 0 : i32
    return %c0_i32, %c0_i32_0 : i32, i32
  }
  func.func @transform_9(%arg0: i32) -> (i32, i32, i32) {
    %c0_i32 = arith.constant 0 : i32
    %c0_i32_0 = arith.constant 0 : i32
    %c0_i32_1 = arith.constant 0 : i32
    return %arg0, %c0_i32, %c0_i32_0 : i32, i32, i32
  }
}

</mosaic_0001>

<llo_original>
// kernel: tpu_custom_call.1
$region0: #{tpu_custom_call.1}
  #allocation0 [shape = 'u32[]', space=smem, size = 0x4, offset = 0x4, fixed_abs, tag = 'smem constant byte address 0x4 - core index']
  #allocation1 [shape = 'u32[144,128]{1,0:T(1,128)}', space=vmem, size = 0x12000, scoped, tag = 'internal scratch']
  #allocation2 [shape = 'f32[64,384]{1,0:T(8,128)}', space=vmem, size = 0x18000, scoped, tag = 'scratch operand']
  #allocation3 [shape = 'bf16[64,128]{1,0:T(16,128)(2,1)}', space=vmem, size = 0x4000, scoped, tag = 'scratch operand']
  %s0 = inlined_call_operand.vmem [shape: bf16[1,64,16], index: 0, kind: input, shape index: {}]
  %s1 = inlined_call_operand.vmem [shape: bf16[16,384], index: 1, kind: input, shape index: {}]
  %s2 = inlined_call_operand.hbm [shape: bf16[128,384], index: 2, kind: input, shape index: {}]
  %s3 = inlined_call_operand.vmem [shape: f32[1,384], index: 3, kind: input, shape index: {}]
  %s4 = inlined_call_operand.vmem [shape: f32[1,128], index: 4, kind: input, shape index: {}]
  %s5 = inlined_call_operand.hbm [shape: bf16[128,384], index: 5, kind: input, shape index: {}]
  %s6 = inlined_call_operand.hbm [shape: bf16[128,384], index: 6, kind: input, shape index: {}]
  %s7 = inlined_call_operand.vmem [shape: f32[1,384], index: 7, kind: input, shape index: {}]
  %s8 = inlined_call_operand.vmem [shape: f32[1,128], index: 8, kind: input, shape index: {}]
  %s9 = inlined_call_operand.hbm [shape: f32[1,64,128], index: 9, kind: output, shape index: {}]
  %s10 = sld [smem:[#allocation0]]
  $region58: #{tpu_custom_call.1} parent=0
    _
  %s12 = ssub.s32 1, %s10
  %s13 = scalar_select 0, %s12, %s10
  $region1: #{tpu_custom_call.1} parent=0
    #allocation4 [shape = 'u8[98304]{0}', space=vmem, size = 0x18000, scoped, tag = 'input window, operand 2, single buffered']
    #allocation5 [shape = 's32[1]{0}', space=sflag, size = 0x4, scoped, tag = 'scoped memory for tpu_custom_call.1']
    #allocation6 [shape = 's32[1]{0}', space=sflag, size = 0x4, scoped, tag = 'scoped memory for tpu_custom_call.1']
    #allocation7 [shape = 'u8[98304]{0}', space=vmem, size = 0x18000, scoped, tag = 'input window, operand 5, single buffered']
    #allocation8 [shape = 's32[1]{0}', space=sflag, size = 0x4, scoped, tag = 'scoped memory for tpu_custom_call.1']
    #allocation9 [shape = 'u8[98304]{0}', space=vmem, size = 0x18000, scoped, tag = 'input window, operand 6, single buffered']
    #allocation10 [shape = 'u8[32768]{0}', space=vmem, size = 0x8000, scoped, tag = 'output window, operand 0, single buffered']
    %14 = vsyncpa [#allocation5], 0
    %15 = vsyncpa [#allocation8], 0
    %16 = vsyncpa [#allocation6], 0
    // Predicated region
    $region2: #{tpu_custom_call.1} parent=1 // pred_check
      _
    $region3: #{tpu_custom_call.1} parent=1 // pred_check_branch
      %18 = sbr.rel (0) target = $region5
    $region4: #{tpu_custom_call.1} parent=1 // pred_region
      _
    $region5: #{tpu_custom_call.1} parent=1 // pred_fallthru
      _
    // Predicated region
    $region6: #{tpu_custom_call.1} parent=1 // pred_check
      _
    $region7: #{tpu_custom_call.1} parent=1 // pred_check_branch
      %20 = sbr.rel (0) target = $region9
    $region8: #{tpu_custom_call.1} parent=1 // pred_region
      _
    $region9: #{tpu_custom_call.1} parent=1 // pred_fallthru
      _
    // Predicated region
    $region10: #{tpu_custom_call.1} parent=1 // pred_check
      _
    $region11: #{tpu_custom_call.1} parent=1 // pred_check_branch
      %22 = sbr.rel (0) target = $region13
    $region12: #{tpu_custom_call.1} parent=1 // pred_region
      %s24 = ssub.s32 3072, 3072
      %25 = vsyncadd [#allocation5], %s24
      %s26 = sshll.u32 [#allocation4], 4
      %s27 = int_to_ptr.vmem [resolvable:$true] %s26
      %32 = dma.hbm_to_vmem [thread:$0]  %s2, 3072, %s27, [#allocation5], 192, 192, 12
    $region13: #{tpu_custom_call.1} parent=1 // pred_fallthru
      _
    // Predicated region
    $region14: #{tpu_custom_call.1} parent=1 // pred_check
      _
    $region15: #{tpu_custom_call.1} parent=1 // pred_check_branch
      %34 = sbr.rel (0) target = $region17
    $region16: #{tpu_custom_call.1} parent=1 // pred_region
      _
    $region17: #{tpu_custom_call.1} parent=1 // pred_fallthru
      _
    // Predicated region
    $region18: #{tpu_custom_call.1} parent=1 // pred_check
      _
    $region19: #{tpu_custom_call.1} parent=1 // pred_check_branch
      %36 = sbr.rel (0) target = $region21
    $region20: #{tpu_custom_call.1} parent=1 // pred_region
      _
    $region21: #{tpu_custom_call.1} parent=1 // pred_fallthru
      _
    // Predicated region
    $region22: #{tpu_custom_call.1} parent=1 // pred_check
      _
    $region23: #{tpu_custom_call.1} parent=1 // pred_check_branch
      %38 = sbr.rel (0) target = $region25
    $region24: #{tpu_custom_call.1} parent=1 // pred_region
      %s40 = ssub.s32 3072, 3072
      %41 = vsyncadd [#allocation8], %s40
      %s42 = sshll.u32 [#allocation7], 4
      %s43 = int_to_ptr.vmem [resolvable:$true] %s42
      %48 = dma.hbm_to_vmem [thread:$0]  %s5, 3072, %s43, [#allocation8], 192, 192, 12
    $region25: #{tpu_custom_call.1} parent=1 // pred_fallthru
      _
    // Predicated region
    $region26: #{tpu_custom_call.1} parent=1 // pred_check
      _
    $region27: #{tpu_custom_call.1} parent=1 // pred_check_branch
      %50 = sbr.rel (0) target = $region29
    $region28: #{tpu_custom_call.1} parent=1 // pred_region
      %s52 = ssub.s32 3072, 3072
      %53 = vsyncadd [#allocation8], %s52
      %s54 = sshll.u32 [#allocation9], 4
      %s55 = int_to_ptr.vmem [resolvable:$true] %s54
      %60 = dma.hbm_to_vmem [thread:$0]  %s6, 3072, %s55, [#allocation8], 192, 192, 12
    $region29: #{tpu_custom_call.1} parent=1 // pred_fallthru
      _
    // Predicated region
    $region30: #{tpu_custom_call.1} parent=1 // pred_check
      _
    $region31: #{tpu_custom_call.1} parent=1 // pred_check_branch
      %62 = sbr.rel (0) target = $region33
    $region32: #{tpu_custom_call.1} parent=1 // pred_region
      _
    $region33: #{tpu_custom_call.1} parent=1 // pred_fallthru
      _
    // Predicated region
    $region34: #{tpu_custom_call.1} parent=1 // pred_check
      _
    $region35: #{tpu_custom_call.1} parent=1 // pred_check_branch
      %64 = sbr.rel (0) target = $region37
    $region36: #{tpu_custom_call.1} parent=1 // pred_region
      _
    $region37: #{tpu_custom_call.1} parent=1 // pred_fallthru
      _
    // Predicated region
    $region38: #{tpu_custom_call.1} parent=1 // pred_check
      _
    $region39: #{tpu_custom_call.1} parent=1 // pred_check_branch
      %66 = sbr.rel (0) target = $region41
    $region40: #{tpu_custom_call.1} parent=1 // pred_region
      %67 = dma.done [#allocation5], 3072
    $region41: #{tpu_custom_call.1} parent=1 // pred_fallthru
      _
    // Predicated region
    $region42: #{tpu_custom_call.1} parent=1 // pred_check
      _
    $region43: #{tpu_custom_call.1} parent=1 // pred_check_branch
      %69 = sbr.rel (0) target = $region45
    $region44: #{tpu_custom_call.1} parent=1 // pred_region
      %70 = dma.done [#allocation8], 3072
    $region45: #{tpu_custom_call.1} parent=1 // pred_fallthru
      _
    // Predicated region
    $region46: #{tpu_custom_call.1} parent=1 // pred_check
      _
    $region47: #{tpu_custom_call.1} parent=1 // pred_check_branch
      %72 = sbr.rel (0) target = $region49
    $region48: #{tpu_custom_call.1} parent=1 // pred_region
      %73 = dma.done [#allocation8], 3072
    $region49: #{tpu_custom_call.1} parent=1 // pred_fallthru
      _
    %v75 = vld [vmem:[%s0] sm:$0xf]
    %v76 = vld [vmem:[%s0 + $0x4] sm:$0xf]
    %v77 = vld [vmem:[%s0 + $0x8] sm:$0xf]
    %v78 = vld [vmem:[%s0 + $0xc] sm:$0xf]
    %v79 = vld [vmem:[%s0 + $0x10] sm:$0xf]
    %v80 = vld [vmem:[%s0 + $0x14] sm:$0xf]
    %v81 = vld [vmem:[%s0 + $0x18] sm:$0xf]
    %v82 = vld [vmem:[%s0 + $0x1c] sm:$0xf]
    %v83 = vld [vmem:[%s1] sm:$0xff]
    %v84 = vld [vmem:[%s1 + $0x8] sm:$0xf]
    %v85 = vld [vmem:[%s1 + $0xc] sm:$0xff]
    %v86 = vld [vmem:[%s1 + $0x14] sm:$0xf]
    %v87 = vld [vmem:[%s3] sm:$0x7]
    %v89 = vlaneseq
    %v90 = vshrl.u32 %v89, 7
    %v91 = vsub.s32 0, %v90
    %v92 = vrot.slane %v87, %v91
    %v93 = vlaneseq
    %v94 = vshrl.u32 %v93, 7
    %v95 = vsub.s32 1, %v94
    %v96 = vrot.slane %v87, %v95
    %v97 = vlaneseq
    %v98 = vshrl.u32 %v97, 7
    %v99 = vsub.s32 2, %v98
    %v100 = vrot.slane %v87, %v99
    %v112 = vunpack.c.l.b16 %v75
    %v113 = vunpack.c.l.b16 %v76
    %v114 = vunpack.c.l.b16 %v77
    %v115 = vunpack.c.l.b16 %v78
    %v116 = vunpack.c.l.b16 %v79
    %v117 = vunpack.c.l.b16 %v80
    %v118 = vunpack.c.l.b16 %v81
    %v119 = vunpack.c.l.b16 %v82
    %v120 = vpack.c.b16 %v113, %v112
    %v121 = vpack.c.b16 %v115, %v114
    %v122 = vpack.c.b16 %v117, %v116
    %v123 = vpack.c.b16 %v119, %v118
    %v128 = vunpack.c.l.b16 %v83
    %v129 = vunpack.c.h.b16 %v83
    %v130 = vunpack.c.l.b16 %v84
    %v131 = vunpack.c.l.b16 %v85
    %v132 = vunpack.c.h.b16 %v85
    %v133 = vunpack.c.l.b16 %v86
    %v134 = vpack.c.b16 %v131, %v128
    %v135 = vpack.c.b16 %v132, %v129
    %v136 = vpack.c.b16 %v133, %v130
    %vm140 = vcmask 130048
    %v142 = vsel %vm140, %v120, 0
    %v145 = vsel %vm140, %v121, 0
    %v148 = vsel %vm140, %v122, 0
    %v151 = vsel %vm140, %v123, 0
    %153 = vmatprep.subr.bf16.mxu0 %v135
    %154 = vmatpush1.bf16.msra.mxu0 %v134
    %155 = vmatprep.subr.bf16.mxu0 0
    %156 = vmatpush1.bf16.msra.mxu0 0
    %157 = vmatprep.subr.bf16.mxu0 0
    %158 = vmatpush1.bf16.msra.mxu0 0
    %159 = vmatprep.subr.bf16.mxu0 0
    %160 = vmatpush1.bf16.msra.mxu0 0
    %161 = vmatprep.subr.bf16.mxu0 0
    %162 = vmatpush1.bf16.msra.mxu0 0
    %163 = vmatprep.subr.bf16.mxu0 0
    %164 = vmatpush1.bf16.msra.mxu0 0
    %165 = vmatprep.subr.bf16.mxu0 0
    %166 = vmatpush1.bf16.msra.mxu0 0
    %167 = vmatprep.subr.bf16.mxu0 0
    %168 = vmatpush1.bf16.msra.mxu0 0
    %169 = vmatprep.subr.bf16.mxu0 0
    %170 = vmatpush1.bf16.msra.mxu0 0
    %171 = vmatprep.subr.bf16.mxu0 0
    %172 = vmatpush1.bf16.msra.mxu0 0
    %173 = vmatprep.subr.bf16.mxu0 0
    %174 = vmatpush1.bf16.msra.mxu0 0
    %175 = vmatprep.subr.bf16.mxu0 0
    %176 = vmatpush1.bf16.msra.mxu0 0
    %177 = vmatprep.subr.bf16.mxu0 0
    %178 = vmatpush1.bf16.msra.mxu0 0
    %179 = vmatprep.subr.bf16.mxu0 0
    %180 = vmatpush1.bf16.msra.mxu0 0
    %181 = vmatprep.subr.bf16.mxu0 0
    %182 = vmatpush1.bf16.msra.mxu0 0
    %183 = vmatprep.subr.bf16.mxu0 0
    %184 = vmatpush1.bf16.msra.mxu0 0
    %185 = vmatprep.mubr.bf16.mxu0 0
    %186 = vmatmul.mubr.bf16.gmra.mrb[0].mxu0 %v142
    %v187 = vpop.f32.mrb[0].mxu0
    %v188 = vadd.f32 %v92, %v187
    %v189 = vpop.f32.mrb[0].mxu0
    %v190 = vadd.f32 %v96, %v189
    %v191 = vpop.f32.mrb[0].mxu0
    %v192 = vadd.f32 %v92, %v191
    %v193 = vpop.f32.mrb[0].mxu0
    %v194 = vadd.f32 %v96, %v193
    %195 = vmatprep.mubr.bf16.mxu0 0
    %196 = vmatmul.mubr.bf16.gmra.mrb[0].mxu0 %v145
    %v197 = vpop.f32.mrb[0].mxu0
    %v198 = vadd.f32 %v92, %v197
    %v199 = vpop.f32.mrb[0].mxu0
    %v200 = vadd.f32 %v96, %v199
    %v201 = vpop.f32.mrb[0].mxu0
    %v202 = vadd.f32 %v92, %v201
    %v203 = vpop.f32.mrb[0].mxu0
    %v204 = vadd.f32 %v96, %v203
    %205 = vmatprep.mubr.bf16.mxu0 0
    %206 = vmatmul.mubr.bf16.gmra.mrb[0].mxu0 %v148
    %v207 = vpop.f32.mrb[0].mxu0
    %v208 = vadd.f32 %v92, %v207
    %v209 = vpop.f32.mrb[0].mxu0
    %v210 = vadd.f32 %v96, %v209
    %v211 = vpop.f32.mrb[0].mxu0
    %v212 = vadd.f32 %v92, %v211
    %v213 = vpop.f32.mrb[0].mxu0
    %v214 = vadd.f32 %v96, %v213
    %215 = vmatprep.mubr.bf16.mxu0 0
    %216 = vmatmul.mubr.bf16.gmra.mrb[0].mxu0 %v151
    %v217 = vpop.f32.mrb[0].mxu0
    %v218 = vadd.f32 %v92, %v217
    %v219 = vpop.f32.mrb[0].mxu0
    %v220 = vadd.f32 %v96, %v219
    %v221 = vpop.f32.mrb[0].mxu0
    %v222 = vadd.f32 %v92, %v221
    %v223 = vpop.f32.mrb[0].mxu0
    %v224 = vadd.f32 %v96, %v223
    %225 = vdwg.mxu0
    %226 = vmatprep.subr.bf16.mxu0 0
    %227 = vmatpush1.bf16.msra.mxu0 %v136
    %228 = vmatprep.subr.bf16.mxu0 0
    %229 = vmatpush1.bf16.msra.mxu0 0
    %230 = vmatprep.subr.bf16.mxu0 0
    %231 = vmatpush1.bf16.msra.mxu0 0
    %232 = vmatprep.subr.bf16.mxu0 0
    %233 = vmatpush1.bf16.msra.mxu0 0
    %234 = vmatprep.subr.bf16.mxu0 0
    %235 = vmatpush1.bf16.msra.mxu0 0
    %236 = vmatprep.subr.bf16.mxu0 0
    %237 = vmatpush1.bf16.msra.mxu0 0
    %238 = vmatprep.subr.bf16.mxu0 0
    %239 = vmatpush1.bf16.msra.mxu0 0
    %240 = vmatprep.subr.bf16.mxu0 0
    %241 = vmatpush1.bf16.msra.mxu0 0
    %242 = vmatprep.subr.bf16.mxu0 0
    %243 = vmatpush1.bf16.msra.mxu0 0
    %244 = vmatprep.subr.bf16.mxu0 0
    %245 = vmatpush1.bf16.msra.mxu0 0
    %246 = vmatprep.subr.bf16.mxu0 0
    %247 = vmatpush1.bf16.msra.mxu0 0
    %248 = vmatprep.subr.bf16.mxu0 0
    %249 = vmatpush1.bf16.msra.mxu0 0
    %250 = vmatprep.subr.bf16.mxu0 0
    %251 = vmatpush1.bf16.msra.mxu0 0
    %252 = vmatprep.subr.bf16.mxu0 0
    %253 = vmatpush1.bf16.msra.mxu0 0
    %254 = vmatprep.subr.bf16.mxu0 0
    %255 = vmatpush1.bf16.msra.mxu0 0
    %256 = vmatprep.subr.bf16.mxu0 0
    %257 = vmatpush1.bf16.msra.mxu0 0
    %258 = vmatprep.mubr.bf16.mxu0 0
    %259 = vmatmul.mubr.bf16.gmra.mrb[0].mxu0 %v142
    %v260 = vpop.f32.mrb[0].mxu0
    %v261 = vadd.f32 %v100, %v260
    %v262 = vpop.f32.mrb[0].mxu0
    %v263 = vpop.f32.mrb[0].mxu0
    %v264 = vadd.f32 %v100, %v263
    %v265 = vpop.f32.mrb[0].mxu0
    %266 = vmatprep.mubr.bf16.mxu0 0
    %267 = vmatmul.mubr.bf16.gmra.mrb[0].mxu0 %v145
    %v268 = vpop.f32.mrb[0].mxu0
    %v269 = vadd.f32 %v100, %v268
    %v270 = vpop.f32.mrb[0].mxu0
    %v271 = vpop.f32.mrb[0].mxu0
    %v272 = vadd.f32 %v100, %v271
    %v273 = vpop.f32.mrb[0].mxu0
    %274 = vmatprep.mubr.bf16.mxu0 0
    %275 = vmatmul.mubr.bf16.gmra.mrb[0].mxu0 %v148
    %v276 = vpop.f32.mrb[0].mxu0
    %v277 = vadd.f32 %v100, %v276
    %v278 = vpop.f32.mrb[0].mxu0
    %v279 = vpop.f32.mrb[0].mxu0
    %v280 = vadd.f32 %v100, %v279
    %v281 = vpop.f32.mrb[0].mxu0
    %282 = vmatprep.mubr.bf16.mxu0 0
    %283 = vmatmul.mubr.bf16.gmra.mrb[0].mxu0 %v151
    %v284 = vpop.f32.mrb[0].mxu0
    %v285 = vadd.f32 %v100, %v284
    %v286 = vpop.f32.mrb[0].mxu0
    %v287 = vpop.f32.mrb[0].mxu0
    %v288 = vadd.f32 %v100, %v287
    %v289 = vpop.f32.mrb[0].mxu0
    %290 = vdwg.mxu0
    %291 = vst [vmem:[#allocation2] sm:$0xff] %v188
    %292 = vst [vmem:[#allocation2 + $0x8] sm:$0xff] %v190
    %293 = vst [vmem:[#allocation2 + $0x10] sm:$0xff] %v261
    %294 = vst [vmem:[#allocation2 + $0x18] sm:$0xff] %v192
    %295 = vst [vmem:[#allocation2 + $0x20] sm:$0xff] %v194
    %296 = vst [vmem:[#allocation2 + $0x28] sm:$0xff] %v264
    %297 = vst [vmem:[#allocation2 + $0x30] sm:$0xff] %v198
    %298 = vst [vmem:[#allocation2 + $0x38] sm:$0xff] %v200
    %299 = vst [vmem:[#allocation2 + $0x40] sm:$0xff] %v269
    %300 = vst [vmem:[#allocation2 + $0x48] sm:$0xff] %v202
    %301 = vst [vmem:[#allocation2 + $0x50] sm:$0xff] %v204
    %302 = vst [vmem:[#allocation2 + $0x58] sm:$0xff] %v272
    %303 = vst [vmem:[#allocation2 + $0x60] sm:$0xff] %v208
    %304 = vst [vmem:[#allocation2 + $0x68] sm:$0xff] %v210
    %305 = vst [vmem:[#allocation2 + $0x70] sm:$0xff] %v277
    %306 = vst [vmem:[#allocation2 + $0x78] sm:$0xff] %v212
    %307 = vst [vmem:[#allocation2 + $0x80] sm:$0xff] %v214
    %308 = vst [vmem:[#allocation2 + $0x88] sm:$0xff] %v280
    %309 = vst [vmem:[#allocation2 + $0x90] sm:$0xff] %v218
    %310 = vst [vmem:[#allocation2 + $0x98] sm:$0xff] %v220
    %311 = vst [vmem:[#allocation2 + $0xa0] sm:$0xff] %v285
    %312 = vst [vmem:[#allocation2 + $0xa8] sm:$0xff] %v222
    %313 = vst [vmem:[#allocation2 + $0xb0] sm:$0xff] %v224
    %314 = vst [vmem:[#allocation2 + $0xb8] sm:$0xff] %v288
    %v315 = vld [vmem:[%s4] sm:$0x1]
    %v316 = vld [vmem:[#allocation2] sm:$0xff]
    %v317 = vld [vmem:[#allocation2 + $0x8] sm:$0xff]
    %v318 = vld [vmem:[#allocation2 + $0x10] sm:$0xff]
    %v319 = vld [vmem:[#allocation4] sm:$0xff]
    %v320 = vld [vmem:[#allocation4 + $0x8] sm:$0xf]
    %v321 = vld [vmem:[#allocation4 + $0xc] sm:$0xff]
    %v322 = vld [vmem:[#allocation4 + $0x14] sm:$0xf]
    %v323 = vld [vmem:[#allocation4 + $0x18] sm:$0xff]
    %v324 = vld [vmem:[#allocation4 + $0x20] sm:$0xf]
    %v325 = vld [vmem:[#allocation4 + $0x24] sm:$0xff]
    %v326 = vld [vmem:[#allocation4 + $0x2c] sm:$0xf]
    %v327 = vld [vmem:[#allocation4 + $0x30] sm:$0xff]
    %v328 = vld [vmem:[#allocation4 + $0x38] sm:$0xf]
    %v329 = vld [vmem:[#allocation4 + $0x3c] sm:$0xff]
    %v330 = vld [vmem:[#allocation4 + $0x44] sm:$0xf]
    %v331 = vld [vmem:[#allocation4 + $0x48] sm:$0xff]
    %v332 = vld [vmem:[#allocation4 + $0x50] sm:$0xf]
    %v333 = vld [vmem:[#allocation4 + $0x54] sm:$0xff]
    %v334 = vld [vmem:[#allocation4 + $0x5c] sm:$0xf]
    %v335 = vld [vmem:[#allocation4 + $0x60] sm:$0xff]
    %v336 = vld [vmem:[#allocation4 + $0x68] sm:$0xf]
    %v337 = vld [vmem:[#allocation4 + $0x6c] sm:$0xff]
    %v338 = vld [vmem:[#allocation4 + $0x74] sm:$0xf]
    %v339 = vld [vmem:[#allocation4 + $0x78] sm:$0xff]
    %v340 = vld [vmem:[#allocation4 + $0x80] sm:$0xf]
    %v341 = vld [vmem:[#allocation4 + $0x84] sm:$0xff]
    %v342 = vld [vmem:[#allocation4 + $0x8c] sm:$0xf]
    %v343 = vld [vmem:[#allocation4 + $0x90] sm:$0xff]
    %v344 = vld [vmem:[#allocation4 + $0x98] sm:$0xf]
    %v345 = vld [vmem:[#allocation4 + $0x9c] sm:$0xff]
    %v346 = vld [vmem:[#allocation4 + $0xa4] sm:$0xf]
    %v347 = vld [vmem:[#allocation4 + $0xa8] sm:$0xff]
    %v348 = vld [vmem:[#allocation4 + $0xb0] sm:$0xf]
    %v349 = vld [vmem:[#allocation4 + $0xb4] sm:$0xff]
    %v350 = vld [vmem:[#allocation4 + $0xbc] sm:$0xf]
    %v383 = vunpack.c.l.b16 %v319
    %v384 = vunpack.c.h.b16 %v319
    %v385 = vunpack.c.l.b16 %v320
    %v386 = vunpack.c.l.b16 %v321
    %v387 = vunpack.c.h.b16 %v321
    %v388 = vunpack.c.l.b16 %v322
    %v389 = vunpack.c.l.b16 %v323
    %v390 = vunpack.c.h.b16 %v323
    %v391 = vunpack.c.l.b16 %v324
    %v392 = vunpack.c.l.b16 %v325
    %v393 = vunpack.c.h.b16 %v325
    %v394 = vunpack.c.l.b16 %v326
    %v395 = vunpack.c.l.b16 %v327
    %v396 = vunpack.c.h.b16 %v327
    %v397 = vunpack.c.l.b16 %v328
    %v398 = vunpack.c.l.b16 %v329
    %v399 = vunpack.c.h.b16 %v329
    %v400 = vunpack.c.l.b16 %v330
    %v401 = vunpack.c.l.b16 %v331
    %v402 = vunpack.c.h.b16 %v331
    %v403 = vunpack.c.l.b16 %v332
    %v404 = vunpack.c.l.b16 %v333
    %v405 = vunpack.c.h.b16 %v333
    %v406 = vunpack.c.l.b16 %v334
    %v407 = vunpack.c.l.b16 %v335
    %v408 = vunpack.c.h.b16 %v335
    %v409 = vunpack.c.l.b16 %v336
    %v410 = vunpack.c.l.b16 %v337
    %v411 = vunpack.c.h.b16 %v337
    %v412 = vunpack.c.l.b16 %v338
    %v413 = vunpack.c.l.b16 %v339
    %v414 = vunpack.c.h.b16 %v339
    %v415 = vunpack.c.l.b16 %v340
    %v416 = vunpack.c.l.b16 %v341
    %v417 = vunpack.c.h.b16 %v341
    %v418 = vunpack.c.l.b16 %v342
    %v419 = vunpack.c.l.b16 %v343
    %v420 = vunpack.c.h.b16 %v343
    %v421 = vunpack.c.l.b16 %v344
    %v422 = vunpack.c.l.b16 %v345
    %v423 = vunpack.c.h.b16 %v345
    %v424 = vunpack.c.l.b16 %v346
    %v425 = vunpack.c.l.b16 %v347
    %v426 = vunpack.c.h.b16 %v347
    %v427 = vunpack.c.l.b16 %v348
    %v428 = vunpack.c.l.b16 %v349
    %v429 = vunpack.c.h.b16 %v349
    %v430 = vunpack.c.l.b16 %v350
    %v431 = vpack.c.b16 %v386, %v383
    %v432 = vpack.c.b16 %v387, %v384
    %v433 = vpack.c.b16 %v388, %v385
    %v434 = vpack.c.b16 %v392, %v389
    %v435 = vpack.c.b16 %v393, %v390
    %v436 = vpack.c.b16 %v394, %v391
    %v437 = vpack.c.b16 %v398, %v395
    %v438 = vpack.c.b16 %v399, %v396
    %v439 = vpack.c.b16 %v400, %v397
    %v440 = vpack.c.b16 %v404, %v401
    %v441 = vpack.c.b16 %v405, %v402
    %v442 = vpack.c.b16 %v406, %v403
    %v443 = vpack.c.b16 %v410, %v407
    %v444 = vpack.c.b16 %v411, %v408
    %v445 = vpack.c.b16 %v412, %v409
    %v446 = vpack.c.b16 %v416, %v413
    %v447 = vpack.c.b16 %v417, %v414
    %v448 = vpack.c.b16 %v418, %v415
    %v449 = vpack.c.b16 %v422, %v419
    %v450 = vpack.c.b16 %v423, %v420
    %v451 = vpack.c.b16 %v424, %v421
    %v452 = vpack.c.b16 %v428, %v425
    %v453 = vpack.c.b16 %v429, %v426
    %v454 = vpack.c.b16 %v430, %v427
    %479 = vmatprep.subr.bf16.mxu0 %v432
    %480 = vmatpush1.bf16.msra.mxu0 %v431
    %481 = vmatprep.subr.bf16.mxu0 %v435
    %482 = vmatpush1.bf16.msra.mxu0 %v434
    %483 = vmatprep.subr.bf16.mxu0 %v438
    %484 = vmatpush1.bf16.msra.mxu0 %v437
    %485 = vmatprep.subr.bf16.mxu0 %v441
    %486 = vmatpush1.bf16.msra.mxu0 %v440
    %487 = vmatprep.subr.bf16.mxu0 %v444
    %488 = vmatpush1.bf16.msra.mxu0 %v443
    %489 = vmatprep.subr.bf16.mxu0 %v447
    %490 = vmatpush1.bf16.msra.mxu0 %v446
    %491 = vmatprep.subr.bf16.mxu0 %v450
    %492 = vmatpush1.bf16.msra.mxu0 %v449
    %493 = vmatprep.subr.bf16.mxu0 %v453
    %494 = vmatpush1.bf16.msra.mxu0 %v452
    %495 = vmatprep.subr.bf16.mxu0 0
    %496 = vmatpush1.bf16.msra.mxu0 0
    %497 = vmatprep.subr.bf16.mxu0 0
    %498 = vmatpush1.bf16.msra.mxu0 0
    %499 = vmatprep.subr.bf16.mxu0 0
    %500 = vmatpush1.bf16.msra.mxu0 0
    %501 = vmatprep.subr.bf16.mxu0 0
    %502 = vmatpush1.bf16.msra.mxu0 0
    %503 = vmatprep.subr.bf16.mxu0 0
    %504 = vmatpush1.bf16.msra.mxu0 0
    %505 = vmatprep.subr.bf16.mxu0 0
    %506 = vmatpush1.bf16.msra.mxu0 0
    %507 = vmatprep.subr.bf16.mxu0 0
    %508 = vmatpush1.bf16.msra.mxu0 0
    %509 = vmatprep.subr.bf16.mxu0 0
    %510 = vmatpush1.bf16.msra.mxu0 0
    %511 = vmatprep.mubr.bf16.mxu0 0
    %512 = vmatmul.mubr.bf16.gmra.mrb[0].mxu0 0
    %v513 = vpop.f32.mrb[0].mxu0
    %v514 = vadd.f32 0.0, %v513
    %v515 = vpop.f32.mrb[0].mxu0
    %v516 = vadd.f32 0.0, %v515
    %v517 = vpop.f32.mrb[0].mxu0
    %v518 = vpop.f32.mrb[0].mxu0
    %519 = vdwg.mxu0
    %520 = vmatprep.subr.bf16.mxu0 0
    %521 = vmatpush1.bf16.msra.mxu0 %v433
    %522 = vmatprep.subr.bf16.mxu0 0
    %523 = vmatpush1.bf16.msra.mxu0 %v436
    %524 = vmatprep.subr.bf16.mxu0 0
    %525 = vmatpush1.bf16.msra.mxu0 %v439
    %526 = vmatprep.subr.bf16.mxu0 0
    %527 = vmatpush1.bf16.msra.mxu0 %v442
    %528 = vmatprep.subr.bf16.mxu0 0
    %529 = vmatpush1.bf16.msra.mxu0 %v445
    %530 = vmatprep.subr.bf16.mxu0 0
    %531 = vmatpush1.bf16.msra.mxu0 %v448
    %532 = vmatprep.subr.bf16.mxu0 0
    %533 = vmatpush1.bf16.msra.mxu0 %v451
    %534 = vmatprep.subr.bf16.mxu0 0
    %535 = vmatpush1.bf16.msra.mxu0 %v454
    %536 = vmatprep.subr.bf16.mxu0 0
    %537 = vmatpush1.bf16.msra.mxu0 0
    %538 = vmatprep.subr.bf16.mxu0 0
    %539 = vmatpush1.bf16.msra.mxu0 0
    %540 = vmatprep.subr.bf16.mxu0 0
    %541 = vmatpush1.bf16.msra.mxu0 0
    %542 = vmatprep.subr.bf16.mxu0 0
    %543 = vmatpush1.bf16.msra.mxu0 0
    %544 = vmatprep.subr.bf16.mxu0 0
    %545 = vmatpush1.bf16.msra.mxu0 0
    %546 = vmatprep.subr.bf16.mxu0 0
    %547 = vmatpush1.bf16.msra.mxu0 0
    %548 = vmatprep.subr.bf16.mxu0 0
    %549 = vmatpush1.bf16.msra.mxu0 0
    %550 = vmatprep.subr.bf16.mxu0 0
    %551 = vmatpush1.bf16.msra.mxu0 0
    %552 = vmatprep.mubr.bf16.mxu0 0
    %553 = vmatmul.mubr.bf16.gmra.mrb[0].mxu0 0
    %v554 = vpop.f32.mrb[0].mxu0
    %v555 = vadd.f32 0.0, %v554
    %v556 = vpop.f32.mrb[0].mxu0
    %v557 = vpop.f32.mrb[0].mxu0
    %v558 = vpop.f32.mrb[0].mxu0
    %559 = vdwg.mxu0
    %v560 = vadd.f32 %v316, %v514
    %v561 = vadd.f32 %v317, %v516
    %v562 = vxor.u32 %v560, 2147483648
    %v563 = vxor.u32 %v561, 2147483648
    %v564 = vmul.f32 %v562, 1.442695
    %v565 = vpow.pop %v564
    %v566 = vmul.f32 %v563, 1.442695
    %v567 = vpow.pop %v566
    %v568 = vadd.f32 %v565, 1.0
    %v569 = vadd.f32 %v567, 1.0
    %v570 = vrcp.pop %v568
    %v571 = vmul.f32 1.0, %v570
    %v572 = vrcp.pop %v569
    %v573 = vmul.f32 1.0, %v572
    %v575 = vlaneseq
    %v576 = vshrl.u32 %v575, 7
    %v577 = vsub.s32 0, %v576
    %v578 = vrot.slane %v315, %v577
    %v580 = vadd.f32 %v555, %v578
    %v581 = vmul.f32 %v571, %v580
    %v582 = vadd.f32 %v318, %v581
    %v583 = vtanh.pop %v582
    %v584 = vsub.f32 0.0, %v583
    %v585 = vmul.f32 %v573, %v584
    %v586 = vadd.f32 %v583, %v585
    %v587 = vpack.c.bf16 %v586, %v586
    %588 = vst [vmem:[#allocation3] sm:$0xf] %v587
    %v589 = vld [vmem:[#allocation2 + $0x18] sm:$0xff]
    %v590 = vld [vmem:[#allocation2 + $0x20] sm:$0xff]
    %v591 = vld [vmem:[#allocation2 + $0x28] sm:$0xff]
    %v592 = vld [vmem:[#allocation4] sm:$0xff]
    %v593 = vld [vmem:[#allocation4 + $0x8] sm:$0xf]
    %v594 = vld [vmem:[#allocation4 + $0xc] sm:$0xff]
    %v595 = vld [vmem:[#allocation4 + $0x14] sm:$0xf]
    %v596 = vld [vmem:[#allocation4 + $0x18] sm:$0xff]
    %v597 = vld [vmem:[#allocation4 + $0x20] sm:$0xf]
    %v598 = vld [vmem:[#allocation4 + $0x24] sm:$0xff]
    %v599 = vld [vmem:[#allocation4 + $0x2c] sm:$0xf]
    %v600 = vld [vmem:[#allocation4 + $0x30] sm:$0xff]
    %v601 = vld [vmem:[#allocation4 + $0x38] sm:$0xf]
    %v602 = vld [vmem:[#allocation4 + $0x3c] sm:$0xff]
    %v603 = vld [vmem:[#allocation4 + $0x44] sm:$0xf]
    %v604 = vld [vmem:[#allocation4 + $0x48] sm:$0xff]
    %v605 = vld [vmem:[#allocation4 + $0x50] sm:$0xf]
    %v606 = vld [vmem:[#allocation4 + $0x54] sm:$0xff]
    %v607 = vld [vmem:[#allocation4 + $0x5c] sm:$0xf]
    %v608 = vld [vmem:[#allocation4 + $0x60] sm:$0xff]
    %v609 = vld [vmem:[#allocation4 + $0x68] sm:$0xf]
    %v610 = vld [vmem:[#allocation4 + $0x6c] sm:$0xff]
    %v611 = vld [vmem:[#allocation4 + $0x74] sm:$0xf]
    %v612 = vld [vmem:[#allocation4 + $0x78] sm:$0xff]
    %v613 = vld [vmem:[#allocation4 + $0x80] sm:$0xf]
    %v614 = vld [vmem:[#allocation4 + $0x84] sm:$0xff]
    %v615 = vld [vmem:[#allocation4 + $0x8c] sm:$0xf]
    %v616 = vld [vmem:[#allocation4 + $0x90] sm:$0xff]
    %v617 = vld [vmem:[#allocation4 + $0x98] sm:$0xf]
    %v618 = vld [vmem:[#allocation4 + $0x9c] sm:$0xff]
    %v619 = vld [vmem:[#allocation4 + $0xa4] sm:$0xf]
    %v620 = vld [vmem:[#allocation4 + $0xa8] sm:$0xff]
    %v621 = vld [vmem:[#allocation4 + $0xb0] sm:$0xf]
    %v622 = vld [vmem:[#allocation4 + $0xb4] sm:$0xff]
    %v623 = vld [vmem:[#allocation4 + $0xbc] sm:$0xf]
    %v656 = vunpack.c.l.b16 %v592
    %v657 = vunpack.c.h.b16 %v592
    %v658 = vunpack.c.l.b16 %v593
    %v659 = vunpack.c.l.b16 %v594
    %v660 = vunpack.c.h.b16 %v594
    %v661 = vunpack.c.l.b16 %v595
    %v662 = vunpack.c.l.b16 %v596
    %v663 = vunpack.c.h.b16 %v596
    %v664 = vunpack.c.l.b16 %v597
    %v665 = vunpack.c.l.b16 %v598
    %v666 = vunpack.c.h.b16 %v598
    %v667 = vunpack.c.l.b16 %v599
    %v668 = vunpack.c.l.b16 %v600
    %v669 = vunpack.c.h.b16 %v600
    %v670 = vunpack.c.l.b16 %v601
    %v671 = vunpack.c.l.b16 %v602
    %v672 = vunpack.c.h.b16 %v602
    %v673 = vunpack.c.l.b16 %v603
    %v674 = vunpack.c.l.b16 %v604
    %v675 = vunpack.c.h.b16 %v604
    %v676 = vunpack.c.l.b16 %v605
    %v677 = vunpack.c.l.b16 %v606
    %v678 = vunpack.c.h.b16 %v606
    %v679 = vunpack.c.l.b16 %v607
    %v680 = vunpack.c.l.b16 %v608
    %v681 = vunpack.c.h.b16 %v608
    %v682 = vunpack.c.l.b16 %v609
    %v683 = vunpack.c.l.b16 %v610
    %v684 = vunpack.c.h.b16 %v610
    %v685 = vunpack.c.l.b16 %v611
    %v686 = vunpack.c.l.b16 %v612
    %v687 = vunpack.c.h.b16 %v612
    %v688 = vunpack.c.l.b16 %v613
    %v689 = vunpack.c.l.b16 %v614
    %v690 = vunpack.c.h.b16 %v614
    %v691 = vunpack.c.l.b16 %v615
    %v692 = vunpack.c.l.b16 %v616
    %v693 = vunpack.c.h.b16 %v616
    %v694 = vunpack.c.l.b16 %v617
    %v695 = vunpack.c.l.b16 %v618
    %v696 = vunpack.c.h.b16 %v618
    %v697 = vunpack.c.l.b16 %v619
    %v698 = vunpack.c.l.b16 %v620
    %v699 = vunpack.c.h.b16 %v620
    %v700 = vunpack.c.l.b16 %v621
    %v701 = vunpack.c.l.b16 %v622
    %v702 = vunpack.c.h.b16 %v622
    %v703 = vunpack.c.l.b16 %v623
    %v704 = vpack.c.b16 %v659, %v656
    %v705 = vpack.c.b16 %v660, %v657
    %v706 = vpack.c.b16 %v661, %v658
    %v707 = vpack.c.b16 %v665, %v662
    %v708 = vpack.c.b16 %v666, %v663
    %v709 = vpack.c.b16 %v667, %v664
    %v710 = vpack.c.b16 %v671, %v668
    %v711 = vpack.c.b16 %v672, %v669
    %v712 = vpack.c.b16 %v673, %v670
    %v713 = vpack.c.b16 %v677, %v674
    %v714 = vpack.c.b16 %v678, %v675
    %v715 = vpack.c.b16 %v679, %v676
    %v716 = vpack.c.b16 %v683, %v680
    %v717 = vpack.c.b16 %v684, %v681
    %v718 = vpack.c.b16 %v685, %v682
    %v719 = vpack.c.b16 %v689, %v686
    %v720 = vpack.c.b16 %v690, %v687
    %v721 = vpack.c.b16 %v691, %v688
    %v722 = vpack.c.b16 %v695, %v692
    %v723 = vpack.c.b16 %v696, %v693
    %v724 = vpack.c.b16 %v697, %v694
    %v725 = vpack.c.b16 %v701, %v698
    %v726 = vpack.c.b16 %v702, %v699
    %v727 = vpack.c.b16 %v703, %v700
    %752 = vmatprep.subr.bf16.mxu0 %v705
    %753 = vmatpush1.bf16.msra.mxu0 %v704
    %754 = vmatprep.subr.bf16.mxu0 %v708
    %755 = vmatpush1.bf16.msra.mxu0 %v707
    %756 = vmatprep.subr.bf16.mxu0 %v711
    %757 = vmatpush1.bf16.msra.mxu0 %v710
    %758 = vmatprep.subr.bf16.mxu0 %v714
    %759 = vmatpush1.bf16.msra.mxu0 %v713
    %760 = vmatprep.subr.bf16.mxu0 %v717
    %761 = vmatpush1.bf16.msra.mxu0 %v716
    %762 = vmatprep.subr.bf16.mxu0 %v720
    %763 = vmatpush1.bf16.msra.mxu0 %v719
    %764 = vmatprep.subr.bf16.mxu0 %v723
    %765 = vmatpush1.bf16.msra.mxu0 %v722
    %766 = vmatprep.subr.bf16.mxu0 %v726
    %767 = vmatpush1.bf16.msra.mxu0 %v725
    %768 = vmatprep.subr.bf16.mxu0 0
    %769 = vmatpush1.bf16.msra.mxu0 0
    %770 = vmatprep.subr.bf16.mxu0 0
    %771 = vmatpush1.bf16.msra.mxu0 0
    %772 = vmatprep.subr.bf16.mxu0 0
    %773 = vmatpush1.bf16.msra.mxu0 0
    %774 = vmatprep.subr.bf16.mxu0 0
    %775 = vmatpush1.bf16.msra.mxu0 0
    %776 = vmatprep.subr.bf16.mxu0 0
    %777 = vmatpush1.bf16.msra.mxu0 0
    %778 = vmatprep.subr.bf16.mxu0 0
    %779 = vmatpush1.bf16.msra.mxu0 0
    %780 = vmatprep.subr.bf16.mxu0 0
    %781 = vmatpush1.bf16.msra.mxu0 0
    %782 = vmatprep.subr.bf16.mxu0 0
    %783 = vmatpush1.bf16.msra.mxu0 0
    %784 = vmatprep.mubr.bf16.mxu0 0
    %785 = vmatmul.mubr.bf16.gmra.mrb[0].mxu0 %v587
    %v786 = vpop.f32.mrb[0].mxu0
    %v787 = vadd.f32 0.0, %v786
    %v788 = vpop.f32.mrb[0].mxu0
    %v789 = vadd.f32 0.0, %v788
    %v790 = vpop.f32.mrb[0].mxu0
    %v791 = vpop.f32.mrb[0].mxu0
    %792 = vdwg.mxu0
    %793 = vmatprep.subr.bf16.mxu0 0
    %794 = vmatpush1.bf16.msra.mxu0 %v706
    %795 = vmatprep.subr.bf16.mxu0 0
    %796 = vmatpush1.bf16.msra.mxu0 %v709
    %797 = vmatprep.subr.bf16.mxu0 0
    %798 = vmatpush1.bf16.msra.mxu0 %v712
    %799 = vmatprep.subr.bf16.mxu0 0
    %800 = vmatpush1.bf16.msra.mxu0 %v715
    %801 = vmatprep.subr.bf16.mxu0 0
    %802 = vmatpush1.bf16.msra.mxu0 %v718
    %803 = vmatprep.subr.bf16.mxu0 0
    %804 = vmatpush1.bf16.msra.mxu0 %v721
    %805 = vmatprep.subr.bf16.mxu0 0
    %806 = vmatpush1.bf16.msra.mxu0 %v724
    %807 = vmatprep.subr.bf16.mxu0 0
    %808 = vmatpush1.bf16.msra.mxu0 %v727
    %809 = vmatprep.subr.bf16.mxu0 0
    %810 = vmatpush1.bf16.msra.mxu0 0
    %811 = vmatprep.subr.bf16.mxu0 0
    %812 = vmatpush1.bf16.msra.mxu0 0
    %813 = vmatprep.subr.bf16.mxu0 0
    %814 = vmatpush1.bf16.msra.mxu0 0
    %815 = vmatprep.subr.bf16.mxu0 0
    %816 = vmatpush1.bf16.msra.mxu0 0
    %817 = vmatprep.subr.bf16.mxu0 0
    %818 = vmatpush1.bf16.msra.mxu0 0
    %819 = vmatprep.subr.bf16.mxu0 0
    %820 = vmatpush1.bf16.msra.mxu0 0
    %821 = vmatprep.subr.bf16.mxu0 0
    %822 = vmatpush1.bf16.msra.mxu0 0
    %823 = vmatprep.subr.bf16.mxu0 0
    %824 = vmatpush1.bf16.msra.mxu0 0
    %825 = vmatprep.mubr.bf16.mxu0 0
    %826 = vmatmul.mubr.bf16.gmra.mrb[0].mxu0 %v587
    %v827 = vpop.f32.mrb[0].mxu0
    %v828 = vadd.f32 0.0, %v827
    %v829 = vpop.f32.mrb[0].mxu0
    %v830 = vpop.f32.mrb[0].mxu0
    %v831 = vpop.f32.mrb[0].mxu0
    %832 = vdwg.mxu0
    %v833 = vadd.f32 %v589, %v787
    %v834 = vadd.f32 %v590, %v789
    %v835 = vxor.u32 %v833, 2147483648
    %v836 = vxor.u32 %v834, 2147483648
    %v837 = vmul.f32 %v835, 1.442695
    %v838 = vpow.pop %v837
    %v839 = vmul.f32 %v836, 1.442695
    %v840 = vpow.pop %v839
    %v841 = vadd.f32 %v838, 1.0
    %v842 = vadd.f32 %v840, 1.0
    %v843 = vrcp.pop %v841
    %v844 = vmul.f32 1.0, %v843
    %v845 = vrcp.pop %v842
    %v846 = vmul.f32 1.0, %v845
    %v847 = vadd.f32 %v828, %v578
    %v848 = vmul.f32 %v844, %v847
    %v849 = vadd.f32 %v591, %v848
    %v850 = vtanh.pop %v849
    %v851 = vsub.f32 %v586, %v850
    %v852 = vmul.f32 %v846, %v851
    %v853 = vadd.f32 %v850, %v852
    %v854 = vpack.c.bf16 %v853, %v853
    %v856 = vrot.slane %v854, 4
    %858 = vst [vmem:[#allocation3] sm:$0xf0] %v856
    %v859 = vld [vmem:[#allocation2 + $0x30] sm:$0xff]
    %v860 = vld [vmem:[#allocation2 + $0x38] sm:$0xff]
    %v861 = vld [vmem:[#allocation2 + $0x40] sm:$0xff]
    %v862 = vld [vmem:[#allocation4] sm:$0xff]
    %v863 = vld [vmem:[#allocation4 + $0x8] sm:$0xf]
    %v864 = vld [vmem:[#allocation4 + $0xc] sm:$0xff]
    %v865 = vld [vmem:[#allocation4 + $0x14] sm:$0xf]
    %v866 = vld [vmem:[#allocation4 + $0x18] sm:$0xff]
    %v867 = vld [vmem:[#allocation4 + $0x20] sm:$0xf]
    %v868 = vld [vmem:[#allocation4 + $0x24] sm:$0xff]
    %v869 = vld [vmem:[#allocation4 + $0x2c] sm:$0xf]
    %v870 = vld [vmem:[#allocation4 + $0x30] sm:$0xff]
    %v871 = vld [vmem:[#allocation4 + $0x38] sm:$0xf]
    %v872 = vld [vmem:[#allocation4 + $0x3c] sm:$0xff]
    %v873 = vld [vmem:[#allocation4 + $0x44] sm:$0xf]
    %v874 = vld [vmem:[#allocation4 + $0x48] sm:$0xff]
    %v875 = vld [vmem:[#allocation4 + $0x50] sm:$0xf]
    %v876 = vld [vmem:[#allocation4 + $0x54] sm:$0xff]
    %v877 = vld [vmem:[#allocation4 + $0x5c] sm:$0xf]
    %v878 = vld [vmem:[#allocation4 + $0x60] sm:$0xff]
    %v879 = vld [vmem:[#allocation4 + $0x68] sm:$0xf]
    %v880 = vld [vmem:[#allocation4 + $0x6c] sm:$0xff]
    %v881 = vld [vmem:[#allocation4 + $0x74] sm:$0xf]
    %v882 = vld [vmem:[#allocation4 + $0x78] sm:$0xff]
    %v883 = vld [vmem:[#allocation4 + $0x80] sm:$0xf]
    %v884 = vld [vmem:[#allocation4 + $0x84] sm:$0xff]
    %v885 = vld [vmem:[#allocation4 + $0x8c] sm:$0xf]
    %v886 = vld [vmem:[#allocation4 + $0x90] sm:$0xff]
    %v887 = vld [vmem:[#allocation4 + $0x98] sm:$0xf]
    %v888 = vld [vmem:[#allocation4 + $0x9c] sm:$0xff]
    %v889 = vld [vmem:[#allocation4 + $0xa4] sm:$0xf]
    %v890 = vld [vmem:[#allocation4 + $0xa8] sm:$0xff]
    %v891 = vld [vmem:[#allocation4 + $0xb0] sm:$0xf]
    %v892 = vld [vmem:[#allocation4 + $0xb4] sm:$0xff]
    %v893 = vld [vmem:[#allocation4 + $0xbc] sm:$0xf]
    %v926 = vunpack.c.l.b16 %v862
    %v927 = vunpack.c.h.b16 %v862
    %v928 = vunpack.c.l.b16 %v863
    %v929 = vunpack.c.l.b16 %v864
    %v930 = vunpack.c.h.b16 %v864
    %v931 = vunpack.c.l.b16 %v865
    %v932 = vunpack.c.l.b16 %v866
    %v933 = vunpack.c.h.b16 %v866
    %v934 = vunpack.c.l.b16 %v867
    %v935 = vunpack.c.l.b16 %v868
    %v936 = vunpack.c.h.b16 %v868
    %v937 = vunpack.c.l.b16 %v869
    %v938 = vunpack.c.l.b16 %v870
    %v939 = vunpack.c.h.b16 %v870
    %v940 = vunpack.c.l.b16 %v871
    %v941 = vunpack.c.l.b16 %v872
    %v942 = vunpack.c.h.b16 %v872
    %v943 = vunpack.c.l.b16 %v873
    %v944 = vunpack.c.l.b16 %v874
    %v945 = vunpack.c.h.b16 %v874
    %v946 = vunpack.c.l.b16 %v875
    %v947 = vunpack.c.l.b16 %v876
    %v948 = vunpack.c.h.b16 %v876
    %v949 = vunpack.c.l.b16 %v877
    %v950 = vunpack.c.l.b16 %v878
    %v951 = vunpack.c.h.b16 %v878
    %v952 = vunpack.c.l.b16 %v879
    %v953 = vunpack.c.l.b16 %v880
    %v954 = vunpack.c.h.b16 %v880
    %v955 = vunpack.c.l.b16 %v881
    %v956 = vunpack.c.l.b16 %v882
    %v957 = vunpack.c.h.b16 %v882
    %v958 = vunpack.c.l.b16 %v883
    %v959 = vunpack.c.l.b16 %v884
    %v960 = vunpack.c.h.b16 %v884
    %v961 = vunpack.c.l.b16 %v885
    %v962 = vunpack.c.l.b16 %v886
    %v963 = vunpack.c.h.b16 %v886
    %v964 = vunpack.c.l.b16 %v887
    %v965 = vunpack.c.l.b16 %v888
    %v966 = vunpack.c.h.b16 %v888
    %v967 = vunpack.c.l.b16 %v889
    %v968 = vunpack.c.l.b16 %v890
    %v969 = vunpack.c.h.b16 %v890
    %v970 = vunpack.c.l.b16 %v891
    %v971 = vunpack.c.l.b16 %v892
    %v972 = vunpack.c.h.b16 %v892
    %v973 = vunpack.c.l.b16 %v893
    %v974 = vpack.c.b16 %v929, %v926
    %v975 = vpack.c.b16 %v930, %v927
    %v976 = vpack.c.b16 %v931, %v928
    %v977 = vpack.c.b16 %v935, %v932
    %v978 = vpack.c.b16 %v936, %v933
    %v979 = vpack.c.b16 %v937, %v934
    %v980 = vpack.c.b16 %v941, %v938
    %v981 = vpack.c.b16 %v942, %v939
    %v982 = vpack.c.b16 %v943, %v940
    %v983 = vpack.c.b16 %v947, %v944
    %v984 = vpack.c.b16 %v948, %v945
    %v985 = vpack.c.b16 %v949, %v946
    %v986 = vpack.c.b16 %v953, %v950
    %v987 = vpack.c.b16 %v954, %v951
    %v988 = vpack.c.b16 %v955, %v952
    %v989 = vpack.c.b16 %v959, %v956
    %v990 = vpack.c.b16 %v960, %v957
    %v991 = vpack.c.b16 %v961, %v958
    %v992 = vpack.c.b16 %v965, %v962
    %v993 = vpack.c.b16 %v966, %v963
    %v994 = vpack.c.b16 %v967, %v964
    %v995 = vpack.c.b16 %v971, %v968
    %v996 = vpack.c.b16 %v972, %v969
    %v997 = vpack.c.b16 %v973, %v970
    %1022 = vmatprep.subr.bf16.mxu0 %v975
    %1023 = vmatpush1.bf16.msra.mxu0 %v974
    %1024 = vmatprep.subr.bf16.mxu0 %v978
    %1025 = vmatpush1.bf16.msra.mxu0 %v977
    %1026 = vmatprep.subr.bf16.mxu0 %v981
    %1027 = vmatpush1.bf16.msra.mxu0 %v980
    %1028 = vmatprep.subr.bf16.mxu0 %v984
    %1029 = vmatpush1.bf16.msra.mxu0 %v983
    %1030 = vmatprep.subr.bf16.mxu0 %v987
    %1031 = vmatpush1.bf16.msra.mxu0 %v986
    %1032 = vmatprep.subr.bf16.mxu0 %v990
    %1033 = vmatpush1.bf16.msra.mxu0 %v989
    %1034 = vmatprep.subr.bf16.mxu0 %v993
    %1035 = vmatpush1.bf16.msra.mxu0 %v992
    %1036 = vmatprep.subr.bf16.mxu0 %v996
    %1037 = vmatpush1.bf16.msra.mxu0 %v995
    %1038 = vmatprep.subr.bf16.mxu0 0
    %1039 = vmatpush1.bf16.msra.mxu0 0
    %1040 = vmatprep.subr.bf16.mxu0 0
    %1041 = vmatpush1.bf16.msra.mxu0 0
    %1042 = vmatprep.subr.bf16.mxu0 0
    %1043 = vmatpush1.bf16.msra.mxu0 0
    %1044 = vmatprep.subr.bf16.mxu0 0
    %1045 = vmatpush1.bf16.msra.mxu0 0
    %1046 = vmatprep.subr.bf16.mxu0 0
    %1047 = vmatpush1.bf16.msra.mxu0 0
    %1048 = vmatprep.subr.bf16.mxu0 0
    %1049 = vmatpush1.bf16.msra.mxu0 0
    %1050 = vmatprep.subr.bf16.mxu0 0
    %1051 = vmatpush1.bf16.msra.mxu0 0
    %1052 = vmatprep.subr.bf16.mxu0 0
    %1053 = vmatpush1.bf16.msra.mxu0 0
    %1054 = vmatprep.mubr.bf16.mxu0 0
    %1055 = vmatmul.mubr.bf16.gmra.mrb[0].mxu0 %v854
    %v1056 = vpop.f32.mrb[0].mxu0
    %v1057 = vadd.f32 0.0, %v1056
    %v1058 = vpop.f32.mrb[0].mxu0
    %v1059 = vadd.f32 0.0, %v1058
    %v1060 = vpop.f32.mrb[0].mxu0
    %v1061 = vpop.f32.mrb[0].mxu0
    %1062 = vdwg.mxu0
    %1063 = vmatprep.subr.bf16.mxu0 0
    %1064 = vmatpush1.bf16.msra.mxu0 %v976
    %1065 = vmatprep.subr.bf16.mxu0 0
    %1066 = vmatpush1.bf16.msra.mxu0 %v979
    %1067 = vmatprep.subr.bf16.mxu0 0
    %1068 = vmatpush1.bf16.msra.mxu0 %v982
    %1069 = vmatprep.subr.bf16.mxu0 0
    %1070 = vmatpush1.bf16.msra.mxu0 %v985
    %1071 = vmatprep.subr.bf16.mxu0 0
    %1072 = vmatpush1.bf16.msra.mxu0 %v988
    %1073 = vmatprep.subr.bf16.mxu0 0
    %1074 = vmatpush1.bf16.msra.mxu0 %v991
    %1075 = vmatprep.subr.bf16.mxu0 0
    %1076 = vmatpush1.bf16.msra.mxu0 %v994
    %1077 = vmatprep.subr.bf16.mxu0 0
    %1078 = vmatpush1.bf16.msra.mxu0 %v997
    %1079 = vmatprep.subr.bf16.mxu0 0
    %1080 = vmatpush1.bf16.msra.mxu0 0
    %1081 = vmatprep.subr.bf16.mxu0 0
    %1082 = vmatpush1.bf16.msra.mxu0 0
    %1083 = vmatprep.subr.bf16.mxu0 0
    %1084 = vmatpush1.bf16.msra.mxu0 0
    %1085 = vmatprep.subr.bf16.mxu0 0
    %1086 = vmatpush1.bf16.msra.mxu0 0
    %1087 = vmatprep.subr.bf16.mxu0 0
    %1088 = vmatpush1.bf16.msra.mxu0 0
    %1089 = vmatprep.subr.bf16.mxu0 0
    %1090 = vmatpush1.bf16.msra.mxu0 0
    %1091 = vmatprep.subr.bf16.mxu0 0
    %1092 = vmatpush1.bf16.msra.mxu0 0
    %1093 = vmatprep.subr.bf16.mxu0 0
    %1094 = vmatpush1.bf16.msra.mxu0 0
    %1095 = vmatprep.mubr.bf16.mxu0 0
    %1096 = vmatmul.mubr.bf16.gmra.mrb[0].mxu0 %v854
    %v1097 = vpop.f32.mrb[0].mxu0
    %v1098 = vadd.f32 0.0, %v1097
    %v1099 = vpop.f32.mrb[0].mxu0
    %v1100 = vpop.f32.mrb[0].mxu0
    %v1101 = vpop.f32.mrb[0].mxu0
    %1102 = vdwg.mxu0
    %v1103 = vadd.f32 %v859, %v1057
    %v1104 = vadd.f32 %v860, %v1059
    %v1105 = vxor.u32 %v1103, 2147483648
    %v1106 = vxor.u32 %v1104, 2147483648
    %v1107 = vmul.f32 %v1105, 1.442695
    %v1108 = vpow.pop %v1107
    %v1109 = vmul.f32 %v1106, 1.442695
    %v1110 = vpow.pop %v1109
    %v1111 = vadd.f32 %v1108, 1.0
    %v1112 = vadd.f32 %v1110, 1.0
    %v1113 = vrcp.pop %v1111
    %v1114 = vmul.f32 1.0, %v1113
    %v1115 = vrcp.pop %v1112
    %v1116 = vmul.f32 1.0, %v1115
    %v1117 = vadd.f32 %v1098, %v578
    %v1118 = vmul.f32 %v1114, %v1117
    %v1119 = vadd.f32 %v861, %v1118
    %v1120 = vtanh.pop %v1119
    %v1121 = vsub.f32 %v853, %v1120
    %v1122 = vmul.f32 %v1116, %v1121
    %v1123 = vadd.f32 %v1120, %v1122
    %v1124 = vpack.c.bf16 %v1123, %v1123
    %1125 = vst [vmem:[#allocation3 + $0x8] sm:$0xf] %v1124
    %v1126 = vld [vmem:[#allocation2 + $0x48] sm:$0xff]
    %v1127 = vld [vmem:[#allocation2 + $0x50] sm:$0xff]
    %v1128 = vld [vmem:[#allocation2 + $0x58] sm:$0xff]
    %v1129 = vld [vmem:[#allocation4] sm:$0xff]
    %v1130 = vld [vmem:[#allocation4 + $0x8] sm:$0xf]
    %v1131 = vld [vmem:[#allocation4 + $0xc] sm:$0xff]
    %v1132 = vld [vmem:[#allocation4 + $0x14] sm:$0xf]
    %v1133 = vld [vmem:[#allocation4 + $0x18] sm:$0xff]
    %v1134 = vld [vmem:[#allocation4 + $0x20] sm:$0xf]
    %v1135 = vld [vmem:[#allocation4 + $0x24] sm:$0xff]
    %v1136 = vld [vmem:[#allocation4 + $0x2c] sm:$0xf]
    %v1137 = vld [vmem:[#allocation4 + $0x30] sm:$0xff]
    %v1138 = vld [vmem:[#allocation4 + $0x38] sm:$0xf]
    %v1139 = vld [vmem:[#allocation4 + $0x3c] sm:$0xff]
    %v1140 = vld [vmem:[#allocation4 + $0x44] sm:$0xf]
    %v1141 = vld [vmem:[#allocation4 + $0x48] sm:$0xff]
    %v1142 = vld [vmem:[#allocation4 + $0x50] sm:$0xf]
    %v1143 = vld [vmem:[#allocation4 + $0x54] sm:$0xff]
    %v1144 = vld [vmem:[#allocation4 + $0x5c] sm:$0xf]
    %v1145 = vld [vmem:[#allocation4 + $0x60] sm:$0xff]
    %v1146 = vld [vmem:[#allocation4 + $0x68] sm:$0xf]
    %v1147 = vld [vmem:[#allocation4 + $0x6c] sm:$0xff]
    %v1148 = vld [vmem:[#allocation4 + $0x74] sm:$0xf]
    %v1149 = vld [vmem:[#allocation4 + $0x78] sm:$0xff]
    %v1150 = vld [vmem:[#allocation4 + $0x80] sm:$0xf]
    %v1151 = vld [vmem:[#allocation4 + $0x84] sm:$0xff]
    %v1152 = vld [vmem:[#allocation4 + $0x8c] sm:$0xf]
    %v1153 = vld [vmem:[#allocation4 + $0x90] sm:$0xff]
    %v1154 = vld [vmem:[#allocation4 + $0x98] sm:$0xf]
    %v1155 = vld [vmem:[#allocation4 + $0x9c] sm:$0xff]
    %v1156 = vld [vmem:[#allocation4 + $0xa4] sm:$0xf]
    %v1157 = vld [vmem:[#allocation4 + $0xa8] sm:$0xff]
    %v1158 = vld [vmem:[#allocation4 + $0xb0] sm:$0xf]
    %v1159 = vld [vmem:[#allocation4 + $0xb4] sm:$0xff]
    %v1160 = vld [vmem:[#allocation4 + $0xbc] sm:$0xf]
    %v1193 = vunpack.c.l.b16 %v1129
    %v1194 = vunpack.c.h.b16 %v1129
    %v1195 = vunpack.c.l.b16 %v1130
    %v1196 = vunpack.c.l.b16 %v1131
    %v1197 = vunpack.c.h.b16 %v1131
    %v1198 = vunpack.c.l.b16 %v1132
    %v1199 = vunpack.c.l.b16 %v1133
    %v1200 = vunpack.c.h.b16 %v1133
    %v1201 = vunpack.c.l.b16 %v1134
    %v1202 = vunpack.c.l.b16 %v1135
    %v1203 = vunpack.c.h.b16 %v1135
    %v1204 = vunpack.c.l.b16 %v1136
    %v1205 = vunpack.c.l.b16 %v1137
    %v1206 = vunpack.c.h.b16 %v1137
    %v1207 = vunpack.c.l.b16 %v1138
    %v1208 = vunpack.c.l.b16 %v1139
    %v1209 = vunpack.c.h.b16 %v1139
    %v1210 = vunpack.c.l.b16 %v1140
    %v1211 = vunpack.c.l.b16 %v1141
    %v1212 = vunpack.c.h.b16 %v1141
    %v1213 = vunpack.c.l.b16 %v1142
    %v1214 = vunpack.c.l.b16 %v1143
    %v1215 = vunpack.c.h.b16 %v1143
    %v1216 = vunpack.c.l.b16 %v1144
    %v1217 = vunpack.c.l.b16 %v1145
    %v1218 = vunpack.c.h.b16 %v1145
    %v1219 = vunpack.c.l.b16 %v1146
    %v1220 = vunpack.c.l.b16 %v1147
    %v1221 = vunpack.c.h.b16 %v1147
    %v1222 = vunpack.c.l.b16 %v1148
    %v1223 = vunpack.c.l.b16 %v1149
    %v1224 = vunpack.c.h.b16 %v1149
    %v1225 = vunpack.c.l.b16 %v1150
    %v1226 = vunpack.c.l.b16 %v1151
    %v1227 = vunpack.c.h.b16 %v1151
    %v1228 = vunpack.c.l.b16 %v1152
    %v1229 = vunpack.c.l.b16 %v1153
    %v1230 = vunpack.c.h.b16 %v1153
    %v1231 = vunpack.c.l.b16 %v1154
    %v1232 = vunpack.c.l.b16 %v1155
    %v1233 = vunpack.c.h.b16 %v1155
    %v1234 = vunpack.c.l.b16 %v1156
    %v1235 = vunpack.c.l.b16 %v1157
    %v1236 = vunpack.c.h.b16 %v1157
    %v1237 = vunpack.c.l.b16 %v1158
    %v1238 = vunpack.c.l.b16 %v1159
    %v1239 = vunpack.c.h.b16 %v1159
    %v1240 = vunpack.c.l.b16 %v1160
    %v1241 = vpack.c.b16 %v1196, %v1193
    %v1242 = vpack.c.b16 %v1197, %v1194
    %v1243 = vpack.c.b16 %v1198, %v1195
    %v1244 = vpack.c.b16 %v1202, %v1199
    %v1245 = vpack.c.b16 %v1203, %v1200
    %v1246 = vpack.c.b16 %v1204, %v1201
    %v1247 = vpack.c.b16 %v1208, %v1205
    %v1248 = vpack.c.b16 %v1209, %v1206
    %v1249 = vpack.c.b16 %v1210, %v1207
    %v1250 = vpack.c.b16 %v1214, %v1211
    %v1251 = vpack.c.b16 %v1215, %v1212
    %v1252 = vpack.c.b16 %v1216, %v1213
    %v1253 = vpack.c.b16 %v1220, %v1217
    %v1254 = vpack.c.b16 %v1221, %v1218
    %v1255 = vpack.c.b16 %v1222, %v1219
    %v1256 = vpack.c.b16 %v1226, %v1223
    %v1257 = vpack.c.b16 %v1227, %v1224
    %v1258 = vpack.c.b16 %v1228, %v1225
    %v1259 = vpack.c.b16 %v1232, %v1229
    %v1260 = vpack.c.b16 %v1233, %v1230
    %v1261 = vpack.c.b16 %v1234, %v1231
    %v1262 = vpack.c.b16 %v1238, %v1235
    %v1263 = vpack.c.b16 %v1239, %v1236
    %v1264 = vpack.c.b16 %v1240, %v1237
    %1289 = vmatprep.subr.bf16.mxu0 %v1242
    %1290 = vmatpush1.bf16.msra.mxu0 %v1241
    %1291 = vmatprep.subr.bf16.mxu0 %v1245
    %1292 = vmatpush1.bf16.msra.mxu0 %v1244
    %1293 = vmatprep.subr.bf16.mxu0 %v1248
    %1294 = vmatpush1.bf16.msra.mxu0 %v1247
    %1295 = vmatprep.subr.bf16.mxu0 %v1251
    %1296 = vmatpush1.bf16.msra.mxu0 %v1250
    %1297 = vmatprep.subr.bf16.mxu0 %v1254
    %1298 = vmatpush1.bf16.msra.mxu0 %v1253
    %1299 = vmatprep.subr.bf16.mxu0 %v1257
    %1300 = vmatpush1.bf16.msra.mxu0 %v1256
    %1301 = vmatprep.subr.bf16.mxu0 %v1260
    %1302 = vmatpush1.bf16.msra.mxu0 %v1259
    %1303 = vmatprep.subr.bf16.mxu0 %v1263
    %1304 = vmatpush1.bf16.msra.mxu0 %v1262
    %1305 = vmatprep.subr.bf16.mxu0 0
    %1306 = vmatpush1.bf16.msra.mxu0 0
    %1307 = vmatprep.subr.bf16.mxu0 0
    %1308 = vmatpush1.bf16.msra.mxu0 0
    %1309 = vmatprep.subr.bf16.mxu0 0
    %1310 = vmatpush1.bf16.msra.mxu0 0
    %1311 = vmatprep.subr.bf16.mxu0 0
    %1312 = vmatpush1.bf16.msra.mxu0 0
    %1313 = vmatprep.subr.bf16.mxu0 0
    %1314 = vmatpush1.bf16.msra.mxu0 0
    %1315 = vmatprep.subr.bf16.mxu0 0
    %1316 = vmatpush1.bf16.msra.mxu0 0
    %1317 = vmatprep.subr.bf16.mxu0 0
    %1318 = vmatpush1.bf16.msra.mxu0 0
    %1319 = vmatprep.subr.bf16.mxu0 0
    %1320 = vmatpush1.bf16.msra.mxu0 0
    %1321 = vmatprep.mubr.bf16.mxu0 0
    %1322 = vmatmul.mubr.bf16.gmra.mrb[0].mxu0 %v1124
    %v1323 = vpop.f32.mrb[0].mxu0
    %v1324 = vadd.f32 0.0, %v1323
    %v1325 = vpop.f32.mrb[0].mxu0
    %v1326 = vadd.f32 0.0, %v1325
    %v1327 = vpop.f32.mrb[0].mxu0
    %v1328 = vpop.f32.mrb[0].mxu0
    %1329 = vdwg.mxu0
    %1330 = vmatprep.subr.bf16.mxu0 0
    %1331 = vmatpush1.bf16.msra.mxu0 %v1243
    %1332 = vmatprep.subr.bf16.mxu0 0
    %1333 = vmatpush1.bf16.msra.mxu0 %v1246
    %1334 = vmatprep.subr.bf16.mxu0 0
    %1335 = vmatpush1.bf16.msra.mxu0 %v1249
    %1336 = vmatprep.subr.bf16.mxu0 0
    %1337 = vmatpush1.bf16.msra.mxu0 %v1252
    %1338 = vmatprep.subr.bf16.mxu0 0
    %1339 = vmatpush1.bf16.msra.mxu0 %v1255
    %1340 = vmatprep.subr.bf16.mxu0 0
    %1341 = vmatpush1.bf16.msra.mxu0 %v1258
    %1342 = vmatprep.subr.bf16.mxu0 0
    %1343 = vmatpush1.bf16.msra.mxu0 %v1261
    %1344 = vmatprep.subr.bf16.mxu0 0
    %1345 = vmatpush1.bf16.msra.mxu0 %v1264
    %1346 = vmatprep.subr.bf16.mxu0 0
    %1347 = vmatpush1.bf16.msra.mxu0 0
    %1348 = vmatprep.subr.bf16.mxu0 0
    %1349 = vmatpush1.bf16.msra.mxu0 0
    %1350 = vmatprep.subr.bf16.mxu0 0
    %1351 = vmatpush1.bf16.msra.mxu0 0
    %1352 = vmatprep.subr.bf16.mxu0 0
    %1353 = vmatpush1.bf16.msra.mxu0 0
    %1354 = vmatprep.subr.bf16.mxu0 0
    %1355 = vmatpush1.bf16.msra.mxu0 0
    %1356 = vmatprep.subr.bf16.mxu0 0
    %1357 = vmatpush1.bf16.msra.mxu0 0
    %1358 = vmatprep.subr.bf16.mxu0 0
    %1359 = vmatpush1.bf16.msra.mxu0 0
    %1360 = vmatprep.subr.bf16.mxu0 0
    %1361 = vmatpush1.bf16.msra.mxu0 0
    %1362 = vmatprep.mubr.bf16.mxu0 0
    %1363 = vmatmul.mubr.bf16.gmra.mrb[0].mxu0 %v1124
    %v1364 = vpop.f32.mrb[0].mxu0
    %v1365 = vadd.f32 0.0, %v1364
    %v1366 = vpop.f32.mrb[0].mxu0
    %v1367 = vpop.f32.mrb[0].mxu0
    %v1368 = vpop.f32.mrb[0].mxu0
    %1369 = vdwg.mxu0
    %v1370 = vadd.f32 %v1126, %v1324
    %v1371 = vadd.f32 %v1127, %v1326
    %v1372 = vxor.u32 %v1370, 2147483648
    %v1373 = vxor.u32 %v1371, 2147483648
    %v1374 = vmul.f32 %v1372, 1.442695
    %v1375 = vpow.pop %v1374
    %v1376 = vmul.f32 %v1373, 1.442695
    %v1377 = vpow.pop %v1376
    %v1378 = vadd.f32 %v1375, 1.0
    %v1379 = vadd.f32 %v1377, 1.0
    %v1380 = vrcp.pop %v1378
    %v1381 = vmul.f32 1.0, %v1380
    %v1382 = vrcp.pop %v1379
    %v1383 = vmul.f32 1.0, %v1382
    %v1384 = vadd.f32 %v1365, %v578
    %v1385 = vmul.f32 %v1381, %v1384
    %v1386 = vadd.f32 %v1128, %v1385
    %v1387 = vtanh.pop %v1386
    %v1388 = vsub.f32 %v1123, %v1387
    %v1389 = vmul.f32 %v1383, %v1388
    %v1390 = vadd.f32 %v1387, %v1389
    %v1391 = vpack.c.bf16 %v1390, %v1390
    %v1393 = vrot.slane %v1391, 4
    %1395 = vst [vmem:[#allocation3 + $0x8] sm:$0xf0] %v1393
    %v1396 = vld [vmem:[#allocation2 + $0x60] sm:$0xff]
    %v1397 = vld [vmem:[#allocation2 + $0x68] sm:$0xff]
    %v1398 = vld [vmem:[#allocation2 + $0x70] sm:$0xff]
    %v1399 = vld [vmem:[#allocation4] sm:$0xff]
    %v1400 = vld [vmem:[#allocation4 + $0x8] sm:$0xf]
    %v1401 = vld [vmem:[#allocation4 + $0xc] sm:$0xff]
    %v1402 = vld [vmem:[#allocation4 + $0x14] sm:$0xf]
    %v1403 = vld [vmem:[#allocation4 + $0x18] sm:$0xff]
    %v1404 = vld [vmem:[#allocation4 + $0x20] sm:$0xf]
    %v1405 = vld [vmem:[#allocation4 + $0x24] sm:$0xff]
    %v1406 = vld [vmem:[#allocation4 + $0x2c] sm:$0xf]
    %v1407 = vld [vmem:[#allocation4 + $0x30] sm:$0xff]
    %v1408 = vld [vmem:[#allocation4 + $0x38] sm:$0xf]
    %v1409 = vld [vmem:[#allocation4 + $0x3c] sm:$0xff]
    %v1410 = vld [vmem:[#allocation4 + $0x44] sm:$0xf]
    %v1411 = vld [vmem:[#allocation4 + $0x48] sm:$0xff]
    %v1412 = vld [vmem:[#allocation4 + $0x50] sm:$0xf]
    %v1413 = vld [vmem:[#allocation4 + $0x54] sm:$0xff]
    %v1414 = vld [vmem:[#allocation4 + $0x5c] sm:$0xf]
    %v1415 = vld [vmem:[#allocation4 + $0x60] sm:$0xff]
    %v1416 = vld [vmem:[#allocation4 + $0x68] sm:$0xf]
    %v1417 = vld [vmem:[#allocation4 + $0x6c] sm:$0xff]
    %v1418 = vld [vmem:[#allocation4 + $0x74] sm:$0xf]
    %v1419 = vld [vmem:[#allocation4 + $0x78] sm:$0xff]
    %v1420 = vld [vmem:[#allocation4 + $0x80] sm:$0xf]
    %v1421 = vld [vmem:[#allocation4 + $0x84] sm:$0xff]
    %v1422 = vld [vmem:[#allocation4 + $0x8c] sm:$0xf]
    %v1423 = vld [vmem:[#allocation4 + $0x90] sm:$0xff]
    %v1424 = vld [vmem:[#allocation4 + $0x98] sm:$0xf]
    %v1425 = vld [vmem:[#allocation4 + $0x9c] sm:$0xff]
    %v1426 = vld [vmem:[#allocation4 + $0xa4] sm:$0xf]
    %v1427 = vld [vmem:[#allocation4 + $0xa8] sm:$0xff]
    %v1428 = vld [vmem:[#allocation4 + $0xb0] sm:$0xf]
    %v1429 = vld [vmem:[#allocation4 + $0xb4] sm:$0xff]
    %v1430 = vld [vmem:[#allocation4 + $0xbc] sm:$0xf]
    %v1463 = vunpack.c.l.b16 %v1399
    %v1464 = vunpack.c.h.b16 %v1399
    %v1465 = vunpack.c.l.b16 %v1400
    %v1466 = vunpack.c.l.b16 %v1401
    %v1467 = vunpack.c.h.b16 %v1401
    %v1468 = vunpack.c.l.b16 %v1402
    %v1469 = vunpack.c.l.b16 %v1403
    %v1470 = vunpack.c.h.b16 %v1403
    %v1471 = vunpack.c.l.b16 %v1404
    %v1472 = vunpack.c.l.b16 %v1405
    %v1473 = vunpack.c.h.b16 %v1405
    %v1474 = vunpack.c.l.b16 %v1406
    %v1475 = vunpack.c.l.b16 %v1407
    %v1476 = vunpack.c.h.b16 %v1407
    %v1477 = vunpack.c.l.b16 %v1408
    %v1478 = vunpack.c.l.b16 %v1409
    %v1479 = vunpack.c.h.b16 %v1409
    %v1480 = vunpack.c.l.b16 %v1410
    %v1481 = vunpack.c.l.b16 %v1411
    %v1482 = vunpack.c.h.b16 %v1411
    %v1483 = vunpack.c.l.b16 %v1412
    %v1484 = vunpack.c.l.b16 %v1413
    %v1485 = vunpack.c.h.b16 %v1413
    %v1486 = vunpack.c.l.b16 %v1414
    %v1487 = vunpack.c.l.b16 %v1415
    %v1488 = vunpack.c.h.b16 %v1415
    %v1489 = vunpack.c.l.b16 %v1416
    %v1490 = vunpack.c.l.b16 %v1417
    %v1491 = vunpack.c.h.b16 %v1417
    %v1492 = vunpack.c.l.b16 %v1418
    %v1493 = vunpack.c.l.b16 %v1419
    %v1494 = vunpack.c.h.b16 %v1419
    %v1495 = vunpack.c.l.b16 %v1420
    %v1496 = vunpack.c.l.b16 %v1421
    %v1497 = vunpack.c.h.b16 %v1421
    %v1498 = vunpack.c.l.b16 %v1422
    %v1499 = vunpack.c.l.b16 %v1423
    %v1500 = vunpack.c.h.b16 %v1423
    %v1501 = vunpack.c.l.b16 %v1424
    %v1502 = vunpack.c.l.b16 %v1425
    %v1503 = vunpack.c.h.b16 %v1425
    %v1504 = vunpack.c.l.b16 %v1426
    %v1505 = vunpack.c.l.b16 %v1427
    %v1506 = vunpack.c.h.b16 %v1427
    %v1507 = vunpack.c.l.b16 %v1428
    %v1508 = vunpack.c.l.b16 %v1429
    %v1509 = vunpack.c.h.b16 %v1429
    %v1510 = vunpack.c.l.b16 %v1430
    %v1511 = vpack.c.b16 %v1466, %v1463
    %v1512 = vpack.c.b16 %v1467, %v1464
    %v1513 = vpack.c.b16 %v1468, %v1465
    %v1514 = vpack.c.b16 %v1472, %v1469
    %v1515 = vpack.c.b16 %v1473, %v1470
    %v1516 = vpack.c.b16 %v1474, %v1471
    %v1517 = vpack.c.b16 %v1478, %v1475
    %v1518 = vpack.c.b16 %v1479, %v1476
    %v1519 = vpack.c.b16 %v1480, %v1477
    %v1520 = vpack.c.b16 %v1484, %v1481
    %v1521 = vpack.c.b16 %v1485, %v1482
    %v1522 = vpack.c.b16 %v1486, %v1483
    %v1523 = vpack.c.b16 %v1490, %v1487
    %v1524 = vpack.c.b16 %v1491, %v1488
    %v1525 = vpack.c.b16 %v1492, %v1489
    %v1526 = vpack.c.b16 %v1496, %v1493
    %v1527 = vpack.c.b16 %v1497, %v1494
    %v1528 = vpack.c.b16 %v1498, %v1495
    %v1529 = vpack.c.b16 %v1502, %v1499
    %v1530 = vpack.c.b16 %v1503, %v1500
    %v1531 = vpack.c.b16 %v1504, %v1501
    %v1532 = vpack.c.b16 %v1508, %v1505
    %v1533 = vpack.c.b16 %v1509, %v1506
    %v1534 = vpack.c.b16 %v1510, %v1507
    %1559 = vmatprep.subr.bf16.mxu0 %v1512
    %1560 = vmatpush1.bf16.msra.mxu0 %v1511
    %1561 = vmatprep.subr.bf16.mxu0 %v1515
    %1562 = vmatpush1.bf16.msra.mxu0 %v1514
    %1563 = vmatprep.subr.bf16.mxu0 %v1518
    %1564 = vmatpush1.bf16.msra.mxu0 %v1517
    %1565 = vmatprep.subr.bf16.mxu0 %v1521
    %1566 = vmatpush1.bf16.msra.mxu0 %v1520
    %1567 = vmatprep.subr.bf16.mxu0 %v1524
    %1568 = vmatpush1.bf16.msra.mxu0 %v1523
    %1569 = vmatprep.subr.bf16.mxu0 %v1527
    %1570 = vmatpush1.bf16.msra.mxu0 %v1526
    %1571 = vmatprep.subr.bf16.mxu0 %v1530
    %1572 = vmatpush1.bf16.msra.mxu0 %v1529
    %1573 = vmatprep.subr.bf16.mxu0 %v1533
    %1574 = vmatpush1.bf16.msra.mxu0 %v1532
    %1575 = vmatprep.subr.bf16.mxu0 0
    %1576 = vmatpush1.bf16.msra.mxu0 0
    %1577 = vmatprep.subr.bf16.mxu0 0
    %1578 = vmatpush1.bf16.msra.mxu0 0
    %1579 = vmatprep.subr.bf16.mxu0 0
    %1580 = vmatpush1.bf16.msra.mxu0 0
    %1581 = vmatprep.subr.bf16.mxu0 0
    %1582 = vmatpush1.bf16.msra.mxu0 0
    %1583 = vmatprep.subr.bf16.mxu0 0
    %1584 = vmatpush1.bf16.msra.mxu0 0
    %1585 = vmatprep.subr.bf16.mxu0 0
    %1586 = vmatpush1.bf16.msra.mxu0 0
    %1587 = vmatprep.subr.bf16.mxu0 0
    %1588 = vmatpush1.bf16.msra.mxu0 0
    %1589 = vmatprep.subr.bf16.mxu0 0
    %1590 = vmatpush1.bf16.msra.mxu0 0
    %1591 = vmatprep.mubr.bf16.mxu0 0
    %1592 = vmatmul.mubr.bf16.gmra.mrb[0].mxu0 %v1391
    %v1593 = vpop.f32.mrb[0].mxu0
    %v1594 = vadd.f32 0.0, %v1593
    %v1595 = vpop.f32.mrb[0].mxu0
    %v1596 = vadd.f32 0.0, %v1595
    %v1597 = vpop.f32.mrb[0].mxu0
    %v1598 = vpop.f32.mrb[0].mxu0
    %1599 = vdwg.mxu0
    %1600 = vmatprep.subr.bf16.mxu0 0
    %1601 = vmatpush1.bf16.msra.mxu0 %v1513
    %1602 = vmatprep.subr.bf16.mxu0 0
    %1603 = vmatpush1.bf16.msra.mxu0 %v1516
    %1604 = vmatprep.subr.bf16.mxu0 0
    %1605 = vmatpush1.bf16.msra.mxu0 %v1519
    %1606 = vmatprep.subr.bf16.mxu0 0
    %1607 = vmatpush1.bf16.msra.mxu0 %v1522
    %1608 = vmatprep.subr.bf16.mxu0 0
    %1609 = vmatpush1.bf16.msra.mxu0 %v1525
    %1610 = vmatprep.subr.bf16.mxu0 0
    %1611 = vmatpush1.bf16.msra.mxu0 %v1528
    %1612 = vmatprep.subr.bf16.mxu0 0
    %1613 = vmatpush1.bf16.msra.mxu0 %v1531
    %1614 = vmatprep.subr.bf16.mxu0 0
    %1615 = vmatpush1.bf16.msra.mxu0 %v1534
    %1616 = vmatprep.subr.bf16.mxu0 0
    %1617 = vmatpush1.bf16.msra.mxu0 0
    %1618 = vmatprep.subr.bf16.mxu0 0
    %1619 = vmatpush1.bf16.msra.mxu0 0
    %1620 = vmatprep.subr.bf16.mxu0 0
    %1621 = vmatpush1.bf16.msra.mxu0 0
    %1622 = vmatprep.subr.bf16.mxu0 0
    %1623 = vmatpush1.bf16.msra.mxu0 0
    %1624 = vmatprep.subr.bf16.mxu0 0
    %1625 = vmatpush1.bf16.msra.mxu0 0
    %1626 = vmatprep.subr.bf16.mxu0 0
    %1627 = vmatpush1.bf16.msra.mxu0 0
    %1628 = vmatprep.subr.bf16.mxu0 0
    %1629 = vmatpush1.bf16.msra.mxu0 0
    %1630 = vmatprep.subr.bf16.mxu0 0
    %1631 = vmatpush1.bf16.msra.mxu0 0
    %1632 = vmatprep.mubr.bf16.mxu0 0
    %1633 = vmatmul.mubr.bf16.gmra.mrb[0].mxu0 %v1391
    %v1634 = vpop.f32.mrb[0].mxu0
    %v1635 = vadd.f32 0.0, %v1634
    %v1636 = vpop.f32.mrb[0].mxu0
    %v1637 = vpop.f32.mrb[0].mxu0
    %v1638 = vpop.f32.mrb[0].mxu0
    %1639 = vdwg.mxu0
    %v1640 = vadd.f32 %v1396, %v1594
    %v1641 = vadd.f32 %v1397, %v1596
    %v1642 = vxor.u32 %v1640, 2147483648
    %v1643 = vxor.u32 %v1641, 2147483648
    %v1644 = vmul.f32 %v1642, 1.442695
    %v1645 = vpow.pop %v1644
    %v1646 = vmul.f32 %v1643, 1.442695
    %v1647 = vpow.pop %v1646
    %v1648 = vadd.f32 %v1645, 1.0
    %v1649 = vadd.f32 %v1647, 1.0
    %v1650 = vrcp.pop %v1648
    %v1651 = vmul.f32 1.0, %v1650
    %v1652 = vrcp.pop %v1649
    %v1653 = vmul.f32 1.0, %v1652
    %v1654 = vadd.f32 %v1635, %v578
    %v1655 = vmul.f32 %v1651, %v1654
    %v1656 = vadd.f32 %v1398, %v1655
    %v1657 = vtanh.pop %v1656
    %v1658 = vsub.f32 %v1390, %v1657
    %v1659 = vmul.f32 %v1653, %v1658
    %v1660 = vadd.f32 %v1657, %v1659
    %v1661 = vpack.c.bf16 %v1660, %v1660
    %1662 = vst [vmem:[#allocation3 + $0x10] sm:$0xf] %v1661
    %v1663 = vld [vmem:[#allocation2 + $0x78] sm:$0xff]
    %v1664 = vld [vmem:[#allocation2 + $0x80] sm:$0xff]
    %v1665 = vld [vmem:[#allocation2 + $0x88] sm:$0xff]
    %v1666 = vld [vmem:[#allocation4] sm:$0xff]
    %v1667 = vld [vmem:[#allocation4 + $0x8] sm:$0xf]
    %v1668 = vld [vmem:[#allocation4 + $0xc] sm:$0xff]
    %v1669 = vld [vmem:[#allocation4 + $0x14] sm:$0xf]
    %v1670 = vld [vmem:[#allocation4 + $0x18] sm:$0xff]
    %v1671 = vld [vmem:[#allocation4 + $0x20] sm:$0xf]
    %v1672 = vld [vmem:[#allocation4 + $0x24] sm:$0xff]
    %v1673 = vld [vmem:[#allocation4 + $0x2c] sm:$0xf]
    %v1674 = vld [vmem:[#allocation4 + $0x30] sm:$0xff]
    %v1675 = vld [vmem:[#allocation4 + $0x38] sm:$0xf]
    %v1676 = vld [vmem:[#allocation4 + $0x3c] sm:$0xff]
    %v1677 = vld [vmem:[#allocation4 + $0x44] sm:$0xf]
    %v1678 = vld [vmem:[#allocation4 + $0x48] sm:$0xff]
    %v1679 = vld [vmem:[#allocation4 + $0x50] sm:$0xf]
    %v1680 = vld [vmem:[#allocation4 + $0x54] sm:$0xff]
    %v1681 = vld [vmem:[#allocation4 + $0x5c] sm:$0xf]
    %v1682 = vld [vmem:[#allocation4 + $0x60] sm:$0xff]
    %v1683 = vld [vmem:[#allocation4 + $0x68] sm:$0xf]
    %v1684 = vld [vmem:[#allocation4 + $0x6c] sm:$0xff]
    %v1685 = vld [vmem:[#allocation4 + $0x74] sm:$0xf]
    %v1686 = vld [vmem:[#allocation4 + $0x78] sm:$0xff]
    %v1687 = vld [vmem:[#allocation4 + $0x80] sm:$0xf]
    %v1688 = vld [vmem:[#allocation4 + $0x84] sm:$0xff]
    %v1689 = vld [vmem:[#allocation4 + $0x8c] sm:$0xf]
    %v1690 = vld [vmem:[#allocation4 + $0x90] sm:$0xff]
    %v1691 = vld [vmem:[#allocation4 + $0x98] sm:$0xf]
    %v1692 = vld [vmem:[#allocation4 + $0x9c] sm:$0xff]
    %v1693 = vld [vmem:[#allocation4 + $0xa4] sm:$0xf]
    %v1694 = vld [vmem:[#allocation4 + $0xa8] sm:$0xff]
    %v1695 = vld [vmem:[#allocation4 + $0xb0] sm:$0xf]
    %v1696 = vld [vmem:[#allocation4 + $0xb4] sm:$0xff]
    %v1697 = vld [vmem:[#allocation4 + $0xbc] sm:$0xf]
    %v1730 = vunpack.c.l.b16 %v1666
    %v1731 = vunpack.c.h.b16 %v1666
    %v1732 = vunpack.c.l.b16 %v1667
    %v1733 = vunpack.c.l.b16 %v1668
    %v1734 = vunpack.c.h.b16 %v1668
    %v1735 = vunpack.c.l.b16 %v1669
    %v1736 = vunpack.c.l.b16 %v1670
    %v1737 = vunpack.c.h.b16 %v1670
    %v1738 = vunpack.c.l.b16 %v1671
    %v1739 = vunpack.c.l.b16 %v1672
    %v1740 = vunpack.c.h.b16 %v1672
    %v1741 = vunpack.c.l.b16 %v1673
    %v1742 = vunpack.c.l.b16 %v1674
    %v1743 = vunpack.c.h.b16 %v1674
    %v1744 = vunpack.c.l.b16 %v1675
    %v1745 = vunpack.c.l.b16 %v1676
    %v1746 = vunpack.c.h.b16 %v1676
    %v1747 = vunpack.c.l.b16 %v1677
    %v1748 = vunpack.c.l.b16 %v1678
    %v1749 = vunpack.c.h.b16 %v1678
    %v1750 = vunpack.c.l.b16 %v1679
    %v1751 = vunpack.c.l.b16 %v1680
    %v1752 = vunpack.c.h.b16 %v1680
    %v1753 = vunpack.c.l.b16 %v1681
    %v1754 = vunpack.c.l.b16 %v1682
    %v1755 = vunpack.c.h.b16 %v1682
    %v1756 = vunpack.c.l.b16 %v1683
    %v1757 = vunpack.c.l.b16 %v1684
    %v1758 = vunpack.c.h.b16 %v1684
    %v1759 = vunpack.c.l.b16 %v1685
    %v1760 = vunpack.c.l.b16 %v1686
    %v1761 = vunpack.c.h.b16 %v1686
    %v1762 = vunpack.c.l.b16 %v1687
    %v1763 = vunpack.c.l.b16 %v1688
    %v1764 = vunpack.c.h.b16 %v1688
    %v1765 = vunpack.c.l.b16 %v1689
    %v1766 = vunpack.c.l.b16 %v1690
    %v1767 = vunpack.c.h.b16 %v1690
    %v1768 = vunpack.c.l.b16 %v1691
    %v1769 = vunpack.c.l.b16 %v1692
    %v1770 = vunpack.c.h.b16 %v1692
    %v1771 = vunpack.c.l.b16 %v1693
    %v1772 = vunpack.c.l.b16 %v1694
    %v1773 = vunpack.c.h.b16 %v1694
    %v1774 = vunpack.c.l.b16 %v1695
    %v1775 = vunpack.c.l.b16 %v1696
    %v1776 = vunpack.c.h.b16 %v1696
    %v1777 = vunpack.c.l.b16 %v1697
    %v1778 = vpack.c.b16 %v1733, %v1730
    %v1779 = vpack.c.b16 %v1734, %v1731
    %v1780 = vpack.c.b16 %v1735, %v1732
    %v1781 = vpack.c.b16 %v1739, %v1736
    %v1782 = vpack.c.b16 %v1740, %v1737
    %v1783 = vpack.c.b16 %v1741, %v1738
    %v1784 = vpack.c.b16 %v1745, %v1742
    %v1785 = vpack.c.b16 %v1746, %v1743
    %v1786 = vpack.c.b16 %v1747, %v1744
    %v1787 = vpack.c.b16 %v1751, %v1748
    %v1788 = vpack.c.b16 %v1752, %v1749
    %v1789 = vpack.c.b16 %v1753, %v1750
    %v1790 = vpack.c.b16 %v1757, %v1754
    %v1791 = vpack.c.b16 %v1758, %v1755
    %v1792 = vpack.c.b16 %v1759, %v1756
    %v1793 = vpack.c.b16 %v1763, %v1760
    %v1794 = vpack.c.b16 %v1764, %v1761
    %v1795 = vpack.c.b16 %v1765, %v1762
    %v1796 = vpack.c.b16 %v1769, %v1766
    %v1797 = vpack.c.b16 %v1770, %v1767
    %v1798 = vpack.c.b16 %v1771, %v1768
    %v1799 = vpack.c.b16 %v1775, %v1772
    %v1800 = vpack.c.b16 %v1776, %v1773
    %v1801 = vpack.c.b16 %v1777, %v1774
    %1826 = vmatprep.subr.bf16.mxu0 %v1779
    %1827 = vmatpush1.bf16.msra.mxu0 %v1778
    %1828 = vmatprep.subr.bf16.mxu0 %v1782
    %1829 = vmatpush1.bf16.msra.mxu0 %v1781
    %1830 = vmatprep.subr.bf16.mxu0 %v1785
    %1831 = vmatpush1.bf16.msra.mxu0 %v1784
    %1832 = vmatprep.subr.bf16.mxu0 %v1788
    %1833 = vmatpush1.bf16.msra.mxu0 %v1787
    %1834 = vmatprep.subr.bf16.mxu0 %v1791
    %1835 = vmatpush1.bf16.msra.mxu0 %v1790
    %1836 = vmatprep.subr.bf16.mxu0 %v1794
    %1837 = vmatpush1.bf16.msra.mxu0 %v1793
    %1838 = vmatprep.subr.bf16.mxu0 %v1797
    %1839 = vmatpush1.bf16.msra.mxu0 %v1796
    %1840 = vmatprep.subr.bf16.mxu0 %v1800
    %1841 = vmatpush1.bf16.msra.mxu0 %v1799
    %1842 = vmatprep.subr.bf16.mxu0 0
    %1843 = vmatpush1.bf16.msra.mxu0 0
    %1844 = vmatprep.subr.bf16.mxu0 0
    %1845 = vmatpush1.bf16.msra.mxu0 0
    %1846 = vmatprep.subr.bf16.mxu0 0
    %1847 = vmatpush1.bf16.msra.mxu0 0
    %1848 = vmatprep.subr.bf16.mxu0 0
    %1849 = vmatpush1.bf16.msra.mxu0 0
    %1850 = vmatprep.subr.bf16.mxu0 0
    %1851 = vmatpush1.bf16.msra.mxu0 0
    %1852 = vmatprep.subr.bf16.mxu0 0
    %1853 = vmatpush1.bf16.msra.mxu0 0
    %1854 = vmatprep.subr.bf16.mxu0 0
    %1855 = vmatpush1.bf16.msra.mxu0 0
    %1856 = vmatprep.subr.bf16.mxu0 0
    %1857 = vmatpush1.bf16.msra.mxu0 0
    %1858 = vmatprep.mubr.bf16.mxu0 0
    %1859 = vmatmul.mubr.bf16.gmra.mrb[0].mxu0 %v1661
    %v1860 = vpop.f32.mrb[0].mxu0
    %v1861 = vadd.f32 0.0, %v1860
    %v1862 = vpop.f32.mrb[0].mxu0
    %v1863 = vadd.f32 0.0, %v1862
    %v1864 = vpop.f32.mrb[0].mxu0
    %v1865 = vpop.f32.mrb[0].mxu0
    %1866 = vdwg.mxu0
    %1867 = vmatprep.subr.bf16.mxu0 0
    %1868 = vmatpush1.bf16.msra.mxu0 %v1780
    %1869 = vmatprep.subr.bf16.mxu0 0
    %1870 = vmatpush1.bf16.msra.mxu0 %v1783
    %1871 = vmatprep.subr.bf16.mxu0 0
    %1872 = vmatpush1.bf16.msra.mxu0 %v1786
    %1873 = vmatprep.subr.bf16.mxu0 0
    %1874 = vmatpush1.bf16.msra.mxu0 %v1789
    %1875 = vmatprep.subr.bf16.mxu0 0
    %1876 = vmatpush1.bf16.msra.mxu0 %v1792
    %1877 = vmatprep.subr.bf16.mxu0 0
    %1878 = vmatpush1.bf16.msra.mxu0 %v1795
    %1879 = vmatprep.subr.bf16.mxu0 0
    %1880 = vmatpush1.bf16.msra.mxu0 %v1798
    %1881 = vmatprep.subr.bf16.mxu0 0
    %1882 = vmatpush1.bf16.msra.mxu0 %v1801
    %1883 = vmatprep.subr.bf16.mxu0 0
    %1884 = vmatpush1.bf16.msra.mxu0 0
    %1885 = vmatprep.subr.bf16.mxu0 0
    %1886 = vmatpush1.bf16.msra.mxu0 0
    %1887 = vmatprep.subr.bf16.mxu0 0
    %1888 = vmatpush1.bf16.msra.mxu0 0
    %1889 = vmatprep.subr.bf16.mxu0 0
    %1890 = vmatpush1.bf16.msra.mxu0 0
    %1891 = vmatprep.subr.bf16.mxu0 0
    %1892 = vmatpush1.bf16.msra.mxu0 0
    %1893 = vmatprep.subr.bf16.mxu0 0
    %1894 = vmatpush1.bf16.msra.mxu0 0
    %1895 = vmatprep.subr.bf16.mxu0 0
    %1896 = vmatpush1.bf16.msra.mxu0 0
    %1897 = vmatprep.subr.bf16.mxu0 0
    %1898 = vmatpush1.bf16.msra.mxu0 0
    %1899 = vmatprep.mubr.bf16.mxu0 0
    %1900 = vmatmul.mubr.bf16.gmra.mrb[0].mxu0 %v1661
    %v1901 = vpop.f32.mrb[0].mxu0
    %v1902 = vadd.f32 0.0, %v1901
    %v1903 = vpop.f32.mrb[0].mxu0
    %v1904 = vpop.f32.mrb[0].mxu0
    %v1905 = vpop.f32.mrb[0].mxu0
    %1906 = vdwg.mxu0
    %v1907 = vadd.f32 %v1663, %v1861
    %v1908 = vadd.f32 %v1664, %v1863
    %v1909 = vxor.u32 %v1907, 2147483648
    %v1910 = vxor.u32 %v1908, 2147483648
    %v1911 = vmul.f32 %v1909, 1.442695
    %v1912 = vpow.pop %v1911
    %v1913 = vmul.f32 %v1910, 1.442695
    %v1914 = vpow.pop %v1913
    %v1915 = vadd.f32 %v1912, 1.0
    %v1916 = vadd.f32 %v1914, 1.0
    %v1917 = vrcp.pop %v1915
    %v1918 = vmul.f32 1.0, %v1917
    %v1919 = vrcp.pop %v1916
    %v1920 = vmul.f32 1.0, %v1919
    %v1921 = vadd.f32 %v1902, %v578
    %v1922 = vmul.f32 %v1918, %v1921
    %v1923 = vadd.f32 %v1665, %v1922
    %v1924 = vtanh.pop %v1923
    %v1925 = vsub.f32 %v1660, %v1924
    %v1926 = vmul.f32 %v1920, %v1925
    %v1927 = vadd.f32 %v1924, %v1926
    %v1928 = vpack.c.bf16 %v1927, %v1927
    %v1930 = vrot.slane %v1928, 4
    %1932 = vst [vmem:[#allocation3 + $0x10] sm:$0xf0] %v1930
    %v1933 = vld [vmem:[#allocation2 + $0x90] sm:$0xff]
    %v1934 = vld [vmem:[#allocation2 + $0x98] sm:$0xff]
    %v1935 = vld [vmem:[#allocation2 + $0xa0] sm:$0xff]
    %v1936 = vld [vmem:[#allocation4] sm:$0xff]
    %v1937 = vld [vmem:[#allocation4 + $0x8] sm:$0xf]
    %v1938 = vld [vmem:[#allocation4 + $0xc] sm:$0xff]
    %v1939 = vld [vmem:[#allocation4 + $0x14] sm:$0xf]
    %v1940 = vld [vmem:[#allocation4 + $0x18] sm:$0xff]
    %v1941 = vld [vmem:[#allocation4 + $0x20] sm:$0xf]
    %v1942 = vld [vmem:[#allocation4 + $0x24] sm:$0xff]
    %v1943 = vld [vmem:[#allocation4 + $0x2c] sm:$0xf]
    %v1944 = vld [vmem:[#allocation4 + $0x30] sm:$0xff]
    %v1945 = vld [vmem:[#allocation4 + $0x38] sm:$0xf]
    %v1946 = vld [vmem:[#allocation4 + $0x3c] sm:$0xff]
    %v1947 = vld [vmem:[#allocation4 + $0x44] sm:$0xf]
    %v1948 = vld [vmem:[#allocation4 + $0x48] sm:$0xff]
    %v1949 = vld [vmem:[#allocation4 + $0x50] sm:$0xf]
    %v1950 = vld [vmem:[#allocation4 + $0x54] sm:$0xff]
    %v1951 = vld [vmem:[#allocation4 + $0x5c] sm:$0xf]
    %v1952 = vld [vmem:[#allocation4 + $0x60] sm:$0xff]
    %v1953 = vld [vmem:[#allocation4 + $0x68] sm:$0xf]
    %v1954 = vld [vmem:[#allocation4 + $0x6c] sm:$0xff]
    %v1955 = vld [vmem:[#allocation4 + $0x74] sm:$0xf]
    %v1956 = vld [vmem:[#allocation4 + $0x78] sm:$0xff]
    %v1957 = vld [vmem:[#allocation4 + $0x80] sm:$0xf]
    %v1958 = vld [vmem:[#allocation4 + $0x84] sm:$0xff]
    %v1959 = vld [vmem:[#allocation4 + $0x8c] sm:$0xf]
    %v1960 = vld [vmem:[#allocation4 + $0x90] sm:$0xff]
    %v1961 = vld [vmem:[#allocation4 + $0x98] sm:$0xf]
    %v1962 = vld [vmem:[#allocation4 + $0x9c] sm:$0xff]
    %v1963 = vld [vmem:[#allocation4 + $0xa4] sm:$0xf]
    %v1964 = vld [vmem:[#allocation4 + $0xa8] sm:$0xff]
    %v1965 = vld [vmem:[#allocation4 + $0xb0] sm:$0xf]
    %v1966 = vld [vmem:[#allocation4 + $0xb4] sm:$0xff]
    %v1967 = vld [vmem:[#allocation4 + $0xbc] sm:$0xf]
    %v2000 = vunpack.c.l.b16 %v1936
    %v2001 = vunpack.c.h.b16 %v1936
    %v2002 = vunpack.c.l.b16 %v1937
    %v2003 = vunpack.c.l.b16 %v1938
    %v2004 = vunpack.c.h.b16 %v1938
    %v2005 = vunpack.c.l.b16 %v1939
    %v2006 = vunpack.c.l.b16 %v1940
    %v2007 = vunpack.c.h.b16 %v1940
    %v2008 = vunpack.c.l.b16 %v1941
    %v2009 = vunpack.c.l.b16 %v1942
    %v2010 = vunpack.c.h.b16 %v1942
    %v2011 = vunpack.c.l.b16 %v1943
    %v2012 = vunpack.c.l.b16 %v1944
    %v2013 = vunpack.c.h.b16 %v1944
    %v2014 = vunpack.c.l.b16 %v1945
    %v2015 = vunpack.c.l.b16 %v1946
    %v2016 = vunpack.c.h.b16 %v1946
    %v2017 = vunpack.c.l.b16 %v1947
    %v2018 = vunpack.c.l.b16 %v1948
    %v2019 = vunpack.c.h.b16 %v1948
    %v2020 = vunpack.c.l.b16 %v1949
    %v2021 = vunpack.c.l.b16 %v1950
    %v2022 = vunpack.c.h.b16 %v1950
    %v2023 = vunpack.c.l.b16 %v1951
    %v2024 = vunpack.c.l.b16 %v1952
    %v2025 = vunpack.c.h.b16 %v1952
    %v2026 = vunpack.c.l.b16 %v1953
    %v2027 = vunpack.c.l.b16 %v1954
    %v2028 = vunpack.c.h.b16 %v1954
    %v2029 = vunpack.c.l.b16 %v1955
    %v2030 = vunpack.c.l.b16 %v1956
    %v2031 = vunpack.c.h.b16 %v1956
    %v2032 = vunpack.c.l.b16 %v1957
    %v2033 = vunpack.c.l.b16 %v1958
    %v2034 = vunpack.c.h.b16 %v1958
    %v2035 = vunpack.c.l.b16 %v1959
    %v2036 = vunpack.c.l.b16 %v1960
    %v2037 = vunpack.c.h.b16 %v1960
    %v2038 = vunpack.c.l.b16 %v1961
    %v2039 = vunpack.c.l.b16 %v1962
    %v2040 = vunpack.c.h.b16 %v1962
    %v2041 = vunpack.c.l.b16 %v1963
    %v2042 = vunpack.c.l.b16 %v1964
    %v2043 = vunpack.c.h.b16 %v1964
    %v2044 = vunpack.c.l.b16 %v1965
    %v2045 = vunpack.c.l.b16 %v1966
    %v2046 = vunpack.c.h.b16 %v1966
    %v2047 = vunpack.c.l.b16 %v1967
    %v2048 = vpack.c.b16 %v2003, %v2000
    %v2049 = vpack.c.b16 %v2004, %v2001
    %v2050 = vpack.c.b16 %v2005, %v2002
    %v2051 = vpack.c.b16 %v2009, %v2006
    %v2052 = vpack.c.b16 %v2010, %v2007
    %v2053 = vpack.c.b16 %v2011, %v2008
    %v2054 = vpack.c.b16 %v2015, %v2012
    %v2055 = vpack.c.b16 %v2016, %v2013
    %v2056 = vpack.c.b16 %v2017, %v2014
    %v2057 = vpack.c.b16 %v2021, %v2018
    %v2058 = vpack.c.b16 %v2022, %v2019
    %v2059 = vpack.c.b16 %v2023, %v2020
    %v2060 = vpack.c.b16 %v2027, %v2024
    %v2061 = vpack.c.b16 %v2028, %v2025
    %v2062 = vpack.c.b16 %v2029, %v2026
    %v2063 = vpack.c.b16 %v2033, %v2030
    %v2064 = vpack.c.b16 %v2034, %v2031
    %v2065 = vpack.c.b16 %v2035, %v2032
    %v2066 = vpack.c.b16 %v2039, %v2036
    %v2067 = vpack.c.b16 %v2040, %v2037
    %v2068 = vpack.c.b16 %v2041, %v2038
    %v2069 = vpack.c.b16 %v2045, %v2042
    %v2070 = vpack.c.b16 %v2046, %v2043
    %v2071 = vpack.c.b16 %v2047, %v2044
    %2096 = vmatprep.subr.bf16.mxu0 %v2049
    %2097 = vmatpush1.bf16.msra.mxu0 %v2048
    %2098 = vmatprep.subr.bf16.mxu0 %v2052
    %2099 = vmatpush1.bf16.msra.mxu0 %v2051
    %2100 = vmatprep.subr.bf16.mxu0 %v2055
    %2101 = vmatpush1.bf16.msra.mxu0 %v2054
    %2102 = vmatprep.subr.bf16.mxu0 %v2058
    %2103 = vmatpush1.bf16.msra.mxu0 %v2057
    %2104 = vmatprep.subr.bf16.mxu0 %v2061
    %2105 = vmatpush1.bf16.msra.mxu0 %v2060
    %2106 = vmatprep.subr.bf16.mxu0 %v2064
    %2107 = vmatpush1.bf16.msra.mxu0 %v2063
    %2108 = vmatprep.subr.bf16.mxu0 %v2067
    %2109 = vmatpush1.bf16.msra.mxu0 %v2066
    %2110 = vmatprep.subr.bf16.mxu0 %v2070
    %2111 = vmatpush1.bf16.msra.mxu0 %v2069
    %2112 = vmatprep.subr.bf16.mxu0 0
    %2113 = vmatpush1.bf16.msra.mxu0 0
    %2114 = vmatprep.subr.bf16.mxu0 0
    %2115 = vmatpush1.bf16.msra.mxu0 0
    %2116 = vmatprep.subr.bf16.mxu0 0
    %2117 = vmatpush1.bf16.msra.mxu0 0
    %2118 = vmatprep.subr.bf16.mxu0 0
    %2119 = vmatpush1.bf16.msra.mxu0 0
    %2120 = vmatprep.subr.bf16.mxu0 0
    %2121 = vmatpush1.bf16.msra.mxu0 0
    %2122 = vmatprep.subr.bf16.mxu0 0
    %2123 = vmatpush1.bf16.msra.mxu0 0
    %2124 = vmatprep.subr.bf16.mxu0 0
    %2125 = vmatpush1.bf16.msra.mxu0 0
    %2126 = vmatprep.subr.bf16.mxu0 0
    %2127 = vmatpush1.bf16.msra.mxu0 0
    %2128 = vmatprep.mubr.bf16.mxu0 0
    %2129 = vmatmul.mubr.bf16.gmra.mrb[0].mxu0 %v1928
    %v2130 = vpop.f32.mrb[0].mxu0
    %v2131 = vadd.f32 0.0, %v2130
    %v2132 = vpop.f32.mrb[0].mxu0
    %v2133 = vadd.f32 0.0, %v2132
    %v2134 = vpop.f32.mrb[0].mxu0
    %v2135 = vpop.f32.mrb[0].mxu0
    %2136 = vdwg.mxu0
    %2137 = vmatprep.subr.bf16.mxu0 0
    %2138 = vmatpush1.bf16.msra.mxu0 %v2050
    %2139 = vmatprep.subr.bf16.mxu0 0
    %2140 = vmatpush1.bf16.msra.mxu0 %v2053
    %2141 = vmatprep.subr.bf16.mxu0 0
    %2142 = vmatpush1.bf16.msra.mxu0 %v2056
    %2143 = vmatprep.subr.bf16.mxu0 0
    %2144 = vmatpush1.bf16.msra.mxu0 %v2059
    %2145 = vmatprep.subr.bf16.mxu0 0
    %2146 = vmatpush1.bf16.msra.mxu0 %v2062
    %2147 = vmatprep.subr.bf16.mxu0 0
    %2148 = vmatpush1.bf16.msra.mxu0 %v2065
    %2149 = vmatprep.subr.bf16.mxu0 0
    %2150 = vmatpush1.bf16.msra.mxu0 %v2068
    %2151 = vmatprep.subr.bf16.mxu0 0
    %2152 = vmatpush1.bf16.msra.mxu0 %v2071
    %2153 = vmatprep.subr.bf16.mxu0 0
    %2154 = vmatpush1.bf16.msra.mxu0 0
    %2155 = vmatprep.subr.bf16.mxu0 0
    %2156 = vmatpush1.bf16.msra.mxu0 0
    %2157 = vmatprep.subr.bf16.mxu0 0
    %2158 = vmatpush1.bf16.msra.mxu0 0
    %2159 = vmatprep.subr.bf16.mxu0 0
    %2160 = vmatpush1.bf16.msra.mxu0 0
    %2161 = vmatprep.subr.bf16.mxu0 0
    %2162 = vmatpush1.bf16.msra.mxu0 0
    %2163 = vmatprep.subr.bf16.mxu0 0
    %2164 = vmatpush1.bf16.msra.mxu0 0
    %2165 = vmatprep.subr.bf16.mxu0 0
    %2166 = vmatpush1.bf16.msra.mxu0 0
    %2167 = vmatprep.subr.bf16.mxu0 0
    %2168 = vmatpush1.bf16.msra.mxu0 0
    %2169 = vmatprep.mubr.bf16.mxu0 0
    %2170 = vmatmul.mubr.bf16.gmra.mrb[0].mxu0 %v1928
    %v2171 = vpop.f32.mrb[0].mxu0
    %v2172 = vadd.f32 0.0, %v2171
    %v2173 = vpop.f32.mrb[0].mxu0
    %v2174 = vpop.f32.mrb[0].mxu0
    %v2175 = vpop.f32.mrb[0].mxu0
    %2176 = vdwg.mxu0
    %v2177 = vadd.f32 %v1933, %v2131
    %v2178 = vadd.f32 %v1934, %v2133
    %v2179 = vxor.u32 %v2177, 2147483648
    %v2180 = vxor.u32 %v2178, 2147483648
    %v2181 = vmul.f32 %v2179, 1.442695
    %v2182 = vpow.pop %v2181
    %v2183 = vmul.f32 %v2180, 1.442695
    %v2184 = vpow.pop %v2183
    %v2185 = vadd.f32 %v2182, 1.0
    %v2186 = vadd.f32 %v2184, 1.0
    %v2187 = vrcp.pop %v2185
    %v2188 = vmul.f32 1.0, %v2187
    %v2189 = vrcp.pop %v2186
    %v2190 = vmul.f32 1.0, %v2189
    %v2191 = vadd.f32 %v2172, %v578
    %v2192 = vmul.f32 %v2188, %v2191
    %v2193 = vadd.f32 %v1935, %v2192
    %v2194 = vtanh.pop %v2193
    %v2195 = vsub.f32 %v1927, %v2194
    %v2196 = vmul.f32 %v2190, %v2195
    %v2197 = vadd.f32 %v2194, %v2196
    %v2198 = vpack.c.bf16 %v2197, %v2197
    %2199 = vst [vmem:[#allocation3 + $0x18] sm:$0xf] %v2198
    %v2200 = vld [vmem:[#allocation2 + $0xa8] sm:$0xff]
    %v2201 = vld [vmem:[#allocation2 + $0xb0] sm:$0xff]
    %v2202 = vld [vmem:[#allocation2 + $0xb8] sm:$0xff]
    %v2203 = vld [vmem:[#allocation4] sm:$0xff]
    %v2204 = vld [vmem:[#allocation4 + $0x8] sm:$0xf]
    %v2205 = vld [vmem:[#allocation4 + $0xc] sm:$0xff]
    %v2206 = vld [vmem:[#allocation4 + $0x14] sm:$0xf]
    %v2207 = vld [vmem:[#allocation4 + $0x18] sm:$0xff]
    %v2208 = vld [vmem:[#allocation4 + $0x20] sm:$0xf]
    %v2209 = vld [vmem:[#allocation4 + $0x24] sm:$0xff]
    %v2210 = vld [vmem:[#allocation4 + $0x2c] sm:$0xf]
    %v2211 = vld [vmem:[#allocation4 + $0x30] sm:$0xff]
    %v2212 = vld [vmem:[#allocation4 + $0x38] sm:$0xf]
    %v2213 = vld [vmem:[#allocation4 + $0x3c] sm:$0xff]
    %v2214 = vld [vmem:[#allocation4 + $0x44] sm:$0xf]
    %v2215 = vld [vmem:[#allocation4 + $0x48] sm:$0xff]
    %v2216 = vld [vmem:[#allocation4 + $0x50] sm:$0xf]
    %v2217 = vld [vmem:[#allocation4 + $0x54] sm:$0xff]
    %v2218 = vld [vmem:[#allocation4 + $0x5c] sm:$0xf]
    %v2219 = vld [vmem:[#allocation4 + $0x60] sm:$0xff]
    %v2220 = vld [vmem:[#allocation4 + $0x68] sm:$0xf]
    %v2221 = vld [vmem:[#allocation4 + $0x6c] sm:$0xff]
    %v2222 = vld [vmem:[#allocation4 + $0x74] sm:$0xf]
    %v2223 = vld [vmem:[#allocation4 + $0x78] sm:$0xff]
    %v2224 = vld [vmem:[#allocation4 + $0x80] sm:$0xf]
    %v2225 = vld [vmem:[#allocation4 + $0x84] sm:$0xff]
    %v2226 = vld [vmem:[#allocation4 + $0x8c] sm:$0xf]
    %v2227 = vld [vmem:[#allocation4 + $0x90] sm:$0xff]
    %v2228 = vld [vmem:[#allocation4 + $0x98] sm:$0xf]
    %v2229 = vld [vmem:[#allocation4 + $0x9c] sm:$0xff]
    %v2230 = vld [vmem:[#allocation4 + $0xa4] sm:$0xf]
    %v2231 = vld [vmem:[#allocation4 + $0xa8] sm:$0xff]
    %v2232 = vld [vmem:[#allocation4 + $0xb0] sm:$0xf]
    %v2233 = vld [vmem:[#allocation4 + $0xb4] sm:$0xff]
    %v2234 = vld [vmem:[#allocation4 + $0xbc] sm:$0xf]
    %v2267 = vunpack.c.l.b16 %v2203
    %v2268 = vunpack.c.h.b16 %v2203
    %v2269 = vunpack.c.l.b16 %v2204
    %v2270 = vunpack.c.l.b16 %v2205
    %v2271 = vunpack.c.h.b16 %v2205
    %v2272 = vunpack.c.l.b16 %v2206
    %v2273 = vunpack.c.l.b16 %v2207
    %v2274 = vunpack.c.h.b16 %v2207
    %v2275 = vunpack.c.l.b16 %v2208
    %v2276 = vunpack.c.l.b16 %v2209
    %v2277 = vunpack.c.h.b16 %v2209
    %v2278 = vunpack.c.l.b16 %v2210
    %v2279 = vunpack.c.l.b16 %v2211
    %v2280 = vunpack.c.h.b16 %v2211
    %v2281 = vunpack.c.l.b16 %v2212
    %v2282 = vunpack.c.l.b16 %v2213
    %v2283 = vunpack.c.h.b16 %v2213
    %v2284 = vunpack.c.l.b16 %v2214
    %v2285 = vunpack.c.l.b16 %v2215
    %v2286 = vunpack.c.h.b16 %v2215
    %v2287 = vunpack.c.l.b16 %v2216
    %v2288 = vunpack.c.l.b16 %v2217
    %v2289 = vunpack.c.h.b16 %v2217
    %v2290 = vunpack.c.l.b16 %v2218
    %v2291 = vunpack.c.l.b16 %v2219
    %v2292 = vunpack.c.h.b16 %v2219
    %v2293 = vunpack.c.l.b16 %v2220
    %v2294 = vunpack.c.l.b16 %v2221
    %v2295 = vunpack.c.h.b16 %v2221
    %v2296 = vunpack.c.l.b16 %v2222
    %v2297 = vunpack.c.l.b16 %v2223
    %v2298 = vunpack.c.h.b16 %v2223
    %v2299 = vunpack.c.l.b16 %v2224
    %v2300 = vunpack.c.l.b16 %v2225
    %v2301 = vunpack.c.h.b16 %v2225
    %v2302 = vunpack.c.l.b16 %v2226
    %v2303 = vunpack.c.l.b16 %v2227
    %v2304 = vunpack.c.h.b16 %v2227
    %v2305 = vunpack.c.l.b16 %v2228
    %v2306 = vunpack.c.l.b16 %v2229
    %v2307 = vunpack.c.h.b16 %v2229
    %v2308 = vunpack.c.l.b16 %v2230
    %v2309 = vunpack.c.l.b16 %v2231
    %v2310 = vunpack.c.h.b16 %v2231
    %v2311 = vunpack.c.l.b16 %v2232
    %v2312 = vunpack.c.l.b16 %v2233
    %v2313 = vunpack.c.h.b16 %v2233
    %v2314 = vunpack.c.l.b16 %v2234
    %v2315 = vpack.c.b16 %v2270, %v2267
    %v2316 = vpack.c.b16 %v2271, %v2268
    %v2317 = vpack.c.b16 %v2272, %v2269
    %v2318 = vpack.c.b16 %v2276, %v2273
    %v2319 = vpack.c.b16 %v2277, %v2274
    %v2320 = vpack.c.b16 %v2278, %v2275
    %v2321 = vpack.c.b16 %v2282, %v2279
    %v2322 = vpack.c.b16 %v2283, %v2280
    %v2323 = vpack.c.b16 %v2284, %v2281
    %v2324 = vpack.c.b16 %v2288, %v2285
    %v2325 = vpack.c.b16 %v2289, %v2286
    %v2326 = vpack.c.b16 %v2290, %v2287
    %v2327 = vpack.c.b16 %v2294, %v2291
    %v2328 = vpack.c.b16 %v2295, %v2292
    %v2329 = vpack.c.b16 %v2296, %v2293
    %v2330 = vpack.c.b16 %v2300, %v2297
    %v2331 = vpack.c.b16 %v2301, %v2298
    %v2332 = vpack.c.b16 %v2302, %v2299
    %v2333 = vpack.c.b16 %v2306, %v2303
    %v2334 = vpack.c.b16 %v2307, %v2304
    %v2335 = vpack.c.b16 %v2308, %v2305
    %v2336 = vpack.c.b16 %v2312, %v2309
    %v2337 = vpack.c.b16 %v2313, %v2310
    %v2338 = vpack.c.b16 %v2314, %v2311
    %2363 = vmatprep.subr.bf16.mxu0 %v2316
    %2364 = vmatpush1.bf16.msra.mxu0 %v2315
    %2365 = vmatprep.subr.bf16.mxu0 %v2319
    %2366 = vmatpush1.bf16.msra.mxu0 %v2318
    %2367 = vmatprep.subr.bf16.mxu0 %v2322
    %2368 = vmatpush1.bf16.msra.mxu0 %v2321
    %2369 = vmatprep.subr.bf16.mxu0 %v2325
    %2370 = vmatpush1.bf16.msra.mxu0 %v2324
    %2371 = vmatprep.subr.bf16.mxu0 %v2328
    %2372 = vmatpush1.bf16.msra.mxu0 %v2327
    %2373 = vmatprep.subr.bf16.mxu0 %v2331
    %2374 = vmatpush1.bf16.msra.mxu0 %v2330
    %2375 = vmatprep.subr.bf16.mxu0 %v2334
    %2376 = vmatpush1.bf16.msra.mxu0 %v2333
    %2377 = vmatprep.subr.bf16.mxu0 %v2337
    %2378 = vmatpush1.bf16.msra.mxu0 %v2336
    %2379 = vmatprep.subr.bf16.mxu0 0
    %2380 = vmatpush1.bf16.msra.mxu0 0
    %2381 = vmatprep.subr.bf16.mxu0 0
    %2382 = vmatpush1.bf16.msra.mxu0 0
    %2383 = vmatprep.subr.bf16.mxu0 0
    %2384 = vmatpush1.bf16.msra.mxu0 0
    %2385 = vmatprep.subr.bf16.mxu0 0
    %2386 = vmatpush1.bf16.msra.mxu0 0
    %2387 = vmatprep.subr.bf16.mxu0 0
    %2388 = vmatpush1.bf16.msra.mxu0 0
    %2389 = vmatprep.subr.bf16.mxu0 0
    %2390 = vmatpush1.bf16.msra.mxu0 0
    %2391 = vmatprep.subr.bf16.mxu0 0
    %2392 = vmatpush1.bf16.msra.mxu0 0
    %2393 = vmatprep.subr.bf16.mxu0 0
    %2394 = vmatpush1.bf16.msra.mxu0 0
    %2395 = vmatprep.mubr.bf16.mxu0 0
    %2396 = vmatmul.mubr.bf16.gmra.mrb[0].mxu0 %v2198
    %v2397 = vpop.f32.mrb[0].mxu0
    %v2398 = vadd.f32 0.0, %v2397
    %v2399 = vpop.f32.mrb[0].mxu0
    %v2400 = vadd.f32 0.0, %v2399
    %v2401 = vpop.f32.mrb[0].mxu0
    %v2402 = vpop.f32.mrb[0].mxu0
    %2403 = vdwg.mxu0
    %2404 = vmatprep.subr.bf16.mxu0 0
    %2405 = vmatpush1.bf16.msra.mxu0 %v2317
    %2406 = vmatprep.subr.bf16.mxu0 0
    %2407 = vmatpush1.bf16.msra.mxu0 %v2320
    %2408 = vmatprep.subr.bf16.mxu0 0
    %2409 = vmatpush1.bf16.msra.mxu0 %v2323
    %2410 = vmatprep.subr.bf16.mxu0 0
    %2411 = vmatpush1.bf16.msra.mxu0 %v2326
    %2412 = vmatprep.subr.bf16.mxu0 0
    %2413 = vmatpush1.bf16.msra.mxu0 %v2329
    %2414 = vmatprep.subr.bf16.mxu0 0
    %2415 = vmatpush1.bf16.msra.mxu0 %v2332
    %2416 = vmatprep.subr.bf16.mxu0 0
    %2417 = vmatpush1.bf16.msra.mxu0 %v2335
    %2418 = vmatprep.subr.bf16.mxu0 0
    %2419 = vmatpush1.bf16.msra.mxu0 %v2338
    %2420 = vmatprep.subr.bf16.mxu0 0
    %2421 = vmatpush1.bf16.msra.mxu0 0
    %2422 = vmatprep.subr.bf16.mxu0 0
    %2423 = vmatpush1.bf16.msra.mxu0 0
    %2424 = vmatprep.subr.bf16.mxu0 0
    %2425 = vmatpush1.bf16.msra.mxu0 0
    %2426 = vmatprep.subr.bf16.mxu0 0
    %2427 = vmatpush1.bf16.msra.mxu0 0
    %2428 = vmatprep.subr.bf16.mxu0 0
    %2429 = vmatpush1.bf16.msra.mxu0 0
    %2430 = vmatprep.subr.bf16.mxu0 0
    %2431 = vmatpush1.bf16.msra.mxu0 0
    %2432 = vmatprep.subr.bf16.mxu0 0
    %2433 = vmatpush1.bf16.msra.mxu0 0
    %2434 = vmatprep.subr.bf16.mxu0 0
    %2435 = vmatpush1.bf16.msra.mxu0 0
    %2436 = vmatprep.mubr.bf16.mxu0 0
    %2437 = vmatmul.mubr.bf16.gmra.mrb[0].mxu0 %v2198
    %v2438 = vpop.f32.mrb[0].mxu0
    %v2439 = vadd.f32 0.0, %v2438
    %v2440 = vpop.f32.mrb[0].mxu0
    %v2441 = vpop.f32.mrb[0].mxu0
    %v2442 = vpop.f32.mrb[0].mxu0
    %2443 = vdwg.mxu0
    %v2444 = vadd.f32 %v2200, %v2398
    %v2445 = vadd.f32 %v2201, %v2400
    %v2446 = vxor.u32 %v2444, 2147483648
    %v2447 = vxor.u32 %v2445, 2147483648
    %v2448 = vmul.f32 %v2446, 1.442695
    %v2449 = vpow.pop %v2448
    %v2450 = vmul.f32 %v2447, 1.442695
    %v2451 = vpow.pop %v2450
    %v2452 = vadd.f32 %v2449, 1.0
    %v2453 = vadd.f32 %v2451, 1.0
    %v2454 = vrcp.pop %v2452
    %v2455 = vmul.f32 1.0, %v2454
    %v2456 = vrcp.pop %v2453
    %v2457 = vmul.f32 1.0, %v2456
    %v2458 = vadd.f32 %v2439, %v578
    %v2459 = vmul.f32 %v2455, %v2458
    %v2460 = vadd.f32 %v2202, %v2459
    %v2461 = vtanh.pop %v2460
    %v2462 = vsub.f32 %v2197, %v2461
    %v2463 = vmul.f32 %v2457, %v2462
    %v2464 = vadd.f32 %v2461, %v2463
    %v2465 = vpack.c.bf16 %v2464, %v2464
    %v2467 = vrot.slane %v2465, 4
    %2469 = vst [vmem:[#allocation3 + $0x18] sm:$0xf0] %v2467
    %v2470 = vld [vmem:[#allocation3] sm:$0xff]
    %v2471 = vld [vmem:[#allocation3 + $0x8] sm:$0xff]
    %v2472 = vld [vmem:[#allocation3 + $0x10] sm:$0xff]
    %v2473 = vld [vmem:[#allocation3 + $0x18] sm:$0xff]
    %v2474 = vld [vmem:[#allocation7] sm:$0xff]
    %v2475 = vld [vmem:[#allocation7 + $0x8] sm:$0xf]
    %v2476 = vld [vmem:[#allocation7 + $0xc] sm:$0xff]
    %v2477 = vld [vmem:[#allocation7 + $0x14] sm:$0xf]
    %v2478 = vld [vmem:[#allocation7 + $0x18] sm:$0xff]
    %v2479 = vld [vmem:[#allocation7 + $0x20] sm:$0xf]
    %v2480 = vld [vmem:[#allocation7 + $0x24] sm:$0xff]
    %v2481 = vld [vmem:[#allocation7 + $0x2c] sm:$0xf]
    %v2482 = vld [vmem:[#allocation7 + $0x30] sm:$0xff]
    %v2483 = vld [vmem:[#allocation7 + $0x38] sm:$0xf]
    %v2484 = vld [vmem:[#allocation7 + $0x3c] sm:$0xff]
    %v2485 = vld [vmem:[#allocation7 + $0x44] sm:$0xf]
    %v2486 = vld [vmem:[#allocation7 + $0x48] sm:$0xff]
    %v2487 = vld [vmem:[#allocation7 + $0x50] sm:$0xf]
    %v2488 = vld [vmem:[#allocation7 + $0x54] sm:$0xff]
    %v2489 = vld [vmem:[#allocation7 + $0x5c] sm:$0xf]
    %v2490 = vld [vmem:[#allocation7 + $0x60] sm:$0xff]
    %v2491 = vld [vmem:[#allocation7 + $0x68] sm:$0xf]
    %v2492 = vld [vmem:[#allocation7 + $0x6c] sm:$0xff]
    %v2493 = vld [vmem:[#allocation7 + $0x74] sm:$0xf]
    %v2494 = vld [vmem:[#allocation7 + $0x78] sm:$0xff]
    %v2495 = vld [vmem:[#allocation7 + $0x80] sm:$0xf]
    %v2496 = vld [vmem:[#allocation7 + $0x84] sm:$0xff]
    %v2497 = vld [vmem:[#allocation7 + $0x8c] sm:$0xf]
    %v2498 = vld [vmem:[#allocation7 + $0x90] sm:$0xff]
    %v2499 = vld [vmem:[#allocation7 + $0x98] sm:$0xf]
    %v2500 = vld [vmem:[#allocation7 + $0x9c] sm:$0xff]
    %v2501 = vld [vmem:[#allocation7 + $0xa4] sm:$0xf]
    %v2502 = vld [vmem:[#allocation7 + $0xa8] sm:$0xff]
    %v2503 = vld [vmem:[#allocation7 + $0xb0] sm:$0xf]
    %v2504 = vld [vmem:[#allocation7 + $0xb4] sm:$0xff]
    %v2505 = vld [vmem:[#allocation7 + $0xbc] sm:$0xf]
    %v2506 = vld [vmem:[%s7] sm:$0x7]
    %v2508 = vlaneseq
    %v2509 = vshrl.u32 %v2508, 7
    %v2510 = vsub.s32 0, %v2509
    %v2511 = vrot.slane %v2506, %v2510
    %v2512 = vlaneseq
    %v2513 = vshrl.u32 %v2512, 7
    %v2514 = vsub.s32 1, %v2513
    %v2515 = vrot.slane %v2506, %v2514
    %v2516 = vlaneseq
    %v2517 = vshrl.u32 %v2516, 7
    %v2518 = vsub.s32 2, %v2517
    %v2519 = vrot.slane %v2506, %v2518
    %v2555 = vunpack.c.l.b16 %v2474
    %v2556 = vunpack.c.h.b16 %v2474
    %v2557 = vunpack.c.l.b16 %v2475
    %v2558 = vunpack.c.l.b16 %v2476
    %v2559 = vunpack.c.h.b16 %v2476
    %v2560 = vunpack.c.l.b16 %v2477
    %v2561 = vunpack.c.l.b16 %v2478
    %v2562 = vunpack.c.h.b16 %v2478
    %v2563 = vunpack.c.l.b16 %v2479
    %v2564 = vunpack.c.l.b16 %v2480
    %v2565 = vunpack.c.h.b16 %v2480
    %v2566 = vunpack.c.l.b16 %v2481
    %v2567 = vunpack.c.l.b16 %v2482
    %v2568 = vunpack.c.h.b16 %v2482
    %v2569 = vunpack.c.l.b16 %v2483
    %v2570 = vunpack.c.l.b16 %v2484
    %v2571 = vunpack.c.h.b16 %v2484
    %v2572 = vunpack.c.l.b16 %v2485
    %v2573 = vunpack.c.l.b16 %v2486
    %v2574 = vunpack.c.h.b16 %v2486
    %v2575 = vunpack.c.l.b16 %v2487
    %v2576 = vunpack.c.l.b16 %v2488
    %v2577 = vunpack.c.h.b16 %v2488
    %v2578 = vunpack.c.l.b16 %v2489
    %v2579 = vunpack.c.l.b16 %v2490
    %v2580 = vunpack.c.h.b16 %v2490
    %v2581 = vunpack.c.l.b16 %v2491
    %v2582 = vunpack.c.l.b16 %v2492
    %v2583 = vunpack.c.h.b16 %v2492
    %v2584 = vunpack.c.l.b16 %v2493
    %v2585 = vunpack.c.l.b16 %v2494
    %v2586 = vunpack.c.h.b16 %v2494
    %v2587 = vunpack.c.l.b16 %v2495
    %v2588 = vunpack.c.l.b16 %v2496
    %v2589 = vunpack.c.h.b16 %v2496
    %v2590 = vunpack.c.l.b16 %v2497
    %v2591 = vunpack.c.l.b16 %v2498
    %v2592 = vunpack.c.h.b16 %v2498
    %v2593 = vunpack.c.l.b16 %v2499
    %v2594 = vunpack.c.l.b16 %v2500
    %v2595 = vunpack.c.h.b16 %v2500
    %v2596 = vunpack.c.l.b16 %v2501
    %v2597 = vunpack.c.l.b16 %v2502
    %v2598 = vunpack.c.h.b16 %v2502
    %v2599 = vunpack.c.l.b16 %v2503
    %v2600 = vunpack.c.l.b16 %v2504
    %v2601 = vunpack.c.h.b16 %v2504
    %v2602 = vunpack.c.l.b16 %v2505
    %v2603 = vpack.c.b16 %v2558, %v2555
    %v2604 = vpack.c.b16 %v2559, %v2556
    %v2605 = vpack.c.b16 %v2560, %v2557
    %v2606 = vpack.c.b16 %v2564, %v2561
    %v2607 = vpack.c.b16 %v2565, %v2562
    %v2608 = vpack.c.b16 %v2566, %v2563
    %v2609 = vpack.c.b16 %v2570, %v2567
    %v2610 = vpack.c.b16 %v2571, %v2568
    %v2611 = vpack.c.b16 %v2572, %v2569
    %v2612 = vpack.c.b16 %v2576, %v2573
    %v2613 = vpack.c.b16 %v2577, %v2574
    %v2614 = vpack.c.b16 %v2578, %v2575
    %v2615 = vpack.c.b16 %v2582, %v2579
    %v2616 = vpack.c.b16 %v2583, %v2580
    %v2617 = vpack.c.b16 %v2584, %v2581
    %v2618 = vpack.c.b16 %v2588, %v2585
    %v2619 = vpack.c.b16 %v2589, %v2586
    %v2620 = vpack.c.b16 %v2590, %v2587
    %v2621 = vpack.c.b16 %v2594, %v2591
    %v2622 = vpack.c.b16 %v2595, %v2592
    %v2623 = vpack.c.b16 %v2596, %v2593
    %v2624 = vpack.c.b16 %v2600, %v2597
    %v2625 = vpack.c.b16 %v2601, %v2598
    %v2626 = vpack.c.b16 %v2602, %v2599
    %2651 = vmatprep.subr.bf16.mxu0 %v2604
    %2652 = vmatpush1.bf16.msra.mxu0 %v2603
    %2653 = vmatprep.subr.bf16.mxu0 %v2607
    %2654 = vmatpush1.bf16.msra.mxu0 %v2606
    %2655 = vmatprep.subr.bf16.mxu0 %v2610
    %2656 = vmatpush1.bf16.msra.mxu0 %v2609
    %2657 = vmatprep.subr.bf16.mxu0 %v2613
    %2658 = vmatpush1.bf16.msra.mxu0 %v2612
    %2659 = vmatprep.subr.bf16.mxu0 %v2616
    %2660 = vmatpush1.bf16.msra.mxu0 %v2615
    %2661 = vmatprep.subr.bf16.mxu0 %v2619
    %2662 = vmatpush1.bf16.msra.mxu0 %v2618
    %2663 = vmatprep.subr.bf16.mxu0 %v2622
    %2664 = vmatpush1.bf16.msra.mxu0 %v2621
    %2665 = vmatprep.subr.bf16.mxu0 %v2625
    %2666 = vmatpush1.bf16.msra.mxu0 %v2624
    %2667 = vmatprep.subr.bf16.mxu0 0
    %2668 = vmatpush1.bf16.msra.mxu0 0
    %2669 = vmatprep.subr.bf16.mxu0 0
    %2670 = vmatpush1.bf16.msra.mxu0 0
    %2671 = vmatprep.subr.bf16.mxu0 0
    %2672 = vmatpush1.bf16.msra.mxu0 0
    %2673 = vmatprep.subr.bf16.mxu0 0
    %2674 = vmatpush1.bf16.msra.mxu0 0
    %2675 = vmatprep.subr.bf16.mxu0 0
    %2676 = vmatpush1.bf16.msra.mxu0 0
    %2677 = vmatprep.subr.bf16.mxu0 0
    %2678 = vmatpush1.bf16.msra.mxu0 0
    %2679 = vmatprep.subr.bf16.mxu0 0
    %2680 = vmatpush1.bf16.msra.mxu0 0
    %2681 = vmatprep.subr.bf16.mxu0 0
    %2682 = vmatpush1.bf16.msra.mxu0 0
    %2683 = vmatprep.mubr.bf16.mxu0 0
    %2684 = vmatmul.mubr.bf16.gmra.mrb[0].mxu0 %v2470
    %v2685 = vpop.f32.mrb[0].mxu0
    %v2686 = vadd.f32 %v2511, %v2685
    %v2687 = vpop.f32.mrb[0].mxu0
    %v2688 = vadd.f32 %v2515, %v2687
    %v2689 = vpop.f32.mrb[0].mxu0
    %v2690 = vadd.f32 %v2511, %v2689
    %v2691 = vpop.f32.mrb[0].mxu0
    %v2692 = vadd.f32 %v2515, %v2691
    %2693 = vmatprep.mubr.bf16.mxu0 0
    %2694 = vmatmul.mubr.bf16.gmra.mrb[0].mxu0 %v2471
    %v2695 = vpop.f32.mrb[0].mxu0
    %v2696 = vadd.f32 %v2511, %v2695
    %v2697 = vpop.f32.mrb[0].mxu0
    %v2698 = vadd.f32 %v2515, %v2697
    %v2699 = vpop.f32.mrb[0].mxu0
    %v2700 = vadd.f32 %v2511, %v2699
    %v2701 = vpop.f32.mrb[0].mxu0
    %v2702 = vadd.f32 %v2515, %v2701
    %2703 = vmatprep.mubr.bf16.mxu0 0
    %2704 = vmatmul.mubr.bf16.gmra.mrb[0].mxu0 %v2472
    %v2705 = vpop.f32.mrb[0].mxu0
    %v2706 = vadd.f32 %v2511, %v2705
    %v2707 = vpop.f32.mrb[0].mxu0
    %v2708 = vadd.f32 %v2515, %v2707
    %v2709 = vpop.f32.mrb[0].mxu0
    %v2710 = vadd.f32 %v2511, %v2709
    %v2711 = vpop.f32.mrb[0].mxu0
    %v2712 = vadd.f32 %v2515, %v2711
    %2713 = vmatprep.mubr.bf16.mxu0 0
    %2714 = vmatmul.mubr.bf16.gmra.mrb[0].mxu0 %v2473
    %v2715 = vpop.f32.mrb[0].mxu0
    %v2716 = vadd.f32 %v2511, %v2715
    %v2717 = vpop.f32.mrb[0].mxu0
    %v2718 = vadd.f32 %v2515, %v2717
    %v2719 = vpop.f32.mrb[0].mxu0
    %v2720 = vadd.f32 %v2511, %v2719
    %v2721 = vpop.f32.mrb[0].mxu0
    %v2722 = vadd.f32 %v2515, %v2721
    %2723 = vdwg.mxu0
    %2724 = vmatprep.subr.bf16.mxu0 0
    %2725 = vmatpush1.bf16.msra.mxu0 %v2605
    %2726 = vmatprep.subr.bf16.mxu0 0
    %2727 = vmatpush1.bf16.msra.mxu0 %v2608
    %2728 = vmatprep.subr.bf16.mxu0 0
    %2729 = vmatpush1.bf16.msra.mxu0 %v2611
    %2730 = vmatprep.subr.bf16.mxu0 0
    %2731 = vmatpush1.bf16.msra.mxu0 %v2614
    %2732 = vmatprep.subr.bf16.mxu0 0
    %2733 = vmatpush1.bf16.msra.mxu0 %v2617
    %2734 = vmatprep.subr.bf16.mxu0 0
    %2735 = vmatpush1.bf16.msra.mxu0 %v2620
    %2736 = vmatprep.subr.bf16.mxu0 0
    %2737 = vmatpush1.bf16.msra.mxu0 %v2623
    %2738 = vmatprep.subr.bf16.mxu0 0
    %2739 = vmatpush1.bf16.msra.mxu0 %v2626
    %2740 = vmatprep.subr.bf16.mxu0 0
    %2741 = vmatpush1.bf16.msra.mxu0 0
    %2742 = vmatprep.subr.bf16.mxu0 0
    %2743 = vmatpush1.bf16.msra.mxu0 0
    %2744 = vmatprep.subr.bf16.mxu0 0
    %2745 = vmatpush1.bf16.msra.mxu0 0
    %2746 = vmatprep.subr.bf16.mxu0 0
    %2747 = vmatpush1.bf16.msra.mxu0 0
    %2748 = vmatprep.subr.bf16.mxu0 0
    %2749 = vmatpush1.bf16.msra.mxu0 0
    %2750 = vmatprep.subr.bf16.mxu0 0
    %2751 = vmatpush1.bf16.msra.mxu0 0
    %2752 = vmatprep.subr.bf16.mxu0 0
    %2753 = vmatpush1.bf16.msra.mxu0 0
    %2754 = vmatprep.subr.bf16.mxu0 0
    %2755 = vmatpush1.bf16.msra.mxu0 0
    %2756 = vmatprep.mubr.bf16.mxu0 0
    %2757 = vmatmul.mubr.bf16.gmra.mrb[0].mxu0 %v2470
    %v2758 = vpop.f32.mrb[0].mxu0
    %v2759 = vadd.f32 %v2519, %v2758
    %v2760 = vpop.f32.mrb[0].mxu0
    %v2761 = vpop.f32.mrb[0].mxu0
    %v2762 = vadd.f32 %v2519, %v2761
    %v2763 = vpop.f32.mrb[0].mxu0
    %2764 = vmatprep.mubr.bf16.mxu0 0
    %2765 = vmatmul.mubr.bf16.gmra.mrb[0].mxu0 %v2471
    %v2766 = vpop.f32.mrb[0].mxu0
    %v2767 = vadd.f32 %v2519, %v2766
    %v2768 = vpop.f32.mrb[0].mxu0
    %v2769 = vpop.f32.mrb[0].mxu0
    %v2770 = vadd.f32 %v2519, %v2769
    %v2771 = vpop.f32.mrb[0].mxu0
    %2772 = vmatprep.mubr.bf16.mxu0 0
    %2773 = vmatmul.mubr.bf16.gmra.mrb[0].mxu0 %v2472
    %v2774 = vpop.f32.mrb[0].mxu0
    %v2775 = vadd.f32 %v2519, %v2774
    %v2776 = vpop.f32.mrb[0].mxu0
    %v2777 = vpop.f32.mrb[0].mxu0
    %v2778 = vadd.f32 %v2519, %v2777
    %v2779 = vpop.f32.mrb[0].mxu0
    %2780 = vmatprep.mubr.bf16.mxu0 0
    %2781 = vmatmul.mubr.bf16.gmra.mrb[0].mxu0 %v2473
    %v2782 = vpop.f32.mrb[0].mxu0
    %v2783 = vadd.f32 %v2519, %v2782
    %v2784 = vpop.f32.mrb[0].mxu0
    %v2785 = vpop.f32.mrb[0].mxu0
    %v2786 = vadd.f32 %v2519, %v2785
    %v2787 = vpop.f32.mrb[0].mxu0
    %2788 = vdwg.mxu0
    %2789 = vst [vmem:[#allocation2] sm:$0xff] %v2686
    %2790 = vst [vmem:[#allocation2 + $0x8] sm:$0xff] %v2688
    %2791 = vst [vmem:[#allocation2 + $0x10] sm:$0xff] %v2759
    %2792 = vst [vmem:[#allocation2 + $0x18] sm:$0xff] %v2690
    %2793 = vst [vmem:[#allocation2 + $0x20] sm:$0xff] %v2692
    %2794 = vst [vmem:[#allocation2 + $0x28] sm:$0xff] %v2762
    %2795 = vst [vmem:[#allocation2 + $0x30] sm:$0xff] %v2696
    %2796 = vst [vmem:[#allocation2 + $0x38] sm:$0xff] %v2698
    %2797 = vst [vmem:[#allocation2 + $0x40] sm:$0xff] %v2767
    %2798 = vst [vmem:[#allocation2 + $0x48] sm:$0xff] %v2700
    %2799 = vst [vmem:[#allocation2 + $0x50] sm:$0xff] %v2702
    %2800 = vst [vmem:[#allocation2 + $0x58] sm:$0xff] %v2770
    %2801 = vst [vmem:[#allocation2 + $0x60] sm:$0xff] %v2706
    %2802 = vst [vmem:[#allocation2 + $0x68] sm:$0xff] %v2708
    %2803 = vst [vmem:[#allocation2 + $0x70] sm:$0xff] %v2775
    %2804 = vst [vmem:[#allocation2 + $0x78] sm:$0xff] %v2710
    %2805 = vst [vmem:[#allocation2 + $0x80] sm:$0xff] %v2712
    %2806 = vst [vmem:[#allocation2 + $0x88] sm:$0xff] %v2778
    %2807 = vst [vmem:[#allocation2 + $0x90] sm:$0xff] %v2716
    %2808 = vst [vmem:[#allocation2 + $0x98] sm:$0xff] %v2718
    %2809 = vst [vmem:[#allocation2 + $0xa0] sm:$0xff] %v2783
    %2810 = vst [vmem:[#allocation2 + $0xa8] sm:$0xff] %v2720
    %2811 = vst [vmem:[#allocation2 + $0xb0] sm:$0xff] %v2722
    %2812 = vst [vmem:[#allocation2 + $0xb8] sm:$0xff] %v2786
    %v2813 = vld [vmem:[%s8] sm:$0x1]
    %v2814 = vld [vmem:[#allocation2] sm:$0xff]
    %v2815 = vld [vmem:[#allocation2 + $0x8] sm:$0xff]
    %v2816 = vld [vmem:[#allocation2 + $0x10] sm:$0xff]
    %v2817 = vld [vmem:[#allocation9] sm:$0xff]
    %v2818 = vld [vmem:[#allocation9 + $0x8] sm:$0xf]
    %v2819 = vld [vmem:[#allocation9 + $0xc] sm:$0xff]
    %v2820 = vld [vmem:[#allocation9 + $0x14] sm:$0xf]
    %v2821 = vld [vmem:[#allocation9 + $0x18] sm:$0xff]
    %v2822 = vld [vmem:[#allocation9 + $0x20] sm:$0xf]
    %v2823 = vld [vmem:[#allocation9 + $0x24] sm:$0xff]
    %v2824 = vld [vmem:[#allocation9 + $0x2c] sm:$0xf]
    %v2825 = vld [vmem:[#allocation9 + $0x30] sm:$0xff]
    %v2826 = vld [vmem:[#allocation9 + $0x38] sm:$0xf]
    %v2827 = vld [vmem:[#allocation9 + $0x3c] sm:$0xff]
    %v2828 = vld [vmem:[#allocation9 + $0x44] sm:$0xf]
    %v2829 = vld [vmem:[#allocation9 + $0x48] sm:$0xff]
    %v2830 = vld [vmem:[#allocation9 + $0x50] sm:$0xf]
    %v2831 = vld [vmem:[#allocation9 + $0x54] sm:$0xff]
    %v2832 = vld [vmem:[#allocation9 + $0x5c] sm:$0xf]
    %v2833 = vld [vmem:[#allocation9 + $0x60] sm:$0xff]
    %v2834 = vld [vmem:[#allocation9 + $0x68] sm:$0xf]
    %v2835 = vld [vmem:[#allocation9 + $0x6c] sm:$0xff]
    %v2836 = vld [vmem:[#allocation9 + $0x74] sm:$0xf]
    %v2837 = vld [vmem:[#allocation9 + $0x78] sm:$0xff]
    %v2838 = vld [vmem:[#allocation9 + $0x80] sm:$0xf]
    %v2839 = vld [vmem:[#allocation9 + $0x84] sm:$0xff]
    %v2840 = vld [vmem:[#allocation9 + $0x8c] sm:$0xf]
    %v2841 = vld [vmem:[#allocation9 + $0x90] sm:$0xff]
    %v2842 = vld [vmem:[#allocation9 + $0x98] sm:$0xf]
    %v2843 = vld [vmem:[#allocation9 + $0x9c] sm:$0xff]
    %v2844 = vld [vmem:[#allocation9 + $0xa4] sm:$0xf]
    %v2845 = vld [vmem:[#allocation9 + $0xa8] sm:$0xff]
    %v2846 = vld [vmem:[#allocation9 + $0xb0] sm:$0xf]
    %v2847 = vld [vmem:[#allocation9 + $0xb4] sm:$0xff]
    %v2848 = vld [vmem:[#allocation9 + $0xbc] sm:$0xf]
    %v2881 = vunpack.c.l.b16 %v2817
    %v2882 = vunpack.c.h.b16 %v2817
    %v2883 = vunpack.c.l.b16 %v2818
    %v2884 = vunpack.c.l.b16 %v2819
    %v2885 = vunpack.c.h.b16 %v2819
    %v2886 = vunpack.c.l.b16 %v2820
    %v2887 = vunpack.c.l.b16 %v2821
    %v2888 = vunpack.c.h.b16 %v2821
    %v2889 = vunpack.c.l.b16 %v2822
    %v2890 = vunpack.c.l.b16 %v2823
    %v2891 = vunpack.c.h.b16 %v2823
    %v2892 = vunpack.c.l.b16 %v2824
    %v2893 = vunpack.c.l.b16 %v2825
    %v2894 = vunpack.c.h.b16 %v2825
    %v2895 = vunpack.c.l.b16 %v2826
    %v2896 = vunpack.c.l.b16 %v2827
    %v2897 = vunpack.c.h.b16 %v2827
    %v2898 = vunpack.c.l.b16 %v2828
    %v2899 = vunpack.c.l.b16 %v2829
    %v2900 = vunpack.c.h.b16 %v2829
    %v2901 = vunpack.c.l.b16 %v2830
    %v2902 = vunpack.c.l.b16 %v2831
    %v2903 = vunpack.c.h.b16 %v2831
    %v2904 = vunpack.c.l.b16 %v2832
    %v2905 = vunpack.c.l.b16 %v2833
    %v2906 = vunpack.c.h.b16 %v2833
    %v2907 = vunpack.c.l.b16 %v2834
    %v2908 = vunpack.c.l.b16 %v2835
    %v2909 = vunpack.c.h.b16 %v2835
    %v2910 = vunpack.c.l.b16 %v2836
    %v2911 = vunpack.c.l.b16 %v2837
    %v2912 = vunpack.c.h.b16 %v2837
    %v2913 = vunpack.c.l.b16 %v2838
    %v2914 = vunpack.c.l.b16 %v2839
    %v2915 = vunpack.c.h.b16 %v2839
    %v2916 = vunpack.c.l.b16 %v2840
    %v2917 = vunpack.c.l.b16 %v2841
    %v2918 = vunpack.c.h.b16 %v2841
    %v2919 = vunpack.c.l.b16 %v2842
    %v2920 = vunpack.c.l.b16 %v2843
    %v2921 = vunpack.c.h.b16 %v2843
    %v2922 = vunpack.c.l.b16 %v2844
    %v2923 = vunpack.c.l.b16 %v2845
    %v2924 = vunpack.c.h.b16 %v2845
    %v2925 = vunpack.c.l.b16 %v2846
    %v2926 = vunpack.c.l.b16 %v2847
    %v2927 = vunpack.c.h.b16 %v2847
    %v2928 = vunpack.c.l.b16 %v2848
    %v2929 = vpack.c.b16 %v2884, %v2881
    %v2930 = vpack.c.b16 %v2885, %v2882
    %v2931 = vpack.c.b16 %v2886, %v2883
    %v2932 = vpack.c.b16 %v2890, %v2887
    %v2933 = vpack.c.b16 %v2891, %v2888
    %v2934 = vpack.c.b16 %v2892, %v2889
    %v2935 = vpack.c.b16 %v2896, %v2893
    %v2936 = vpack.c.b16 %v2897, %v2894
    %v2937 = vpack.c.b16 %v2898, %v2895
    %v2938 = vpack.c.b16 %v2902, %v2899
    %v2939 = vpack.c.b16 %v2903, %v2900
    %v2940 = vpack.c.b16 %v2904, %v2901
    %v2941 = vpack.c.b16 %v2908, %v2905
    %v2942 = vpack.c.b16 %v2909, %v2906
    %v2943 = vpack.c.b16 %v2910, %v2907
    %v2944 = vpack.c.b16 %v2914, %v2911
    %v2945 = vpack.c.b16 %v2915, %v2912
    %v2946 = vpack.c.b16 %v2916, %v2913
    %v2947 = vpack.c.b16 %v2920, %v2917
    %v2948 = vpack.c.b16 %v2921, %v2918
    %v2949 = vpack.c.b16 %v2922, %v2919
    %v2950 = vpack.c.b16 %v2926, %v2923
    %v2951 = vpack.c.b16 %v2927, %v2924
    %v2952 = vpack.c.b16 %v2928, %v2925
    %2977 = vmatprep.subr.bf16.mxu0 %v2930
    %2978 = vmatpush1.bf16.msra.mxu0 %v2929
    %2979 = vmatprep.subr.bf16.mxu0 %v2933
    %2980 = vmatpush1.bf16.msra.mxu0 %v2932
    %2981 = vmatprep.subr.bf16.mxu0 %v2936
    %2982 = vmatpush1.bf16.msra.mxu0 %v2935
    %2983 = vmatprep.subr.bf16.mxu0 %v2939
    %2984 = vmatpush1.bf16.msra.mxu0 %v2938
    %2985 = vmatprep.subr.bf16.mxu0 %v2942
    %2986 = vmatpush1.bf16.msra.mxu0 %v2941
    %2987 = vmatprep.subr.bf16.mxu0 %v2945
    %2988 = vmatpush1.bf16.msra.mxu0 %v2944
    %2989 = vmatprep.subr.bf16.mxu0 %v2948
    %2990 = vmatpush1.bf16.msra.mxu0 %v2947
    %2991 = vmatprep.subr.bf16.mxu0 %v2951
    %2992 = vmatpush1.bf16.msra.mxu0 %v2950
    %2993 = vmatprep.subr.bf16.mxu0 0
    %2994 = vmatpush1.bf16.msra.mxu0 0
    %2995 = vmatprep.subr.bf16.mxu0 0
    %2996 = vmatpush1.bf16.msra.mxu0 0
    %2997 = vmatprep.subr.bf16.mxu0 0
    %2998 = vmatpush1.bf16.msra.mxu0 0
    %2999 = vmatprep.subr.bf16.mxu0 0
    %3000 = vmatpush1.bf16.msra.mxu0 0
    %3001 = vmatprep.subr.bf16.mxu0 0
    %3002 = vmatpush1.bf16.msra.mxu0 0
    %3003 = vmatprep.subr.bf16.mxu0 0
    %3004 = vmatpush1.bf16.msra.mxu0 0
    %3005 = vmatprep.subr.bf16.mxu0 0
    %3006 = vmatpush1.bf16.msra.mxu0 0
    %3007 = vmatprep.subr.bf16.mxu0 0
    %3008 = vmatpush1.bf16.msra.mxu0 0
    %3009 = vmatprep.mubr.bf16.mxu0 0
    %3010 = vmatmul.mubr.bf16.gmra.mrb[0].mxu0 0
    %v3011 = vpop.f32.mrb[0].mxu0
    %v3012 = vadd.f32 0.0, %v3011
    %v3013 = vpop.f32.mrb[0].mxu0
    %v3014 = vadd.f32 0.0, %v3013
    %v3015 = vpop.f32.mrb[0].mxu0
    %v3016 = vpop.f32.mrb[0].mxu0
    %3017 = vdwg.mxu0
    %3018 = vmatprep.subr.bf16.mxu0 0
    %3019 = vmatpush1.bf16.msra.mxu0 %v2931
    %3020 = vmatprep.subr.bf16.mxu0 0
    %3021 = vmatpush1.bf16.msra.mxu0 %v2934
    %3022 = vmatprep.subr.bf16.mxu0 0
    %3023 = vmatpush1.bf16.msra.mxu0 %v2937
    %3024 = vmatprep.subr.bf16.mxu0 0
    %3025 = vmatpush1.bf16.msra.mxu0 %v2940
    %3026 = vmatprep.subr.bf16.mxu0 0
    %3027 = vmatpush1.bf16.msra.mxu0 %v2943
    %3028 = vmatprep.subr.bf16.mxu0 0
    %3029 = vmatpush1.bf16.msra.mxu0 %v2946
    %3030 = vmatprep.subr.bf16.mxu0 0
    %3031 = vmatpush1.bf16.msra.mxu0 %v2949
    %3032 = vmatprep.subr.bf16.mxu0 0
    %3033 = vmatpush1.bf16.msra.mxu0 %v2952
    %3034 = vmatprep.subr.bf16.mxu0 0
    %3035 = vmatpush1.bf16.msra.mxu0 0
    %3036 = vmatprep.subr.bf16.mxu0 0
    %3037 = vmatpush1.bf16.msra.mxu0 0
    %3038 = vmatprep.subr.bf16.mxu0 0
    %3039 = vmatpush1.bf16.msra.mxu0 0
    %3040 = vmatprep.subr.bf16.mxu0 0
    %3041 = vmatpush1.bf16.msra.mxu0 0
    %3042 = vmatprep.subr.bf16.mxu0 0
    %3043 = vmatpush1.bf16.msra.mxu0 0
    %3044 = vmatprep.subr.bf16.mxu0 0
    %3045 = vmatpush1.bf16.msra.mxu0 0
    %3046 = vmatprep.subr.bf16.mxu0 0
    %3047 = vmatpush1.bf16.msra.mxu0 0
    %3048 = vmatprep.subr.bf16.mxu0 0
    %3049 = vmatpush1.bf16.msra.mxu0 0
    %3050 = vmatprep.mubr.bf16.mxu0 0
    %3051 = vmatmul.mubr.bf16.gmra.mrb[0].mxu0 0
    %v3052 = vpop.f32.mrb[0].mxu0
    %v3053 = vadd.f32 0.0, %v3052
    %v3054 = vpop.f32.mrb[0].mxu0
    %v3055 = vpop.f32.mrb[0].mxu0
    %v3056 = vpop.f32.mrb[0].mxu0
    %3057 = vdwg.mxu0
    %v3058 = vadd.f32 %v2814, %v3012
    %v3059 = vadd.f32 %v2815, %v3014
    %v3060 = vxor.u32 %v3058, 2147483648
    %v3061 = vxor.u32 %v3059, 2147483648
    %v3062 = vmul.f32 %v3060, 1.442695
    %v3063 = vpow.pop %v3062
    %v3064 = vmul.f32 %v3061, 1.442695
    %v3065 = vpow.pop %v3064
    %v3066 = vadd.f32 %v3063, 1.0
    %v3067 = vadd.f32 %v3065, 1.0
    %v3068 = vrcp.pop %v3066
    %v3069 = vmul.f32 1.0, %v3068
    %v3070 = vrcp.pop %v3067
    %v3071 = vmul.f32 1.0, %v3070
    %v3073 = vlaneseq
    %v3074 = vshrl.u32 %v3073, 7
    %v3075 = vsub.s32 0, %v3074
    %v3076 = vrot.slane %v2813, %v3075
    %v3078 = vadd.f32 %v3053, %v3076
    %v3079 = vmul.f32 %v3069, %v3078
    %v3080 = vadd.f32 %v2816, %v3079
    %v3081 = vtanh.pop %v3080
    %v3082 = vsub.f32 0.0, %v3081
    %v3083 = vmul.f32 %v3071, %v3082
    %v3084 = vadd.f32 %v3081, %v3083
    %3085 = vst [vmem:[#allocation10] sm:$0xff] %v3084
    %v3086 = vld [vmem:[#allocation2 + $0x18] sm:$0xff]
    %v3087 = vld [vmem:[#allocation2 + $0x20] sm:$0xff]
    %v3088 = vld [vmem:[#allocation2 + $0x28] sm:$0xff]
    %v3089 = vpack.c.bf16 %v3084, %v3084
    %v3090 = vld [vmem:[#allocation9] sm:$0xff]
    %v3091 = vld [vmem:[#allocation9 + $0x8] sm:$0xf]
    %v3092 = vld [vmem:[#allocation9 + $0xc] sm:$0xff]
    %v3093 = vld [vmem:[#allocation9 + $0x14] sm:$0xf]
    %v3094 = vld [vmem:[#allocation9 + $0x18] sm:$0xff]
    %v3095 = vld [vmem:[#allocation9 + $0x20] sm:$0xf]
    %v3096 = vld [vmem:[#allocation9 + $0x24] sm:$0xff]
    %v3097 = vld [vmem:[#allocation9 + $0x2c] sm:$0xf]
    %v3098 = vld [vmem:[#allocation9 + $0x30] sm:$0xff]
    %v3099 = vld [vmem:[#allocation9 + $0x38] sm:$0xf]
    %v3100 = vld [vmem:[#allocation9 + $0x3c] sm:$0xff]
    %v3101 = vld [vmem:[#allocation9 + $0x44] sm:$0xf]
    %v3102 = vld [vmem:[#allocation9 + $0x48] sm:$0xff]
    %v3103 = vld [vmem:[#allocation9 + $0x50] sm:$0xf]
    %v3104 = vld [vmem:[#allocation9 + $0x54] sm:$0xff]
    %v3105 = vld [vmem:[#allocation9 + $0x5c] sm:$0xf]
    %v3106 = vld [vmem:[#allocation9 + $0x60] sm:$0xff]
    %v3107 = vld [vmem:[#allocation9 + $0x68] sm:$0xf]
    %v3108 = vld [vmem:[#allocation9 + $0x6c] sm:$0xff]
    %v3109 = vld [vmem:[#allocation9 + $0x74] sm:$0xf]
    %v3110 = vld [vmem:[#allocation9 + $0x78] sm:$0xff]
    %v3111 = vld [vmem:[#allocation9 + $0x80] sm:$0xf]
    %v3112 = vld [vmem:[#allocation9 + $0x84] sm:$0xff]
    %v3113 = vld [vmem:[#allocation9 + $0x8c] sm:$0xf]
    %v3114 = vld [vmem:[#allocation9 + $0x90] sm:$0xff]
    %v3115 = vld [vmem:[#allocation9 + $0x98] sm:$0xf]
    %v3116 = vld [vmem:[#allocation9 + $0x9c] sm:$0xff]
    %v3117 = vld [vmem:[#allocation9 + $0xa4] sm:$0xf]
    %v3118 = vld [vmem:[#allocation9 + $0xa8] sm:$0xff]
    %v3119 = vld [vmem:[#allocation9 + $0xb0] sm:$0xf]
    %v3120 = vld [vmem:[#allocation9 + $0xb4] sm:$0xff]
    %v3121 = vld [vmem:[#allocation9 + $0xbc] sm:$0xf]
    %v3154 = vunpack.c.l.b16 %v3090
    %v3155 = vunpack.c.h.b16 %v3090
    %v3156 = vunpack.c.l.b16 %v3091
    %v3157 = vunpack.c.l.b16 %v3092
    %v3158 = vunpack.c.h.b16 %v3092
    %v3159 = vunpack.c.l.b16 %v3093
    %v3160 = vunpack.c.l.b16 %v3094
    %v3161 = vunpack.c.h.b16 %v3094
    %v3162 = vunpack.c.l.b16 %v3095
    %v3163 = vunpack.c.l.b16 %v3096
    %v3164 = vunpack.c.h.b16 %v3096
    %v3165 = vunpack.c.l.b16 %v3097
    %v3166 = vunpack.c.l.b16 %v3098
    %v3167 = vunpack.c.h.b16 %v3098
    %v3168 = vunpack.c.l.b16 %v3099
    %v3169 = vunpack.c.l.b16 %v3100
    %v3170 = vunpack.c.h.b16 %v3100
    %v3171 = vunpack.c.l.b16 %v3101
    %v3172 = vunpack.c.l.b16 %v3102
    %v3173 = vunpack.c.h.b16 %v3102
    %v3174 = vunpack.c.l.b16 %v3103
    %v3175 = vunpack.c.l.b16 %v3104
    %v3176 = vunpack.c.h.b16 %v3104
    %v3177 = vunpack.c.l.b16 %v3105
    %v3178 = vunpack.c.l.b16 %v3106
    %v3179 = vunpack.c.h.b16 %v3106
    %v3180 = vunpack.c.l.b16 %v3107
    %v3181 = vunpack.c.l.b16 %v3108
    %v3182 = vunpack.c.h.b16 %v3108
    %v3183 = vunpack.c.l.b16 %v3109
    %v3184 = vunpack.c.l.b16 %v3110
    %v3185 = vunpack.c.h.b16 %v3110
    %v3186 = vunpack.c.l.b16 %v3111
    %v3187 = vunpack.c.l.b16 %v3112
    %v3188 = vunpack.c.h.b16 %v3112
    %v3189 = vunpack.c.l.b16 %v3113
    %v3190 = vunpack.c.l.b16 %v3114
    %v3191 = vunpack.c.h.b16 %v3114
    %v3192 = vunpack.c.l.b16 %v3115
    %v3193 = vunpack.c.l.b16 %v3116
    %v3194 = vunpack.c.h.b16 %v3116
    %v3195 = vunpack.c.l.b16 %v3117
    %v3196 = vunpack.c.l.b16 %v3118
    %v3197 = vunpack.c.h.b16 %v3118
    %v3198 = vunpack.c.l.b16 %v3119
    %v3199 = vunpack.c.l.b16 %v3120
    %v3200 = vunpack.c.h.b16 %v3120
    %v3201 = vunpack.c.l.b16 %v3121
    %v3202 = vpack.c.b16 %v3157, %v3154
    %v3203 = vpack.c.b16 %v3158, %v3155
    %v3204 = vpack.c.b16 %v3159, %v3156
    %v3205 = vpack.c.b16 %v3163, %v3160
    %v3206 = vpack.c.b16 %v3164, %v3161
    %v3207 = vpack.c.b16 %v3165, %v3162
    %v3208 = vpack.c.b16 %v3169, %v3166
    %v3209 = vpack.c.b16 %v3170, %v3167
    %v3210 = vpack.c.b16 %v3171, %v3168
    %v3211 = vpack.c.b16 %v3175, %v3172
    %v3212 = vpack.c.b16 %v3176, %v3173
    %v3213 = vpack.c.b16 %v3177, %v3174
    %v3214 = vpack.c.b16 %v3181, %v3178
    %v3215 = vpack.c.b16 %v3182, %v3179
    %v3216 = vpack.c.b16 %v3183, %v3180
    %v3217 = vpack.c.b16 %v3187, %v3184
    %v3218 = vpack.c.b16 %v3188, %v3185
    %v3219 = vpack.c.b16 %v3189, %v3186
    %v3220 = vpack.c.b16 %v3193, %v3190
    %v3221 = vpack.c.b16 %v3194, %v3191
    %v3222 = vpack.c.b16 %v3195, %v3192
    %v3223 = vpack.c.b16 %v3199, %v3196
    %v3224 = vpack.c.b16 %v3200, %v3197
    %v3225 = vpack.c.b16 %v3201, %v3198
    %3250 = vmatprep.subr.bf16.mxu0 %v3203
    %3251 = vmatpush1.bf16.msra.mxu0 %v3202
    %3252 = vmatprep.subr.bf16.mxu0 %v3206
    %3253 = vmatpush1.bf16.msra.mxu0 %v3205
    %3254 = vmatprep.subr.bf16.mxu0 %v3209
    %3255 = vmatpush1.bf16.msra.mxu0 %v3208
    %3256 = vmatprep.subr.bf16.mxu0 %v3212
    %3257 = vmatpush1.bf16.msra.mxu0 %v3211
    %3258 = vmatprep.subr.bf16.mxu0 %v3215
    %3259 = vmatpush1.bf16.msra.mxu0 %v3214
    %3260 = vmatprep.subr.bf16.mxu0 %v3218
    %3261 = vmatpush1.bf16.msra.mxu0 %v3217
    %3262 = vmatprep.subr.bf16.mxu0 %v3221
    %3263 = vmatpush1.bf16.msra.mxu0 %v3220
    %3264 = vmatprep.subr.bf16.mxu0 %v3224
    %3265 = vmatpush1.bf16.msra.mxu0 %v3223
    %3266 = vmatprep.subr.bf16.mxu0 0
    %3267 = vmatpush1.bf16.msra.mxu0 0
    %3268 = vmatprep.subr.bf16.mxu0 0
    %3269 = vmatpush1.bf16.msra.mxu0 0
    %3270 = vmatprep.subr.bf16.mxu0 0
    %3271 = vmatpush1.bf16.msra.mxu0 0
    %3272 = vmatprep.subr.bf16.mxu0 0
    %3273 = vmatpush1.bf16.msra.mxu0 0
    %3274 = vmatprep.subr.bf16.mxu0 0
    %3275 = vmatpush1.bf16.msra.mxu0 0
    %3276 = vmatprep.subr.bf16.mxu0 0
    %3277 = vmatpush1.bf16.msra.mxu0 0
    %3278 = vmatprep.subr.bf16.mxu0 0
    %3279 = vmatpush1.bf16.msra.mxu0 0
    %3280 = vmatprep.subr.bf16.mxu0 0
    %3281 = vmatpush1.bf16.msra.mxu0 0
    %3282 = vmatprep.mubr.bf16.mxu0 0
    %3283 = vmatmul.mubr.bf16.gmra.mrb[0].mxu0 %v3089
    %v3284 = vpop.f32.mrb[0].mxu0
    %v3285 = vadd.f32 0.0, %v3284
    %v3286 = vpop.f32.mrb[0].mxu0
    %v3287 = vadd.f32 0.0, %v3286
    %v3288 = vpop.f32.mrb[0].mxu0
    %v3289 = vpop.f32.mrb[0].mxu0
    %3290 = vdwg.mxu0
    %3291 = vmatprep.subr.bf16.mxu0 0
    %3292 = vmatpush1.bf16.msra.mxu0 %v3204
    %3293 = vmatprep.subr.bf16.mxu0 0
    %3294 = vmatpush1.bf16.msra.mxu0 %v3207
    %3295 = vmatprep.subr.bf16.mxu0 0
    %3296 = vmatpush1.bf16.msra.mxu0 %v3210
    %3297 = vmatprep.subr.bf16.mxu0 0
    %3298 = vmatpush1.bf16.msra.mxu0 %v3213
    %3299 = vmatprep.subr.bf16.mxu0 0
    %3300 = vmatpush1.bf16.msra.mxu0 %v3216
    %3301 = vmatprep.subr.bf16.mxu0 0
    %3302 = vmatpush1.bf16.msra.mxu0 %v3219
    %3303 = vmatprep.subr.bf16.mxu0 0
    %3304 = vmatpush1.bf16.msra.mxu0 %v3222
    %3305 = vmatprep.subr.bf16.mxu0 0
    %3306 = vmatpush1.bf16.msra.mxu0 %v3225
    %3307 = vmatprep.subr.bf16.mxu0 0
    %3308 = vmatpush1.bf16.msra.mxu0 0
    %3309 = vmatprep.subr.bf16.mxu0 0
    %3310 = vmatpush1.bf16.msra.mxu0 0
    %3311 = vmatprep.subr.bf16.mxu0 0
    %3312 = vmatpush1.bf16.msra.mxu0 0
    %3313 = vmatprep.subr.bf16.mxu0 0
    %3314 = vmatpush1.bf16.msra.mxu0 0
    %3315 = vmatprep.subr.bf16.mxu0 0
    %3316 = vmatpush1.bf16.msra.mxu0 0
    %3317 = vmatprep.subr.bf16.mxu0 0
    %3318 = vmatpush1.bf16.msra.mxu0 0
    %3319 = vmatprep.subr.bf16.mxu0 0
    %3320 = vmatpush1.bf16.msra.mxu0 0
    %3321 = vmatprep.subr.bf16.mxu0 0
    %3322 = vmatpush1.bf16.msra.mxu0 0
    %3323 = vmatprep.mubr.bf16.mxu0 0
    %3324 = vmatmul.mubr.bf16.gmra.mrb[0].mxu0 %v3089
    %v3325 = vpop.f32.mrb[0].mxu0
    %v3326 = vadd.f32 0.0, %v3325
    %v3327 = vpop.f32.mrb[0].mxu0
    %v3328 = vpop.f32.mrb[0].mxu0
    %v3329 = vpop.f32.mrb[0].mxu0
    %3330 = vdwg.mxu0
    %v3331 = vadd.f32 %v3086, %v3285
    %v3332 = vadd.f32 %v3087, %v3287
    %v3333 = vxor.u32 %v3331, 2147483648
    %v3334 = vxor.u32 %v3332, 2147483648
    %v3335 = vmul.f32 %v3333, 1.442695
    %v3336 = vpow.pop %v3335
    %v3337 = vmul.f32 %v3334, 1.442695
    %v3338 = vpow.pop %v3337
    %v3339 = vadd.f32 %v3336, 1.0
    %v3340 = vadd.f32 %v3338, 1.0
    %v3341 = vrcp.pop %v3339
    %v3342 = vmul.f32 1.0, %v3341
    %v3343 = vrcp.pop %v3340
    %v3344 = vmul.f32 1.0, %v3343
    %v3345 = vadd.f32 %v3326, %v3076
    %v3346 = vmul.f32 %v3342, %v3345
    %v3347 = vadd.f32 %v3088, %v3346
    %v3348 = vtanh.pop %v3347
    %v3349 = vsub.f32 %v3084, %v3348
    %v3350 = vmul.f32 %v3344, %v3349
    %v3351 = vadd.f32 %v3348, %v3350
    %3352 = vst [vmem:[#allocation10 + $0x8] sm:$0xff] %v3351
    %v3353 = vld [vmem:[#allocation2 + $0x30] sm:$0xff]
    %v3354 = vld [vmem:[#allocation2 + $0x38] sm:$0xff]
    %v3355 = vld [vmem:[#allocation2 + $0x40] sm:$0xff]
    %v3356 = vpack.c.bf16 %v3351, %v3351
    %v3357 = vld [vmem:[#allocation9] sm:$0xff]
    %v3358 = vld [vmem:[#allocation9 + $0x8] sm:$0xf]
    %v3359 = vld [vmem:[#allocation9 + $0xc] sm:$0xff]
    %v3360 = vld [vmem:[#allocation9 + $0x14] sm:$0xf]
    %v3361 = vld [vmem:[#allocation9 + $0x18] sm:$0xff]
    %v3362 = vld [vmem:[#allocation9 + $0x20] sm:$0xf]
    %v3363 = vld [vmem:[#allocation9 + $0x24] sm:$0xff]
    %v3364 = vld [vmem:[#allocation9 + $0x2c] sm:$0xf]
    %v3365 = vld [vmem:[#allocation9 + $0x30] sm:$0xff]
    %v3366 = vld [vmem:[#allocation9 + $0x38] sm:$0xf]
    %v3367 = vld [vmem:[#allocation9 + $0x3c] sm:$0xff]
    %v3368 = vld [vmem:[#allocation9 + $0x44] sm:$0xf]
    %v3369 = vld [vmem:[#allocation9 + $0x48] sm:$0xff]
    %v3370 = vld [vmem:[#allocation9 + $0x50] sm:$0xf]
    %v3371 = vld [vmem:[#allocation9 + $0x54] sm:$0xff]
    %v3372 = vld [vmem:[#allocation9 + $0x5c] sm:$0xf]
    %v3373 = vld [vmem:[#allocation9 + $0x60] sm:$0xff]
    %v3374 = vld [vmem:[#allocation9 + $0x68] sm:$0xf]
    %v3375 = vld [vmem:[#allocation9 + $0x6c] sm:$0xff]
    %v3376 = vld [vmem:[#allocation9 + $0x74] sm:$0xf]
    %v3377 = vld [vmem:[#allocation9 + $0x78] sm:$0xff]
    %v3378 = vld [vmem:[#allocation9 + $0x80] sm:$0xf]
    %v3379 = vld [vmem:[#allocation9 + $0x84] sm:$0xff]
    %v3380 = vld [vmem:[#allocation9 + $0x8c] sm:$0xf]
    %v3381 = vld [vmem:[#allocation9 + $0x90] sm:$0xff]
    %v3382 = vld [vmem:[#allocation9 + $0x98] sm:$0xf]
    %v3383 = vld [vmem:[#allocation9 + $0x9c] sm:$0xff]
    %v3384 = vld [vmem:[#allocation9 + $0xa4] sm:$0xf]
    %v3385 = vld [vmem:[#allocation9 + $0xa8] sm:$0xff]
    %v3386 = vld [vmem:[#allocation9 + $0xb0] sm:$0xf]
    %v3387 = vld [vmem:[#allocation9 + $0xb4] sm:$0xff]
    %v3388 = vld [vmem:[#allocation9 + $0xbc] sm:$0xf]
    %v3421 = vunpack.c.l.b16 %v3357
    %v3422 = vunpack.c.h.b16 %v3357
    %v3423 = vunpack.c.l.b16 %v3358
    %v3424 = vunpack.c.l.b16 %v3359
    %v3425 = vunpack.c.h.b16 %v3359
    %v3426 = vunpack.c.l.b16 %v3360
    %v3427 = vunpack.c.l.b16 %v3361
    %v3428 = vunpack.c.h.b16 %v3361
    %v3429 = vunpack.c.l.b16 %v3362
    %v3430 = vunpack.c.l.b16 %v3363
    %v3431 = vunpack.c.h.b16 %v3363
    %v3432 = vunpack.c.l.b16 %v3364
    %v3433 = vunpack.c.l.b16 %v3365
    %v3434 = vunpack.c.h.b16 %v3365
    %v3435 = vunpack.c.l.b16 %v3366
    %v3436 = vunpack.c.l.b16 %v3367
    %v3437 = vunpack.c.h.b16 %v3367
    %v3438 = vunpack.c.l.b16 %v3368
    %v3439 = vunpack.c.l.b16 %v3369
    %v3440 = vunpack.c.h.b16 %v3369
    %v3441 = vunpack.c.l.b16 %v3370
    %v3442 = vunpack.c.l.b16 %v3371
    %v3443 = vunpack.c.h.b16 %v3371
    %v3444 = vunpack.c.l.b16 %v3372
    %v3445 = vunpack.c.l.b16 %v3373
    %v3446 = vunpack.c.h.b16 %v3373
    %v3447 = vunpack.c.l.b16 %v3374
    %v3448 = vunpack.c.l.b16 %v3375
    %v3449 = vunpack.c.h.b16 %v3375
    %v3450 = vunpack.c.l.b16 %v3376
    %v3451 = vunpack.c.l.b16 %v3377
    %v3452 = vunpack.c.h.b16 %v3377
    %v3453 = vunpack.c.l.b16 %v3378
    %v3454 = vunpack.c.l.b16 %v3379
    %v3455 = vunpack.c.h.b16 %v3379
    %v3456 = vunpack.c.l.b16 %v3380
    %v3457 = vunpack.c.l.b16 %v3381
    %v3458 = vunpack.c.h.b16 %v3381
    %v3459 = vunpack.c.l.b16 %v3382
    %v3460 = vunpack.c.l.b16 %v3383
    %v3461 = vunpack.c.h.b16 %v3383
    %v3462 = vunpack.c.l.b16 %v3384
    %v3463 = vunpack.c.l.b16 %v3385
    %v3464 = vunpack.c.h.b16 %v3385
    %v3465 = vunpack.c.l.b16 %v3386
    %v3466 = vunpack.c.l.b16 %v3387
    %v3467 = vunpack.c.h.b16 %v3387
    %v3468 = vunpack.c.l.b16 %v3388
    %v3469 = vpack.c.b16 %v3424, %v3421
    %v3470 = vpack.c.b16 %v3425, %v3422
    %v3471 = vpack.c.b16 %v3426, %v3423
    %v3472 = vpack.c.b16 %v3430, %v3427
    %v3473 = vpack.c.b16 %v3431, %v3428
    %v3474 = vpack.c.b16 %v3432, %v3429
    %v3475 = vpack.c.b16 %v3436, %v3433
    %v3476 = vpack.c.b16 %v3437, %v3434
    %v3477 = vpack.c.b16 %v3438, %v3435
    %v3478 = vpack.c.b16 %v3442, %v3439
    %v3479 = vpack.c.b16 %v3443, %v3440
    %v3480 = vpack.c.b16 %v3444, %v3441
    %v3481 = vpack.c.b16 %v3448, %v3445
    %v3482 = vpack.c.b16 %v3449, %v3446
    %v3483 = vpack.c.b16 %v3450, %v3447
    %v3484 = vpack.c.b16 %v3454, %v3451
    %v3485 = vpack.c.b16 %v3455, %v3452
    %v3486 = vpack.c.b16 %v3456, %v3453
    %v3487 = vpack.c.b16 %v3460, %v3457
    %v3488 = vpack.c.b16 %v3461, %v3458
    %v3489 = vpack.c.b16 %v3462, %v3459
    %v3490 = vpack.c.b16 %v3466, %v3463
    %v3491 = vpack.c.b16 %v3467, %v3464
    %v3492 = vpack.c.b16 %v3468, %v3465
    %3517 = vmatprep.subr.bf16.mxu0 %v3470
    %3518 = vmatpush1.bf16.msra.mxu0 %v3469
    %3519 = vmatprep.subr.bf16.mxu0 %v3473
    %3520 = vmatpush1.bf16.msra.mxu0 %v3472
    %3521 = vmatprep.subr.bf16.mxu0 %v3476
    %3522 = vmatpush1.bf16.msra.mxu0 %v3475
    %3523 = vmatprep.subr.bf16.mxu0 %v3479
    %3524 = vmatpush1.bf16.msra.mxu0 %v3478
    %3525 = vmatprep.subr.bf16.mxu0 %v3482
    %3526 = vmatpush1.bf16.msra.mxu0 %v3481
    %3527 = vmatprep.subr.bf16.mxu0 %v3485
    %3528 = vmatpush1.bf16.msra.mxu0 %v3484
    %3529 = vmatprep.subr.bf16.mxu0 %v3488
    %3530 = vmatpush1.bf16.msra.mxu0 %v3487
    %3531 = vmatprep.subr.bf16.mxu0 %v3491
    %3532 = vmatpush1.bf16.msra.mxu0 %v3490
    %3533 = vmatprep.subr.bf16.mxu0 0
    %3534 = vmatpush1.bf16.msra.mxu0 0
    %3535 = vmatprep.subr.bf16.mxu0 0
    %3536 = vmatpush1.bf16.msra.mxu0 0
    %3537 = vmatprep.subr.bf16.mxu0 0
    %3538 = vmatpush1.bf16.msra.mxu0 0
    %3539 = vmatprep.subr.bf16.mxu0 0
    %3540 = vmatpush1.bf16.msra.mxu0 0
    %3541 = vmatprep.subr.bf16.mxu0 0
    %3542 = vmatpush1.bf16.msra.mxu0 0
    %3543 = vmatprep.subr.bf16.mxu0 0
    %3544 = vmatpush1.bf16.msra.mxu0 0
    %3545 = vmatprep.subr.bf16.mxu0 0
    %3546 = vmatpush1.bf16.msra.mxu0 0
    %3547 = vmatprep.subr.bf16.mxu0 0
    %3548 = vmatpush1.bf16.msra.mxu0 0
    %3549 = vmatprep.mubr.bf16.mxu0 0
    %3550 = vmatmul.mubr.bf16.gmra.mrb[0].mxu0 %v3356
    %v3551 = vpop.f32.mrb[0].mxu0
    %v3552 = vadd.f32 0.0, %v3551
    %v3553 = vpop.f32.mrb[0].mxu0
    %v3554 = vadd.f32 0.0, %v3553
    %v3555 = vpop.f32.mrb[0].mxu0
    %v3556 = vpop.f32.mrb[0].mxu0
    %3557 = vdwg.mxu0
    %3558 = vmatprep.subr.bf16.mxu0 0
    %3559 = vmatpush1.bf16.msra.mxu0 %v3471
    %3560 = vmatprep.subr.bf16.mxu0 0
    %3561 = vmatpush1.bf16.msra.mxu0 %v3474
    %3562 = vmatprep.subr.bf16.mxu0 0
    %3563 = vmatpush1.bf16.msra.mxu0 %v3477
    %3564 = vmatprep.subr.bf16.mxu0 0
    %3565 = vmatpush1.bf16.msra.mxu0 %v3480
    %3566 = vmatprep.subr.bf16.mxu0 0
    %3567 = vmatpush1.bf16.msra.mxu0 %v3483
    %3568 = vmatprep.subr.bf16.mxu0 0
    %3569 = vmatpush1.bf16.msra.mxu0 %v3486
    %3570 = vmatprep.subr.bf16.mxu0 0
    %3571 = vmatpush1.bf16.msra.mxu0 %v3489
    %3572 = vmatprep.subr.bf16.mxu0 0
    %3573 = vmatpush1.bf16.msra.mxu0 %v3492
    %3574 = vmatprep.subr.bf16.mxu0 0
    %3575 = vmatpush1.bf16.msra.mxu0 0
    %3576 = vmatprep.subr.bf16.mxu0 0
    %3577 = vmatpush1.bf16.msra.mxu0 0
    %3578 = vmatprep.subr.bf16.mxu0 0
    %3579 = vmatpush1.bf16.msra.mxu0 0
    %3580 = vmatprep.subr.bf16.mxu0 0
    %3581 = vmatpush1.bf16.msra.mxu0 0
    %3582 = vmatprep.subr.bf16.mxu0 0
    %3583 = vmatpush1.bf16.msra.mxu0 0
    %3584 = vmatprep.subr.bf16.mxu0 0
    %3585 = vmatpush1.bf16.msra.mxu0 0
    %3586 = vmatprep.subr.bf16.mxu0 0
    %3587 = vmatpush1.bf16.msra.mxu0 0
    %3588 = vmatprep.subr.bf16.mxu0 0
    %3589 = vmatpush1.bf16.msra.mxu0 0
    %3590 = vmatprep.mubr.bf16.mxu0 0
    %3591 = vmatmul.mubr.bf16.gmra.mrb[0].mxu0 %v3356
    %v3592 = vpop.f32.mrb[0].mxu0
    %v3593 = vadd.f32 0.0, %v3592
    %v3594 = vpop.f32.mrb[0].mxu0
    %v3595 = vpop.f32.mrb[0].mxu0
    %v3596 = vpop.f32.mrb[0].mxu0
    %3597 = vdwg.mxu0
    %v3598 = vadd.f32 %v3353, %v3552
    %v3599 = vadd.f32 %v3354, %v3554
    %v3600 = vxor.u32 %v3598, 2147483648
    %v3601 = vxor.u32 %v3599, 2147483648
    %v3602 = vmul.f32 %v3600, 1.442695
    %v3603 = vpow.pop %v3602
    %v3604 = vmul.f32 %v3601, 1.442695
    %v3605 = vpow.pop %v3604
    %v3606 = vadd.f32 %v3603, 1.0
    %v3607 = vadd.f32 %v3605, 1.0
    %v3608 = vrcp.pop %v3606
    %v3609 = vmul.f32 1.0, %v3608
    %v3610 = vrcp.pop %v3607
    %v3611 = vmul.f32 1.0, %v3610
    %v3612 = vadd.f32 %v3593, %v3076
    %v3613 = vmul.f32 %v3609, %v3612
    %v3614 = vadd.f32 %v3355, %v3613
    %v3615 = vtanh.pop %v3614
    %v3616 = vsub.f32 %v3351, %v3615
    %v3617 = vmul.f32 %v3611, %v3616
    %v3618 = vadd.f32 %v3615, %v3617
    %3619 = vst [vmem:[#allocation10 + $0x10] sm:$0xff] %v3618
    %v3620 = vld [vmem:[#allocation2 + $0x48] sm:$0xff]
    %v3621 = vld [vmem:[#allocation2 + $0x50] sm:$0xff]
    %v3622 = vld [vmem:[#allocation2 + $0x58] sm:$0xff]
    %v3623 = vpack.c.bf16 %v3618, %v3618
    %v3624 = vld [vmem:[#allocation9] sm:$0xff]
    %v3625 = vld [vmem:[#allocation9 + $0x8] sm:$0xf]
    %v3626 = vld [vmem:[#allocation9 + $0xc] sm:$0xff]
    %v3627 = vld [vmem:[#allocation9 + $0x14] sm:$0xf]
    %v3628 = vld [vmem:[#allocation9 + $0x18] sm:$0xff]
    %v3629 = vld [vmem:[#allocation9 + $0x20] sm:$0xf]
    %v3630 = vld [vmem:[#allocation9 + $0x24] sm:$0xff]
    %v3631 = vld [vmem:[#allocation9 + $0x2c] sm:$0xf]
    %v3632 = vld [vmem:[#allocation9 + $0x30] sm:$0xff]
    %v3633 = vld [vmem:[#allocation9 + $0x38] sm:$0xf]
    %v3634 = vld [vmem:[#allocation9 + $0x3c] sm:$0xff]
    %v3635 = vld [vmem:[#allocation9 + $0x44] sm:$0xf]
    %v3636 = vld [vmem:[#allocation9 + $0x48] sm:$0xff]
    %v3637 = vld [vmem:[#allocation9 + $0x50] sm:$0xf]
    %v3638 = vld [vmem:[#allocation9 + $0x54] sm:$0xff]
    %v3639 = vld [vmem:[#allocation9 + $0x5c] sm:$0xf]
    %v3640 = vld [vmem:[#allocation9 + $0x60] sm:$0xff]
    %v3641 = vld [vmem:[#allocation9 + $0x68] sm:$0xf]
    %v3642 = vld [vmem:[#allocation9 + $0x6c] sm:$0xff]
    %v3643 = vld [vmem:[#allocation9 + $0x74] sm:$0xf]
    %v3644 = vld [vmem:[#allocation9 + $0x78] sm:$0xff]
    %v3645 = vld [vmem:[#allocation9 + $0x80] sm:$0xf]
    %v3646 = vld [vmem:[#allocation9 + $0x84] sm:$0xff]
    %v3647 = vld [vmem:[#allocation9 + $0x8c] sm:$0xf]
    %v3648 = vld [vmem:[#allocation9 + $0x90] sm:$0xff]
    %v3649 = vld [vmem:[#allocation9 + $0x98] sm:$0xf]
    %v3650 = vld [vmem:[#allocation9 + $0x9c] sm:$0xff]
    %v3651 = vld [vmem:[#allocation9 + $0xa4] sm:$0xf]
    %v3652 = vld [vmem:[#allocation9 + $0xa8] sm:$0xff]
    %v3653 = vld [vmem:[#allocation9 + $0xb0] sm:$0xf]
    %v3654 = vld [vmem:[#allocation9 + $0xb4] sm:$0xff]
    %v3655 = vld [vmem:[#allocation9 + $0xbc] sm:$0xf]
    %v3688 = vunpack.c.l.b16 %v3624
    %v3689 = vunpack.c.h.b16 %v3624
    %v3690 = vunpack.c.l.b16 %v3625
    %v3691 = vunpack.c.l.b16 %v3626
    %v3692 = vunpack.c.h.b16 %v3626
    %v3693 = vunpack.c.l.b16 %v3627
    %v3694 = vunpack.c.l.b16 %v3628
    %v3695 = vunpack.c.h.b16 %v3628
    %v3696 = vunpack.c.l.b16 %v3629
    %v3697 = vunpack.c.l.b16 %v3630
    %v3698 = vunpack.c.h.b16 %v3630
    %v3699 = vunpack.c.l.b16 %v3631
    %v3700 = vunpack.c.l.b16 %v3632
    %v3701 = vunpack.c.h.b16 %v3632
    %v3702 = vunpack.c.l.b16 %v3633
    %v3703 = vunpack.c.l.b16 %v3634
    %v3704 = vunpack.c.h.b16 %v3634
    %v3705 = vunpack.c.l.b16 %v3635
    %v3706 = vunpack.c.l.b16 %v3636
    %v3707 = vunpack.c.h.b16 %v3636
    %v3708 = vunpack.c.l.b16 %v3637
    %v3709 = vunpack.c.l.b16 %v3638
    %v3710 = vunpack.c.h.b16 %v3638
    %v3711 = vunpack.c.l.b16 %v3639
    %v3712 = vunpack.c.l.b16 %v3640
    %v3713 = vunpack.c.h.b16 %v3640
    %v3714 = vunpack.c.l.b16 %v3641
    %v3715 = vunpack.c.l.b16 %v3642
    %v3716 = vunpack.c.h.b16 %v3642
    %v3717 = vunpack.c.l.b16 %v3643
    %v3718 = vunpack.c.l.b16 %v3644
    %v3719 = vunpack.c.h.b16 %v3644
    %v3720 = vunpack.c.l.b16 %v3645
    %v3721 = vunpack.c.l.b16 %v3646
    %v3722 = vunpack.c.h.b16 %v3646
    %v3723 = vunpack.c.l.b16 %v3647
    %v3724 = vunpack.c.l.b16 %v3648
    %v3725 = vunpack.c.h.b16 %v3648
    %v3726 = vunpack.c.l.b16 %v3649
    %v3727 = vunpack.c.l.b16 %v3650
    %v3728 = vunpack.c.h.b16 %v3650
    %v3729 = vunpack.c.l.b16 %v3651
    %v3730 = vunpack.c.l.b16 %v3652
    %v3731 = vunpack.c.h.b16 %v3652
    %v3732 = vunpack.c.l.b16 %v3653
    %v3733 = vunpack.c.l.b16 %v3654
    %v3734 = vunpack.c.h.b16 %v3654
    %v3735 = vunpack.c.l.b16 %v3655
    %v3736 = vpack.c.b16 %v3691, %v3688
    %v3737 = vpack.c.b16 %v3692, %v3689
    %v3738 = vpack.c.b16 %v3693, %v3690
    %v3739 = vpack.c.b16 %v3697, %v3694
    %v3740 = vpack.c.b16 %v3698, %v3695
    %v3741 = vpack.c.b16 %v3699, %v3696
    %v3742 = vpack.c.b16 %v3703, %v3700
    %v3743 = vpack.c.b16 %v3704, %v3701
    %v3744 = vpack.c.b16 %v3705, %v3702
    %v3745 = vpack.c.b16 %v3709, %v3706
    %v3746 = vpack.c.b16 %v3710, %v3707
    %v3747 = vpack.c.b16 %v3711, %v3708
    %v3748 = vpack.c.b16 %v3715, %v3712
    %v3749 = vpack.c.b16 %v3716, %v3713
    %v3750 = vpack.c.b16 %v3717, %v3714
    %v3751 = vpack.c.b16 %v3721, %v3718
    %v3752 = vpack.c.b16 %v3722, %v3719
    %v3753 = vpack.c.b16 %v3723, %v3720
    %v3754 = vpack.c.b16 %v3727, %v3724
    %v3755 = vpack.c.b16 %v3728, %v3725
    %v3756 = vpack.c.b16 %v3729, %v3726
    %v3757 = vpack.c.b16 %v3733, %v3730
    %v3758 = vpack.c.b16 %v3734, %v3731
    %v3759 = vpack.c.b16 %v3735, %v3732
    %3784 = vmatprep.subr.bf16.mxu0 %v3737
    %3785 = vmatpush1.bf16.msra.mxu0 %v3736
    %3786 = vmatprep.subr.bf16.mxu0 %v3740
    %3787 = vmatpush1.bf16.msra.mxu0 %v3739
    %3788 = vmatprep.subr.bf16.mxu0 %v3743
    %3789 = vmatpush1.bf16.msra.mxu0 %v3742
    %3790 = vmatprep.subr.bf16.mxu0 %v3746
    %3791 = vmatpush1.bf16.msra.mxu0 %v3745
    %3792 = vmatprep.subr.bf16.mxu0 %v3749
    %3793 = vmatpush1.bf16.msra.mxu0 %v3748
    %3794 = vmatprep.subr.bf16.mxu0 %v3752
    %3795 = vmatpush1.bf16.msra.mxu0 %v3751
    %3796 = vmatprep.subr.bf16.mxu0 %v3755
    %3797 = vmatpush1.bf16.msra.mxu0 %v3754
    %3798 = vmatprep.subr.bf16.mxu0 %v3758
    %3799 = vmatpush1.bf16.msra.mxu0 %v3757
    %3800 = vmatprep.subr.bf16.mxu0 0
    %3801 = vmatpush1.bf16.msra.mxu0 0
    %3802 = vmatprep.subr.bf16.mxu0 0
    %3803 = vmatpush1.bf16.msra.mxu0 0
    %3804 = vmatprep.subr.bf16.mxu0 0
    %3805 = vmatpush1.bf16.msra.mxu0 0
    %3806 = vmatprep.subr.bf16.mxu0 0
    %3807 = vmatpush1.bf16.msra.mxu0 0
    %3808 = vmatprep.subr.bf16.mxu0 0
    %3809 = vmatpush1.bf16.msra.mxu0 0
    %3810 = vmatprep.subr.bf16.mxu0 0
    %3811 = vmatpush1.bf16.msra.mxu0 0
    %3812 = vmatprep.subr.bf16.mxu0 0
    %3813 = vmatpush1.bf16.msra.mxu0 0
    %3814 = vmatprep.subr.bf16.mxu0 0
    %3815 = vmatpush1.bf16.msra.mxu0 0
    %3816 = vmatprep.mubr.bf16.mxu0 0
    %3817 = vmatmul.mubr.bf16.gmra.mrb[0].mxu0 %v3623
    %v3818 = vpop.f32.mrb[0].mxu0
    %v3819 = vadd.f32 0.0, %v3818
    %v3820 = vpop.f32.mrb[0].mxu0
    %v3821 = vadd.f32 0.0, %v3820
    %v3822 = vpop.f32.mrb[0].mxu0
    %v3823 = vpop.f32.mrb[0].mxu0
    %3824 = vdwg.mxu0
    %3825 = vmatprep.subr.bf16.mxu0 0
    %3826 = vmatpush1.bf16.msra.mxu0 %v3738
    %3827 = vmatprep.subr.bf16.mxu0 0
    %3828 = vmatpush1.bf16.msra.mxu0 %v3741
    %3829 = vmatprep.subr.bf16.mxu0 0
    %3830 = vmatpush1.bf16.msra.mxu0 %v3744
    %3831 = vmatprep.subr.bf16.mxu0 0
    %3832 = vmatpush1.bf16.msra.mxu0 %v3747
    %3833 = vmatprep.subr.bf16.mxu0 0
    %3834 = vmatpush1.bf16.msra.mxu0 %v3750
    %3835 = vmatprep.subr.bf16.mxu0 0
    %3836 = vmatpush1.bf16.msra.mxu0 %v3753
    %3837 = vmatprep.subr.bf16.mxu0 0
    %3838 = vmatpush1.bf16.msra.mxu0 %v3756
    %3839 = vmatprep.subr.bf16.mxu0 0
    %3840 = vmatpush1.bf16.msra.mxu0 %v3759
    %3841 = vmatprep.subr.bf16.mxu0 0
    %3842 = vmatpush1.bf16.msra.mxu0 0
    %3843 = vmatprep.subr.bf16.mxu0 0
    %3844 = vmatpush1.bf16.msra.mxu0 0
    %3845 = vmatprep.subr.bf16.mxu0 0
    %3846 = vmatpush1.bf16.msra.mxu0 0
    %3847 = vmatprep.subr.bf16.mxu0 0
    %3848 = vmatpush1.bf16.msra.mxu0 0
    %3849 = vmatprep.subr.bf16.mxu0 0
    %3850 = vmatpush1.bf16.msra.mxu0 0
    %3851 = vmatprep.subr.bf16.mxu0 0
    %3852 = vmatpush1.bf16.msra.mxu0 0
    %3853 = vmatprep.subr.bf16.mxu0 0
    %3854 = vmatpush1.bf16.msra.mxu0 0
    %3855 = vmatprep.subr.bf16.mxu0 0
    %3856 = vmatpush1.bf16.msra.mxu0 0
    %3857 = vmatprep.mubr.bf16.mxu0 0
    %3858 = vmatmul.mubr.bf16.gmra.mrb[0].mxu0 %v3623
    %v3859 = vpop.f32.mrb[0].mxu0
    %v3860 = vadd.f32 0.0, %v3859
    %v3861 = vpop.f32.mrb[0].mxu0
    %v3862 = vpop.f32.mrb[0].mxu0
    %v3863 = vpop.f32.mrb[0].mxu0
    %3864 = vdwg.mxu0
    %v3865 = vadd.f32 %v3620, %v3819
    %v3866 = vadd.f32 %v3621, %v3821
    %v3867 = vxor.u32 %v3865, 2147483648
    %v3868 = vxor.u32 %v3866, 2147483648
    %v3869 = vmul.f32 %v3867, 1.442695
    %v3870 = vpow.pop %v3869
    %v3871 = vmul.f32 %v3868, 1.442695
    %v3872 = vpow.pop %v3871
    %v3873 = vadd.f32 %v3870, 1.0
    %v3874 = vadd.f32 %v3872, 1.0
    %v3875 = vrcp.pop %v3873
    %v3876 = vmul.f32 1.0, %v3875
    %v3877 = vrcp.pop %v3874
    %v3878 = vmul.f32 1.0, %v3877
    %v3879 = vadd.f32 %v3860, %v3076
    %v3880 = vmul.f32 %v3876, %v3879
    %v3881 = vadd.f32 %v3622, %v3880
    %v3882 = vtanh.pop %v3881
    %v3883 = vsub.f32 %v3618, %v3882
    %v3884 = vmul.f32 %v3878, %v3883
    %v3885 = vadd.f32 %v3882, %v3884
    %3886 = vst [vmem:[#allocation10 + $0x18] sm:$0xff] %v3885
    %v3887 = vld [vmem:[#allocation2 + $0x60] sm:$0xff]
    %v3888 = vld [vmem:[#allocation2 + $0x68] sm:$0xff]
    %v3889 = vld [vmem:[#allocation2 + $0x70] sm:$0xff]
    %v3890 = vpack.c.bf16 %v3885, %v3885
    %v3891 = vld [vmem:[#allocation9] sm:$0xff]
    %v3892 = vld [vmem:[#allocation9 + $0x8] sm:$0xf]
    %v3893 = vld [vmem:[#allocation9 + $0xc] sm:$0xff]
    %v3894 = vld [vmem:[#allocation9 + $0x14] sm:$0xf]
    %v3895 = vld [vmem:[#allocation9 + $0x18] sm:$0xff]
    %v3896 = vld [vmem:[#allocation9 + $0x20] sm:$0xf]
    %v3897 = vld [vmem:[#allocation9 + $0x24] sm:$0xff]
    %v3898 = vld [vmem:[#allocation9 + $0x2c] sm:$0xf]
    %v3899 = vld [vmem:[#allocation9 + $0x30] sm:$0xff]
    %v3900 = vld [vmem:[#allocation9 + $0x38] sm:$0xf]
    %v3901 = vld [vmem:[#allocation9 + $0x3c] sm:$0xff]
    %v3902 = vld [vmem:[#allocation9 + $0x44] sm:$0xf]
    %v3903 = vld [vmem:[#allocation9 + $0x48] sm:$0xff]
    %v3904 = vld [vmem:[#allocation9 + $0x50] sm:$0xf]
    %v3905 = vld [vmem:[#allocation9 + $0x54] sm:$0xff]
    %v3906 = vld [vmem:[#allocation9 + $0x5c] sm:$0xf]
    %v3907 = vld [vmem:[#allocation9 + $0x60] sm:$0xff]
    %v3908 = vld [vmem:[#allocation9 + $0x68] sm:$0xf]
    %v3909 = vld [vmem:[#allocation9 + $0x6c] sm:$0xff]
    %v3910 = vld [vmem:[#allocation9 + $0x74] sm:$0xf]
    %v3911 = vld [vmem:[#allocation9 + $0x78] sm:$0xff]
    %v3912 = vld [vmem:[#allocation9 + $0x80] sm:$0xf]
    %v3913 = vld [vmem:[#allocation9 + $0x84] sm:$0xff]
    %v3914 = vld [vmem:[#allocation9 + $0x8c] sm:$0xf]
    %v3915 = vld [vmem:[#allocation9 + $0x90] sm:$0xff]
    %v3916 = vld [vmem:[#allocation9 + $0x98] sm:$0xf]
    %v3917 = vld [vmem:[#allocation9 + $0x9c] sm:$0xff]
    %v3918 = vld [vmem:[#allocation9 + $0xa4] sm:$0xf]
    %v3919 = vld [vmem:[#allocation9 + $0xa8] sm:$0xff]
    %v3920 = vld [vmem:[#allocation9 + $0xb0] sm:$0xf]
    %v3921 = vld [vmem:[#allocation9 + $0xb4] sm:$0xff]
    %v3922 = vld [vmem:[#allocation9 + $0xbc] sm:$0xf]
    %v3955 = vunpack.c.l.b16 %v3891
    %v3956 = vunpack.c.h.b16 %v3891
    %v3957 = vunpack.c.l.b16 %v3892
    %v3958 = vunpack.c.l.b16 %v3893
    %v3959 = vunpack.c.h.b16 %v3893
    %v3960 = vunpack.c.l.b16 %v3894
    %v3961 = vunpack.c.l.b16 %v3895
    %v3962 = vunpack.c.h.b16 %v3895
    %v3963 = vunpack.c.l.b16 %v3896
    %v3964 = vunpack.c.l.b16 %v3897
    %v3965 = vunpack.c.h.b16 %v3897
    %v3966 = vunpack.c.l.b16 %v3898
    %v3967 = vunpack.c.l.b16 %v3899
    %v3968 = vunpack.c.h.b16 %v3899
    %v3969 = vunpack.c.l.b16 %v3900
    %v3970 = vunpack.c.l.b16 %v3901
    %v3971 = vunpack.c.h.b16 %v3901
    %v3972 = vunpack.c.l.b16 %v3902
    %v3973 = vunpack.c.l.b16 %v3903
    %v3974 = vunpack.c.h.b16 %v3903
    %v3975 = vunpack.c.l.b16 %v3904
    %v3976 = vunpack.c.l.b16 %v3905
    %v3977 = vunpack.c.h.b16 %v3905
    %v3978 = vunpack.c.l.b16 %v3906
    %v3979 = vunpack.c.l.b16 %v3907
    %v3980 = vunpack.c.h.b16 %v3907
    %v3981 = vunpack.c.l.b16 %v3908
    %v3982 = vunpack.c.l.b16 %v3909
    %v3983 = vunpack.c.h.b16 %v3909
    %v3984 = vunpack.c.l.b16 %v3910
    %v3985 = vunpack.c.l.b16 %v3911
    %v3986 = vunpack.c.h.b16 %v3911
    %v3987 = vunpack.c.l.b16 %v3912
    %v3988 = vunpack.c.l.b16 %v3913
    %v3989 = vunpack.c.h.b16 %v3913
    %v3990 = vunpack.c.l.b16 %v3914
    %v3991 = vunpack.c.l.b16 %v3915
    %v3992 = vunpack.c.h.b16 %v3915
    %v3993 = vunpack.c.l.b16 %v3916
    %v3994 = vunpack.c.l.b16 %v3917
    %v3995 = vunpack.c.h.b16 %v3917
    %v3996 = vunpack.c.l.b16 %v3918
    %v3997 = vunpack.c.l.b16 %v3919
    %v3998 = vunpack.c.h.b16 %v3919
    %v3999 = vunpack.c.l.b16 %v3920
    %v4000 = vunpack.c.l.b16 %v3921
    %v4001 = vunpack.c.h.b16 %v3921
    %v4002 = vunpack.c.l.b16 %v3922
    %v4003 = vpack.c.b16 %v3958, %v3955
    %v4004 = vpack.c.b16 %v3959, %v3956
    %v4005 = vpack.c.b16 %v3960, %v3957
    %v4006 = vpack.c.b16 %v3964, %v3961
    %v4007 = vpack.c.b16 %v3965, %v3962
    %v4008 = vpack.c.b16 %v3966, %v3963
    %v4009 = vpack.c.b16 %v3970, %v3967
    %v4010 = vpack.c.b16 %v3971, %v3968
    %v4011 = vpack.c.b16 %v3972, %v3969
    %v4012 = vpack.c.b16 %v3976, %v3973
    %v4013 = vpack.c.b16 %v3977, %v3974
    %v4014 = vpack.c.b16 %v3978, %v3975
    %v4015 = vpack.c.b16 %v3982, %v3979
    %v4016 = vpack.c.b16 %v3983, %v3980
    %v4017 = vpack.c.b16 %v3984, %v3981
    %v4018 = vpack.c.b16 %v3988, %v3985
    %v4019 = vpack.c.b16 %v3989, %v3986
    %v4020 = vpack.c.b16 %v3990, %v3987
    %v4021 = vpack.c.b16 %v3994, %v3991
    %v4022 = vpack.c.b16 %v3995, %v3992
    %v4023 = vpack.c.b16 %v3996, %v3993
    %v4024 = vpack.c.b16 %v4000, %v3997
    %v4025 = vpack.c.b16 %v4001, %v3998
    %v4026 = vpack.c.b16 %v4002, %v3999
    %4051 = vmatprep.subr.bf16.mxu0 %v4004
    %4052 = vmatpush1.bf16.msra.mxu0 %v4003
    %4053 = vmatprep.subr.bf16.mxu0 %v4007
    %4054 = vmatpush1.bf16.msra.mxu0 %v4006
    %4055 = vmatprep.subr.bf16.mxu0 %v4010
    %4056 = vmatpush1.bf16.msra.mxu0 %v4009
    %4057 = vmatprep.subr.bf16.mxu0 %v4013
    %4058 = vmatpush1.bf16.msra.mxu0 %v4012
    %4059 = vmatprep.subr.bf16.mxu0 %v4016
    %4060 = vmatpush1.bf16.msra.mxu0 %v4015
    %4061 = vmatprep.subr.bf16.mxu0 %v4019
    %4062 = vmatpush1.bf16.msra.mxu0 %v4018
    %4063 = vmatprep.subr.bf16.mxu0 %v4022
    %4064 = vmatpush1.bf16.msra.mxu0 %v4021
    %4065 = vmatprep.subr.bf16.mxu0 %v4025
    %4066 = vmatpush1.bf16.msra.mxu0 %v4024
    %4067 = vmatprep.subr.bf16.mxu0 0
    %4068 = vmatpush1.bf16.msra.mxu0 0
    %4069 = vmatprep.subr.bf16.mxu0 0
    %4070 = vmatpush1.bf16.msra.mxu0 0
    %4071 = vmatprep.subr.bf16.mxu0 0
    %4072 = vmatpush1.bf16.msra.mxu0 0
    %4073 = vmatprep.subr.bf16.mxu0 0
    %4074 = vmatpush1.bf16.msra.mxu0 0
    %4075 = vmatprep.subr.bf16.mxu0 0
    %4076 = vmatpush1.bf16.msra.mxu0 0
    %4077 = vmatprep.subr.bf16.mxu0 0
    %4078 = vmatpush1.bf16.msra.mxu0 0
    %4079 = vmatprep.subr.bf16.mxu0 0
    %4080 = vmatpush1.bf16.msra.mxu0 0
    %4081 = vmatprep.subr.bf16.mxu0 0
    %4082 = vmatpush1.bf16.msra.mxu0 0
    %4083 = vmatprep.mubr.bf16.mxu0 0
    %4084 = vmatmul.mubr.bf16.gmra.mrb[0].mxu0 %v3890
    %v4085 = vpop.f32.mrb[0].mxu0
    %v4086 = vadd.f32 0.0, %v4085
    %v4087 = vpop.f32.mrb[0].mxu0
    %v4088 = vadd.f32 0.0, %v4087
    %v4089 = vpop.f32.mrb[0].mxu0
    %v4090 = vpop.f32.mrb[0].mxu0
    %4091 = vdwg.mxu0
    %4092 = vmatprep.subr.bf16.mxu0 0
    %4093 = vmatpush1.bf16.msra.mxu0 %v4005
    %4094 = vmatprep.subr.bf16.mxu0 0
    %4095 = vmatpush1.bf16.msra.mxu0 %v4008
    %4096 = vmatprep.subr.bf16.mxu0 0
    %4097 = vmatpush1.bf16.msra.mxu0 %v4011
    %4098 = vmatprep.subr.bf16.mxu0 0
    %4099 = vmatpush1.bf16.msra.mxu0 %v4014
    %4100 = vmatprep.subr.bf16.mxu0 0
    %4101 = vmatpush1.bf16.msra.mxu0 %v4017
    %4102 = vmatprep.subr.bf16.mxu0 0
    %4103 = vmatpush1.bf16.msra.mxu0 %v4020
    %4104 = vmatprep.subr.bf16.mxu0 0
    %4105 = vmatpush1.bf16.msra.mxu0 %v4023
    %4106 = vmatprep.subr.bf16.mxu0 0
    %4107 = vmatpush1.bf16.msra.mxu0 %v4026
    %4108 = vmatprep.subr.bf16.mxu0 0
    %4109 = vmatpush1.bf16.msra.mxu0 0
    %4110 = vmatprep.subr.bf16.mxu0 0
    %4111 = vmatpush1.bf16.msra.mxu0 0
    %4112 = vmatprep.subr.bf16.mxu0 0
    %4113 = vmatpush1.bf16.msra.mxu0 0
    %4114 = vmatprep.subr.bf16.mxu0 0
    %4115 = vmatpush1.bf16.msra.mxu0 0
    %4116 = vmatprep.subr.bf16.mxu0 0
    %4117 = vmatpush1.bf16.msra.mxu0 0
    %4118 = vmatprep.subr.bf16.mxu0 0
    %4119 = vmatpush1.bf16.msra.mxu0 0
    %4120 = vmatprep.subr.bf16.mxu0 0
    %4121 = vmatpush1.bf16.msra.mxu0 0
    %4122 = vmatprep.subr.bf16.mxu0 0
    %4123 = vmatpush1.bf16.msra.mxu0 0
    %4124 = vmatprep.mubr.bf16.mxu0 0
    %4125 = vmatmul.mubr.bf16.gmra.mrb[0].mxu0 %v3890
    %v4126 = vpop.f32.mrb[0].mxu0
    %v4127 = vadd.f32 0.0, %v4126
    %v4128 = vpop.f32.mrb[0].mxu0
    %v4129 = vpop.f32.mrb[0].mxu0
    %v4130 = vpop.f32.mrb[0].mxu0
    %4131 = vdwg.mxu0
    %v4132 = vadd.f32 %v3887, %v4086
    %v4133 = vadd.f32 %v3888, %v4088
    %v4134 = vxor.u32 %v4132, 2147483648
    %v4135 = vxor.u32 %v4133, 2147483648
    %v4136 = vmul.f32 %v4134, 1.442695
    %v4137 = vpow.pop %v4136
    %v4138 = vmul.f32 %v4135, 1.442695
    %v4139 = vpow.pop %v4138
    %v4140 = vadd.f32 %v4137, 1.0
    %v4141 = vadd.f32 %v4139, 1.0
    %v4142 = vrcp.pop %v4140
    %v4143 = vmul.f32 1.0, %v4142
    %v4144 = vrcp.pop %v4141
    %v4145 = vmul.f32 1.0, %v4144
    %v4146 = vadd.f32 %v4127, %v3076
    %v4147 = vmul.f32 %v4143, %v4146
    %v4148 = vadd.f32 %v3889, %v4147
    %v4149 = vtanh.pop %v4148
    %v4150 = vsub.f32 %v3885, %v4149
    %v4151 = vmul.f32 %v4145, %v4150
    %v4152 = vadd.f32 %v4149, %v4151
    %4153 = vst [vmem:[#allocation10 + $0x20] sm:$0xff] %v4152
    %v4154 = vld [vmem:[#allocation2 + $0x78] sm:$0xff]
    %v4155 = vld [vmem:[#allocation2 + $0x80] sm:$0xff]
    %v4156 = vld [vmem:[#allocation2 + $0x88] sm:$0xff]
    %v4157 = vpack.c.bf16 %v4152, %v4152
    %v4158 = vld [vmem:[#allocation9] sm:$0xff]
    %v4159 = vld [vmem:[#allocation9 + $0x8] sm:$0xf]
    %v4160 = vld [vmem:[#allocation9 + $0xc] sm:$0xff]
    %v4161 = vld [vmem:[#allocation9 + $0x14] sm:$0xf]
    %v4162 = vld [vmem:[#allocation9 + $0x18] sm:$0xff]
    %v4163 = vld [vmem:[#allocation9 + $0x20] sm:$0xf]
    %v4164 = vld [vmem:[#allocation9 + $0x24] sm:$0xff]
    %v4165 = vld [vmem:[#allocation9 + $0x2c] sm:$0xf]
    %v4166 = vld [vmem:[#allocation9 + $0x30] sm:$0xff]
    %v4167 = vld [vmem:[#allocation9 + $0x38] sm:$0xf]
    %v4168 = vld [vmem:[#allocation9 + $0x3c] sm:$0xff]
    %v4169 = vld [vmem:[#allocation9 + $0x44] sm:$0xf]
    %v4170 = vld [vmem:[#allocation9 + $0x48] sm:$0xff]
    %v4171 = vld [vmem:[#allocation9 + $0x50] sm:$0xf]
    %v4172 = vld [vmem:[#allocation9 + $0x54] sm:$0xff]
    %v4173 = vld [vmem:[#allocation9 + $0x5c] sm:$0xf]
    %v4174 = vld [vmem:[#allocation9 + $0x60] sm:$0xff]
    %v4175 = vld [vmem:[#allocation9 + $0x68] sm:$0xf]
    %v4176 = vld [vmem:[#allocation9 + $0x6c] sm:$0xff]
    %v4177 = vld [vmem:[#allocation9 + $0x74] sm:$0xf]
    %v4178 = vld [vmem:[#allocation9 + $0x78] sm:$0xff]
    %v4179 = vld [vmem:[#allocation9 + $0x80] sm:$0xf]
    %v4180 = vld [vmem:[#allocation9 + $0x84] sm:$0xff]
    %v4181 = vld [vmem:[#allocation9 + $0x8c] sm:$0xf]
    %v4182 = vld [vmem:[#allocation9 + $0x90] sm:$0xff]
    %v4183 = vld [vmem:[#allocation9 + $0x98] sm:$0xf]
    %v4184 = vld [vmem:[#allocation9 + $0x9c] sm:$0xff]
    %v4185 = vld [vmem:[#allocation9 + $0xa4] sm:$0xf]
    %v4186 = vld [vmem:[#allocation9 + $0xa8] sm:$0xff]
    %v4187 = vld [vmem:[#allocation9 + $0xb0] sm:$0xf]
    %v4188 = vld [vmem:[#allocation9 + $0xb4] sm:$0xff]
    %v4189 = vld [vmem:[#allocation9 + $0xbc] sm:$0xf]
    %v4222 = vunpack.c.l.b16 %v4158
    %v4223 = vunpack.c.h.b16 %v4158
    %v4224 = vunpack.c.l.b16 %v4159
    %v4225 = vunpack.c.l.b16 %v4160
    %v4226 = vunpack.c.h.b16 %v4160
    %v4227 = vunpack.c.l.b16 %v4161
    %v4228 = vunpack.c.l.b16 %v4162
    %v4229 = vunpack.c.h.b16 %v4162
    %v4230 = vunpack.c.l.b16 %v4163
    %v4231 = vunpack.c.l.b16 %v4164
    %v4232 = vunpack.c.h.b16 %v4164
    %v4233 = vunpack.c.l.b16 %v4165
    %v4234 = vunpack.c.l.b16 %v4166
    %v4235 = vunpack.c.h.b16 %v4166
    %v4236 = vunpack.c.l.b16 %v4167
    %v4237 = vunpack.c.l.b16 %v4168
    %v4238 = vunpack.c.h.b16 %v4168
    %v4239 = vunpack.c.l.b16 %v4169
    %v4240 = vunpack.c.l.b16 %v4170
    %v4241 = vunpack.c.h.b16 %v4170
    %v4242 = vunpack.c.l.b16 %v4171
    %v4243 = vunpack.c.l.b16 %v4172
    %v4244 = vunpack.c.h.b16 %v4172
    %v4245 = vunpack.c.l.b16 %v4173
    %v4246 = vunpack.c.l.b16 %v4174
    %v4247 = vunpack.c.h.b16 %v4174
    %v4248 = vunpack.c.l.b16 %v4175
    %v4249 = vunpack.c.l.b16 %v4176
    %v4250 = vunpack.c.h.b16 %v4176
    %v4251 = vunpack.c.l.b16 %v4177
    %v4252 = vunpack.c.l.b16 %v4178
    %v4253 = vunpack.c.h.b16 %v4178
    %v4254 = vunpack.c.l.b16 %v4179
    %v4255 = vunpack.c.l.b16 %v4180
    %v4256 = vunpack.c.h.b16 %v4180
    %v4257 = vunpack.c.l.b16 %v4181
    %v4258 = vunpack.c.l.b16 %v4182
    %v4259 = vunpack.c.h.b16 %v4182
    %v4260 = vunpack.c.l.b16 %v4183
    %v4261 = vunpack.c.l.b16 %v4184
    %v4262 = vunpack.c.h.b16 %v4184
    %v4263 = vunpack.c.l.b16 %v4185
    %v4264 = vunpack.c.l.b16 %v4186
    %v4265 = vunpack.c.h.b16 %v4186
    %v4266 = vunpack.c.l.b16 %v4187
    %v4267 = vunpack.c.l.b16 %v4188
    %v4268 = vunpack.c.h.b16 %v4188
    %v4269 = vunpack.c.l.b16 %v4189
    %v4270 = vpack.c.b16 %v4225, %v4222
    %v4271 = vpack.c.b16 %v4226, %v4223
    %v4272 = vpack.c.b16 %v4227, %v4224
    %v4273 = vpack.c.b16 %v4231, %v4228
    %v4274 = vpack.c.b16 %v4232, %v4229
    %v4275 = vpack.c.b16 %v4233, %v4230
    %v4276 = vpack.c.b16 %v4237, %v4234
    %v4277 = vpack.c.b16 %v4238, %v4235
    %v4278 = vpack.c.b16 %v4239, %v4236
    %v4279 = vpack.c.b16 %v4243, %v4240
    %v4280 = vpack.c.b16 %v4244, %v4241
    %v4281 = vpack.c.b16 %v4245, %v4242
    %v4282 = vpack.c.b16 %v4249, %v4246
    %v4283 = vpack.c.b16 %v4250, %v4247
    %v4284 = vpack.c.b16 %v4251, %v4248
    %v4285 = vpack.c.b16 %v4255, %v4252
    %v4286 = vpack.c.b16 %v4256, %v4253
    %v4287 = vpack.c.b16 %v4257, %v4254
    %v4288 = vpack.c.b16 %v4261, %v4258
    %v4289 = vpack.c.b16 %v4262, %v4259
    %v4290 = vpack.c.b16 %v4263, %v4260
    %v4291 = vpack.c.b16 %v4267, %v4264
    %v4292 = vpack.c.b16 %v4268, %v4265
    %v4293 = vpack.c.b16 %v4269, %v4266
    %4318 = vmatprep.subr.bf16.mxu0 %v4271
    %4319 = vmatpush1.bf16.msra.mxu0 %v4270
    %4320 = vmatprep.subr.bf16.mxu0 %v4274
    %4321 = vmatpush1.bf16.msra.mxu0 %v4273
    %4322 = vmatprep.subr.bf16.mxu0 %v4277
    %4323 = vmatpush1.bf16.msra.mxu0 %v4276
    %4324 = vmatprep.subr.bf16.mxu0 %v4280
    %4325 = vmatpush1.bf16.msra.mxu0 %v4279
    %4326 = vmatprep.subr.bf16.mxu0 %v4283
    %4327 = vmatpush1.bf16.msra.mxu0 %v4282
    %4328 = vmatprep.subr.bf16.mxu0 %v4286
    %4329 = vmatpush1.bf16.msra.mxu0 %v4285
    %4330 = vmatprep.subr.bf16.mxu0 %v4289
    %4331 = vmatpush1.bf16.msra.mxu0 %v4288
    %4332 = vmatprep.subr.bf16.mxu0 %v4292
    %4333 = vmatpush1.bf16.msra.mxu0 %v4291
    %4334 = vmatprep.subr.bf16.mxu0 0
    %4335 = vmatpush1.bf16.msra.mxu0 0
    %4336 = vmatprep.subr.bf16.mxu0 0
    %4337 = vmatpush1.bf16.msra.mxu0 0
    %4338 = vmatprep.subr.bf16.mxu0 0
    %4339 = vmatpush1.bf16.msra.mxu0 0
    %4340 = vmatprep.subr.bf16.mxu0 0
    %4341 = vmatpush1.bf16.msra.mxu0 0
    %4342 = vmatprep.subr.bf16.mxu0 0
    %4343 = vmatpush1.bf16.msra.mxu0 0
    %4344 = vmatprep.subr.bf16.mxu0 0
    %4345 = vmatpush1.bf16.msra.mxu0 0
    %4346 = vmatprep.subr.bf16.mxu0 0
    %4347 = vmatpush1.bf16.msra.mxu0 0
    %4348 = vmatprep.subr.bf16.mxu0 0
    %4349 = vmatpush1.bf16.msra.mxu0 0
    %4350 = vmatprep.mubr.bf16.mxu0 0
    %4351 = vmatmul.mubr.bf16.gmra.mrb[0].mxu0 %v4157
    %v4352 = vpop.f32.mrb[0].mxu0
    %v4353 = vadd.f32 0.0, %v4352
    %v4354 = vpop.f32.mrb[0].mxu0
    %v4355 = vadd.f32 0.0, %v4354
    %v4356 = vpop.f32.mrb[0].mxu0
    %v4357 = vpop.f32.mrb[0].mxu0
    %4358 = vdwg.mxu0
    %4359 = vmatprep.subr.bf16.mxu0 0
    %4360 = vmatpush1.bf16.msra.mxu0 %v4272
    %4361 = vmatprep.subr.bf16.mxu0 0
    %4362 = vmatpush1.bf16.msra.mxu0 %v4275
    %4363 = vmatprep.subr.bf16.mxu0 0
    %4364 = vmatpush1.bf16.msra.mxu0 %v4278
    %4365 = vmatprep.subr.bf16.mxu0 0
    %4366 = vmatpush1.bf16.msra.mxu0 %v4281
    %4367 = vmatprep.subr.bf16.mxu0 0
    %4368 = vmatpush1.bf16.msra.mxu0 %v4284
    %4369 = vmatprep.subr.bf16.mxu0 0
    %4370 = vmatpush1.bf16.msra.mxu0 %v4287
    %4371 = vmatprep.subr.bf16.mxu0 0
    %4372 = vmatpush1.bf16.msra.mxu0 %v4290
    %4373 = vmatprep.subr.bf16.mxu0 0
    %4374 = vmatpush1.bf16.msra.mxu0 %v4293
    %4375 = vmatprep.subr.bf16.mxu0 0
    %4376 = vmatpush1.bf16.msra.mxu0 0
    %4377 = vmatprep.subr.bf16.mxu0 0
    %4378 = vmatpush1.bf16.msra.mxu0 0
    %4379 = vmatprep.subr.bf16.mxu0 0
    %4380 = vmatpush1.bf16.msra.mxu0 0
    %4381 = vmatprep.subr.bf16.mxu0 0
    %4382 = vmatpush1.bf16.msra.mxu0 0
    %4383 = vmatprep.subr.bf16.mxu0 0
    %4384 = vmatpush1.bf16.msra.mxu0 0
    %4385 = vmatprep.subr.bf16.mxu0 0
    %4386 = vmatpush1.bf16.msra.mxu0 0
    %4387 = vmatprep.subr.bf16.mxu0 0
    %4388 = vmatpush1.bf16.msra.mxu0 0
    %4389 = vmatprep.subr.bf16.mxu0 0
    %4390 = vmatpush1.bf16.msra.mxu0 0
    %4391 = vmatprep.mubr.bf16.mxu0 0
    %4392 = vmatmul.mubr.bf16.gmra.mrb[0].mxu0 %v4157
    %v4393 = vpop.f32.mrb[0].mxu0
    %v4394 = vadd.f32 0.0, %v4393
    %v4395 = vpop.f32.mrb[0].mxu0
    %v4396 = vpop.f32.mrb[0].mxu0
    %v4397 = vpop.f32.mrb[0].mxu0
    %4398 = vdwg.mxu0
    %v4399 = vadd.f32 %v4154, %v4353
    %v4400 = vadd.f32 %v4155, %v4355
    %v4401 = vxor.u32 %v4399, 2147483648
    %v4402 = vxor.u32 %v4400, 2147483648
    %v4403 = vmul.f32 %v4401, 1.442695
    %v4404 = vpow.pop %v4403
    %v4405 = vmul.f32 %v4402, 1.442695
    %v4406 = vpow.pop %v4405
    %v4407 = vadd.f32 %v4404, 1.0
    %v4408 = vadd.f32 %v4406, 1.0
    %v4409 = vrcp.pop %v4407
    %v4410 = vmul.f32 1.0, %v4409
    %v4411 = vrcp.pop %v4408
    %v4412 = vmul.f32 1.0, %v4411
    %v4413 = vadd.f32 %v4394, %v3076
    %v4414 = vmul.f32 %v4410, %v4413
    %v4415 = vadd.f32 %v4156, %v4414
    %v4416 = vtanh.pop %v4415
    %v4417 = vsub.f32 %v4152, %v4416
    %v4418 = vmul.f32 %v4412, %v4417
    %v4419 = vadd.f32 %v4416, %v4418
    %4420 = vst [vmem:[#allocation10 + $0x28] sm:$0xff] %v4419
    %v4421 = vld [vmem:[#allocation2 + $0x90] sm:$0xff]
    %v4422 = vld [vmem:[#allocation2 + $0x98] sm:$0xff]
    %v4423 = vld [vmem:[#allocation2 + $0xa0] sm:$0xff]
    %v4424 = vpack.c.bf16 %v4419, %v4419
    %v4425 = vld [vmem:[#allocation9] sm:$0xff]
    %v4426 = vld [vmem:[#allocation9 + $0x8] sm:$0xf]
    %v4427 = vld [vmem:[#allocation9 + $0xc] sm:$0xff]
    %v4428 = vld [vmem:[#allocation9 + $0x14] sm:$0xf]
    %v4429 = vld [vmem:[#allocation9 + $0x18] sm:$0xff]
    %v4430 = vld [vmem:[#allocation9 + $0x20] sm:$0xf]
    %v4431 = vld [vmem:[#allocation9 + $0x24] sm:$0xff]
    %v4432 = vld [vmem:[#allocation9 + $0x2c] sm:$0xf]
    %v4433 = vld [vmem:[#allocation9 + $0x30] sm:$0xff]
    %v4434 = vld [vmem:[#allocation9 + $0x38] sm:$0xf]
    %v4435 = vld [vmem:[#allocation9 + $0x3c] sm:$0xff]
    %v4436 = vld [vmem:[#allocation9 + $0x44] sm:$0xf]
    %v4437 = vld [vmem:[#allocation9 + $0x48] sm:$0xff]
    %v4438 = vld [vmem:[#allocation9 + $0x50] sm:$0xf]
    %v4439 = vld [vmem:[#allocation9 + $0x54] sm:$0xff]
    %v4440 = vld [vmem:[#allocation9 + $0x5c] sm:$0xf]
    %v4441 = vld [vmem:[#allocation9 + $0x60] sm:$0xff]
    %v4442 = vld [vmem:[#allocation9 + $0x68] sm:$0xf]
    %v4443 = vld [vmem:[#allocation9 + $0x6c] sm:$0xff]
    %v4444 = vld [vmem:[#allocation9 + $0x74] sm:$0xf]
    %v4445 = vld [vmem:[#allocation9 + $0x78] sm:$0xff]
    %v4446 = vld [vmem:[#allocation9 + $0x80] sm:$0xf]
    %v4447 = vld [vmem:[#allocation9 + $0x84] sm:$0xff]
    %v4448 = vld [vmem:[#allocation9 + $0x8c] sm:$0xf]
    %v4449 = vld [vmem:[#allocation9 + $0x90] sm:$0xff]
    %v4450 = vld [vmem:[#allocation9 + $0x98] sm:$0xf]
    %v4451 = vld [vmem:[#allocation9 + $0x9c] sm:$0xff]
    %v4452 = vld [vmem:[#allocation9 + $0xa4] sm:$0xf]
    %v4453 = vld [vmem:[#allocation9 + $0xa8] sm:$0xff]
    %v4454 = vld [vmem:[#allocation9 + $0xb0] sm:$0xf]
    %v4455 = vld [vmem:[#allocation9 + $0xb4] sm:$0xff]
    %v4456 = vld [vmem:[#allocation9 + $0xbc] sm:$0xf]
    %v4489 = vunpack.c.l.b16 %v4425
    %v4490 = vunpack.c.h.b16 %v4425
    %v4491 = vunpack.c.l.b16 %v4426
    %v4492 = vunpack.c.l.b16 %v4427
    %v4493 = vunpack.c.h.b16 %v4427
    %v4494 = vunpack.c.l.b16 %v4428
    %v4495 = vunpack.c.l.b16 %v4429
    %v4496 = vunpack.c.h.b16 %v4429
    %v4497 = vunpack.c.l.b16 %v4430
    %v4498 = vunpack.c.l.b16 %v4431
    %v4499 = vunpack.c.h.b16 %v4431
    %v4500 = vunpack.c.l.b16 %v4432
    %v4501 = vunpack.c.l.b16 %v4433
    %v4502 = vunpack.c.h.b16 %v4433
    %v4503 = vunpack.c.l.b16 %v4434
    %v4504 = vunpack.c.l.b16 %v4435
    %v4505 = vunpack.c.h.b16 %v4435
    %v4506 = vunpack.c.l.b16 %v4436
    %v4507 = vunpack.c.l.b16 %v4437
    %v4508 = vunpack.c.h.b16 %v4437
    %v4509 = vunpack.c.l.b16 %v4438
    %v4510 = vunpack.c.l.b16 %v4439
    %v4511 = vunpack.c.h.b16 %v4439
    %v4512 = vunpack.c.l.b16 %v4440
    %v4513 = vunpack.c.l.b16 %v4441
    %v4514 = vunpack.c.h.b16 %v4441
    %v4515 = vunpack.c.l.b16 %v4442
    %v4516 = vunpack.c.l.b16 %v4443
    %v4517 = vunpack.c.h.b16 %v4443
    %v4518 = vunpack.c.l.b16 %v4444
    %v4519 = vunpack.c.l.b16 %v4445
    %v4520 = vunpack.c.h.b16 %v4445
    %v4521 = vunpack.c.l.b16 %v4446
    %v4522 = vunpack.c.l.b16 %v4447
    %v4523 = vunpack.c.h.b16 %v4447
    %v4524 = vunpack.c.l.b16 %v4448
    %v4525 = vunpack.c.l.b16 %v4449
    %v4526 = vunpack.c.h.b16 %v4449
    %v4527 = vunpack.c.l.b16 %v4450
    %v4528 = vunpack.c.l.b16 %v4451
    %v4529 = vunpack.c.h.b16 %v4451
    %v4530 = vunpack.c.l.b16 %v4452
    %v4531 = vunpack.c.l.b16 %v4453
    %v4532 = vunpack.c.h.b16 %v4453
    %v4533 = vunpack.c.l.b16 %v4454
    %v4534 = vunpack.c.l.b16 %v4455
    %v4535 = vunpack.c.h.b16 %v4455
    %v4536 = vunpack.c.l.b16 %v4456
    %v4537 = vpack.c.b16 %v4492, %v4489
    %v4538 = vpack.c.b16 %v4493, %v4490
    %v4539 = vpack.c.b16 %v4494, %v4491
    %v4540 = vpack.c.b16 %v4498, %v4495
    %v4541 = vpack.c.b16 %v4499, %v4496
    %v4542 = vpack.c.b16 %v4500, %v4497
    %v4543 = vpack.c.b16 %v4504, %v4501
    %v4544 = vpack.c.b16 %v4505, %v4502
    %v4545 = vpack.c.b16 %v4506, %v4503
    %v4546 = vpack.c.b16 %v4510, %v4507
    %v4547 = vpack.c.b16 %v4511, %v4508
    %v4548 = vpack.c.b16 %v4512, %v4509
    %v4549 = vpack.c.b16 %v4516, %v4513
    %v4550 = vpack.c.b16 %v4517, %v4514
    %v4551 = vpack.c.b16 %v4518, %v4515
    %v4552 = vpack.c.b16 %v4522, %v4519
    %v4553 = vpack.c.b16 %v4523, %v4520
    %v4554 = vpack.c.b16 %v4524, %v4521
    %v4555 = vpack.c.b16 %v4528, %v4525
    %v4556 = vpack.c.b16 %v4529, %v4526
    %v4557 = vpack.c.b16 %v4530, %v4527
    %v4558 = vpack.c.b16 %v4534, %v4531
    %v4559 = vpack.c.b16 %v4535, %v4532
    %v4560 = vpack.c.b16 %v4536, %v4533
    %4585 = vmatprep.subr.bf16.mxu0 %v4538
    %4586 = vmatpush1.bf16.msra.mxu0 %v4537
    %4587 = vmatprep.subr.bf16.mxu0 %v4541
    %4588 = vmatpush1.bf16.msra.mxu0 %v4540
    %4589 = vmatprep.subr.bf16.mxu0 %v4544
    %4590 = vmatpush1.bf16.msra.mxu0 %v4543
    %4591 = vmatprep.subr.bf16.mxu0 %v4547
    %4592 = vmatpush1.bf16.msra.mxu0 %v4546
    %4593 = vmatprep.subr.bf16.mxu0 %v4550
    %4594 = vmatpush1.bf16.msra.mxu0 %v4549
    %4595 = vmatprep.subr.bf16.mxu0 %v4553
    %4596 = vmatpush1.bf16.msra.mxu0 %v4552
    %4597 = vmatprep.subr.bf16.mxu0 %v4556
    %4598 = vmatpush1.bf16.msra.mxu0 %v4555
    %4599 = vmatprep.subr.bf16.mxu0 %v4559
    %4600 = vmatpush1.bf16.msra.mxu0 %v4558
    %4601 = vmatprep.subr.bf16.mxu0 0
    %4602 = vmatpush1.bf16.msra.mxu0 0
    %4603 = vmatprep.subr.bf16.mxu0 0
    %4604 = vmatpush1.bf16.msra.mxu0 0
    %4605 = vmatprep.subr.bf16.mxu0 0
    %4606 = vmatpush1.bf16.msra.mxu0 0
    %4607 = vmatprep.subr.bf16.mxu0 0
    %4608 = vmatpush1.bf16.msra.mxu0 0
    %4609 = vmatprep.subr.bf16.mxu0 0
    %4610 = vmatpush1.bf16.msra.mxu0 0
    %4611 = vmatprep.subr.bf16.mxu0 0
    %4612 = vmatpush1.bf16.msra.mxu0 0
    %4613 = vmatprep.subr.bf16.mxu0 0
    %4614 = vmatpush1.bf16.msra.mxu0 0
    %4615 = vmatprep.subr.bf16.mxu0 0
    %4616 = vmatpush1.bf16.msra.mxu0 0
    %4617 = vmatprep.mubr.bf16.mxu0 0
    %4618 = vmatmul.mubr.bf16.gmra.mrb[0].mxu0 %v4424
    %v4619 = vpop.f32.mrb[0].mxu0
    %v4620 = vadd.f32 0.0, %v4619
    %v4621 = vpop.f32.mrb[0].mxu0
    %v4622 = vadd.f32 0.0, %v4621
    %v4623 = vpop.f32.mrb[0].mxu0
    %v4624 = vpop.f32.mrb[0].mxu0
    %4625 = vdwg.mxu0
    %4626 = vmatprep.subr.bf16.mxu0 0
    %4627 = vmatpush1.bf16.msra.mxu0 %v4539
    %4628 = vmatprep.subr.bf16.mxu0 0
    %4629 = vmatpush1.bf16.msra.mxu0 %v4542
    %4630 = vmatprep.subr.bf16.mxu0 0
    %4631 = vmatpush1.bf16.msra.mxu0 %v4545
    %4632 = vmatprep.subr.bf16.mxu0 0
    %4633 = vmatpush1.bf16.msra.mxu0 %v4548
    %4634 = vmatprep.subr.bf16.mxu0 0
    %4635 = vmatpush1.bf16.msra.mxu0 %v4551
    %4636 = vmatprep.subr.bf16.mxu0 0
    %4637 = vmatpush1.bf16.msra.mxu0 %v4554
    %4638 = vmatprep.subr.bf16.mxu0 0
    %4639 = vmatpush1.bf16.msra.mxu0 %v4557
    %4640 = vmatprep.subr.bf16.mxu0 0
    %4641 = vmatpush1.bf16.msra.mxu0 %v4560
    %4642 = vmatprep.subr.bf16.mxu0 0
    %4643 = vmatpush1.bf16.msra.mxu0 0
    %4644 = vmatprep.subr.bf16.mxu0 0
    %4645 = vmatpush1.bf16.msra.mxu0 0
    %4646 = vmatprep.subr.bf16.mxu0 0
    %4647 = vmatpush1.bf16.msra.mxu0 0
    %4648 = vmatprep.subr.bf16.mxu0 0
    %4649 = vmatpush1.bf16.msra.mxu0 0
    %4650 = vmatprep.subr.bf16.mxu0 0
    %4651 = vmatpush1.bf16.msra.mxu0 0
    %4652 = vmatprep.subr.bf16.mxu0 0
    %4653 = vmatpush1.bf16.msra.mxu0 0
    %4654 = vmatprep.subr.bf16.mxu0 0
    %4655 = vmatpush1.bf16.msra.mxu0 0
    %4656 = vmatprep.subr.bf16.mxu0 0
    %4657 = vmatpush1.bf16.msra.mxu0 0
    %4658 = vmatprep.mubr.bf16.mxu0 0
    %4659 = vmatmul.mubr.bf16.gmra.mrb[0].mxu0 %v4424
    %v4660 = vpop.f32.mrb[0].mxu0
    %v4661 = vadd.f32 0.0, %v4660
    %v4662 = vpop.f32.mrb[0].mxu0
    %v4663 = vpop.f32.mrb[0].mxu0
    %v4664 = vpop.f32.mrb[0].mxu0
    %4665 = vdwg.mxu0
    %v4666 = vadd.f32 %v4421, %v4620
    %v4667 = vadd.f32 %v4422, %v4622
    %v4668 = vxor.u32 %v4666, 2147483648
    %v4669 = vxor.u32 %v4667, 2147483648
    %v4670 = vmul.f32 %v4668, 1.442695
    %v4671 = vpow.pop %v4670
    %v4672 = vmul.f32 %v4669, 1.442695
    %v4673 = vpow.pop %v4672
    %v4674 = vadd.f32 %v4671, 1.0
    %v4675 = vadd.f32 %v4673, 1.0
    %v4676 = vrcp.pop %v4674
    %v4677 = vmul.f32 1.0, %v4676
    %v4678 = vrcp.pop %v4675
    %v4679 = vmul.f32 1.0, %v4678
    %v4680 = vadd.f32 %v4661, %v3076
    %v4681 = vmul.f32 %v4677, %v4680
    %v4682 = vadd.f32 %v4423, %v4681
    %v4683 = vtanh.pop %v4682
    %v4684 = vsub.f32 %v4419, %v4683
    %v4685 = vmul.f32 %v4679, %v4684
    %v4686 = vadd.f32 %v4683, %v4685
    %4687 = vst [vmem:[#allocation10 + $0x30] sm:$0xff] %v4686
    %v4688 = vld [vmem:[#allocation2 + $0xa8] sm:$0xff]
    %v4689 = vld [vmem:[#allocation2 + $0xb0] sm:$0xff]
    %v4690 = vld [vmem:[#allocation2 + $0xb8] sm:$0xff]
    %v4691 = vpack.c.bf16 %v4686, %v4686
    %v4692 = vld [vmem:[#allocation9] sm:$0xff]
    %v4693 = vld [vmem:[#allocation9 + $0x8] sm:$0xf]
    %v4694 = vld [vmem:[#allocation9 + $0xc] sm:$0xff]
    %v4695 = vld [vmem:[#allocation9 + $0x14] sm:$0xf]
    %v4696 = vld [vmem:[#allocation9 + $0x18] sm:$0xff]
    %v4697 = vld [vmem:[#allocation9 + $0x20] sm:$0xf]
    %v4698 = vld [vmem:[#allocation9 + $0x24] sm:$0xff]
    %v4699 = vld [vmem:[#allocation9 + $0x2c] sm:$0xf]
    %v4700 = vld [vmem:[#allocation9 + $0x30] sm:$0xff]
    %v4701 = vld [vmem:[#allocation9 + $0x38] sm:$0xf]
    %v4702 = vld [vmem:[#allocation9 + $0x3c] sm:$0xff]
    %v4703 = vld [vmem:[#allocation9 + $0x44] sm:$0xf]
    %v4704 = vld [vmem:[#allocation9 + $0x48] sm:$0xff]
    %v4705 = vld [vmem:[#allocation9 + $0x50] sm:$0xf]
    %v4706 = vld [vmem:[#allocation9 + $0x54] sm:$0xff]
    %v4707 = vld [vmem:[#allocation9 + $0x5c] sm:$0xf]
    %v4708 = vld [vmem:[#allocation9 + $0x60] sm:$0xff]
    %v4709 = vld [vmem:[#allocation9 + $0x68] sm:$0xf]
    %v4710 = vld [vmem:[#allocation9 + $0x6c] sm:$0xff]
    %v4711 = vld [vmem:[#allocation9 + $0x74] sm:$0xf]
    %v4712 = vld [vmem:[#allocation9 + $0x78] sm:$0xff]
    %v4713 = vld [vmem:[#allocation9 + $0x80] sm:$0xf]
    %v4714 = vld [vmem:[#allocation9 + $0x84] sm:$0xff]
    %v4715 = vld [vmem:[#allocation9 + $0x8c] sm:$0xf]
    %v4716 = vld [vmem:[#allocation9 + $0x90] sm:$0xff]
    %v4717 = vld [vmem:[#allocation9 + $0x98] sm:$0xf]
    %v4718 = vld [vmem:[#allocation9 + $0x9c] sm:$0xff]
    %v4719 = vld [vmem:[#allocation9 + $0xa4] sm:$0xf]
    %v4720 = vld [vmem:[#allocation9 + $0xa8] sm:$0xff]
    %v4721 = vld [vmem:[#allocation9 + $0xb0] sm:$0xf]
    %v4722 = vld [vmem:[#allocation9 + $0xb4] sm:$0xff]
    %v4723 = vld [vmem:[#allocation9 + $0xbc] sm:$0xf]
    %v4756 = vunpack.c.l.b16 %v4692
    %v4757 = vunpack.c.h.b16 %v4692
    %v4758 = vunpack.c.l.b16 %v4693
    %v4759 = vunpack.c.l.b16 %v4694
    %v4760 = vunpack.c.h.b16 %v4694
    %v4761 = vunpack.c.l.b16 %v4695
    %v4762 = vunpack.c.l.b16 %v4696
    %v4763 = vunpack.c.h.b16 %v4696
    %v4764 = vunpack.c.l.b16 %v4697
    %v4765 = vunpack.c.l.b16 %v4698
    %v4766 = vunpack.c.h.b16 %v4698
    %v4767 = vunpack.c.l.b16 %v4699
    %v4768 = vunpack.c.l.b16 %v4700
    %v4769 = vunpack.c.h.b16 %v4700
    %v4770 = vunpack.c.l.b16 %v4701
    %v4771 = vunpack.c.l.b16 %v4702
    %v4772 = vunpack.c.h.b16 %v4702
    %v4773 = vunpack.c.l.b16 %v4703
    %v4774 = vunpack.c.l.b16 %v4704
    %v4775 = vunpack.c.h.b16 %v4704
    %v4776 = vunpack.c.l.b16 %v4705
    %v4777 = vunpack.c.l.b16 %v4706
    %v4778 = vunpack.c.h.b16 %v4706
    %v4779 = vunpack.c.l.b16 %v4707
    %v4780 = vunpack.c.l.b16 %v4708
    %v4781 = vunpack.c.h.b16 %v4708
    %v4782 = vunpack.c.l.b16 %v4709
    %v4783 = vunpack.c.l.b16 %v4710
    %v4784 = vunpack.c.h.b16 %v4710
    %v4785 = vunpack.c.l.b16 %v4711
    %v4786 = vunpack.c.l.b16 %v4712
    %v4787 = vunpack.c.h.b16 %v4712
    %v4788 = vunpack.c.l.b16 %v4713
    %v4789 = vunpack.c.l.b16 %v4714
    %v4790 = vunpack.c.h.b16 %v4714
    %v4791 = vunpack.c.l.b16 %v4715
    %v4792 = vunpack.c.l.b16 %v4716
    %v4793 = vunpack.c.h.b16 %v4716
    %v4794 = vunpack.c.l.b16 %v4717
    %v4795 = vunpack.c.l.b16 %v4718
    %v4796 = vunpack.c.h.b16 %v4718
    %v4797 = vunpack.c.l.b16 %v4719
    %v4798 = vunpack.c.l.b16 %v4720
    %v4799 = vunpack.c.h.b16 %v4720
    %v4800 = vunpack.c.l.b16 %v4721
    %v4801 = vunpack.c.l.b16 %v4722
    %v4802 = vunpack.c.h.b16 %v4722
    %v4803 = vunpack.c.l.b16 %v4723
    %v4804 = vpack.c.b16 %v4759, %v4756
    %v4805 = vpack.c.b16 %v4760, %v4757
    %v4806 = vpack.c.b16 %v4761, %v4758
    %v4807 = vpack.c.b16 %v4765, %v4762
    %v4808 = vpack.c.b16 %v4766, %v4763
    %v4809 = vpack.c.b16 %v4767, %v4764
    %v4810 = vpack.c.b16 %v4771, %v4768
    %v4811 = vpack.c.b16 %v4772, %v4769
    %v4812 = vpack.c.b16 %v4773, %v4770
    %v4813 = vpack.c.b16 %v4777, %v4774
    %v4814 = vpack.c.b16 %v4778, %v4775
    %v4815 = vpack.c.b16 %v4779, %v4776
    %v4816 = vpack.c.b16 %v4783, %v4780
    %v4817 = vpack.c.b16 %v4784, %v4781
    %v4818 = vpack.c.b16 %v4785, %v4782
    %v4819 = vpack.c.b16 %v4789, %v4786
    %v4820 = vpack.c.b16 %v4790, %v4787
    %v4821 = vpack.c.b16 %v4791, %v4788
    %v4822 = vpack.c.b16 %v4795, %v4792
    %v4823 = vpack.c.b16 %v4796, %v4793
    %v4824 = vpack.c.b16 %v4797, %v4794
    %v4825 = vpack.c.b16 %v4801, %v4798
    %v4826 = vpack.c.b16 %v4802, %v4799
    %v4827 = vpack.c.b16 %v4803, %v4800
    %4852 = vmatprep.subr.bf16.mxu0 %v4805
    %4853 = vmatpush1.bf16.msra.mxu0 %v4804
    %4854 = vmatprep.subr.bf16.mxu0 %v4808
    %4855 = vmatpush1.bf16.msra.mxu0 %v4807
    %4856 = vmatprep.subr.bf16.mxu0 %v4811
    %4857 = vmatpush1.bf16.msra.mxu0 %v4810
    %4858 = vmatprep.subr.bf16.mxu0 %v4814
    %4859 = vmatpush1.bf16.msra.mxu0 %v4813
    %4860 = vmatprep.subr.bf16.mxu0 %v4817
    %4861 = vmatpush1.bf16.msra.mxu0 %v4816
    %4862 = vmatprep.subr.bf16.mxu0 %v4820
    %4863 = vmatpush1.bf16.msra.mxu0 %v4819
    %4864 = vmatprep.subr.bf16.mxu0 %v4823
    %4865 = vmatpush1.bf16.msra.mxu0 %v4822
    %4866 = vmatprep.subr.bf16.mxu0 %v4826
    %4867 = vmatpush1.bf16.msra.mxu0 %v4825
    %4868 = vmatprep.subr.bf16.mxu0 0
    %4869 = vmatpush1.bf16.msra.mxu0 0
    %4870 = vmatprep.subr.bf16.mxu0 0
    %4871 = vmatpush1.bf16.msra.mxu0 0
    %4872 = vmatprep.subr.bf16.mxu0 0
    %4873 = vmatpush1.bf16.msra.mxu0 0
    %4874 = vmatprep.subr.bf16.mxu0 0
    %4875 = vmatpush1.bf16.msra.mxu0 0
    %4876 = vmatprep.subr.bf16.mxu0 0
    %4877 = vmatpush1.bf16.msra.mxu0 0
    %4878 = vmatprep.subr.bf16.mxu0 0
    %4879 = vmatpush1.bf16.msra.mxu0 0
    %4880 = vmatprep.subr.bf16.mxu0 0
    %4881 = vmatpush1.bf16.msra.mxu0 0
    %4882 = vmatprep.subr.bf16.mxu0 0
    %4883 = vmatpush1.bf16.msra.mxu0 0
    %4884 = vmatprep.mubr.bf16.mxu0 0
    %4885 = vmatmul.mubr.bf16.gmra.mrb[0].mxu0 %v4691
    %v4886 = vpop.f32.mrb[0].mxu0
    %v4887 = vadd.f32 0.0, %v4886
    %v4888 = vpop.f32.mrb[0].mxu0
    %v4889 = vadd.f32 0.0, %v4888
    %v4890 = vpop.f32.mrb[0].mxu0
    %v4891 = vpop.f32.mrb[0].mxu0
    %4892 = vdwg.mxu0
    %4893 = vmatprep.subr.bf16.mxu0 0
    %4894 = vmatpush1.bf16.msra.mxu0 %v4806
    %4895 = vmatprep.subr.bf16.mxu0 0
    %4896 = vmatpush1.bf16.msra.mxu0 %v4809
    %4897 = vmatprep.subr.bf16.mxu0 0
    %4898 = vmatpush1.bf16.msra.mxu0 %v4812
    %4899 = vmatprep.subr.bf16.mxu0 0
    %4900 = vmatpush1.bf16.msra.mxu0 %v4815
    %4901 = vmatprep.subr.bf16.mxu0 0
    %4902 = vmatpush1.bf16.msra.mxu0 %v4818
    %4903 = vmatprep.subr.bf16.mxu0 0
    %4904 = vmatpush1.bf16.msra.mxu0 %v4821
    %4905 = vmatprep.subr.bf16.mxu0 0
    %4906 = vmatpush1.bf16.msra.mxu0 %v4824
    %4907 = vmatprep.subr.bf16.mxu0 0
    %4908 = vmatpush1.bf16.msra.mxu0 %v4827
    %4909 = vmatprep.subr.bf16.mxu0 0
    %4910 = vmatpush1.bf16.msra.mxu0 0
    %4911 = vmatprep.subr.bf16.mxu0 0
    %4912 = vmatpush1.bf16.msra.mxu0 0
    %4913 = vmatprep.subr.bf16.mxu0 0
    %4914 = vmatpush1.bf16.msra.mxu0 0
    %4915 = vmatprep.subr.bf16.mxu0 0
    %4916 = vmatpush1.bf16.msra.mxu0 0
    %4917 = vmatprep.subr.bf16.mxu0 0
    %4918 = vmatpush1.bf16.msra.mxu0 0
    %4919 = vmatprep.subr.bf16.mxu0 0
    %4920 = vmatpush1.bf16.msra.mxu0 0
    %4921 = vmatprep.subr.bf16.mxu0 0
    %4922 = vmatpush1.bf16.msra.mxu0 0
    %4923 = vmatprep.subr.bf16.mxu0 0
    %4924 = vmatpush1.bf16.msra.mxu0 0
    %4925 = vmatprep.mubr.bf16.mxu0 0
    %4926 = vmatmul.mubr.bf16.gmra.mrb[0].mxu0 %v4691
    %v4927 = vpop.f32.mrb[0].mxu0
    %v4928 = vadd.f32 0.0, %v4927
    %v4929 = vpop.f32.mrb[0].mxu0
    %v4930 = vpop.f32.mrb[0].mxu0
    %v4931 = vpop.f32.mrb[0].mxu0
    %4932 = vdwg.mxu0
    %v4933 = vadd.f32 %v4688, %v4887
    %v4934 = vadd.f32 %v4689, %v4889
    %v4935 = vxor.u32 %v4933, 2147483648
    %v4936 = vxor.u32 %v4934, 2147483648
    %v4937 = vmul.f32 %v4935, 1.442695
    %v4938 = vpow.pop %v4937
    %v4939 = vmul.f32 %v4936, 1.442695
    %v4940 = vpow.pop %v4939
    %v4941 = vadd.f32 %v4938, 1.0
    %v4942 = vadd.f32 %v4940, 1.0
    %v4943 = vrcp.pop %v4941
    %v4944 = vmul.f32 1.0, %v4943
    %v4945 = vrcp.pop %v4942
    %v4946 = vmul.f32 1.0, %v4945
    %v4947 = vadd.f32 %v4928, %v3076
    %v4948 = vmul.f32 %v4944, %v4947
    %v4949 = vadd.f32 %v4690, %v4948
    %v4950 = vtanh.pop %v4949
    %v4951 = vsub.f32 %v4686, %v4950
    %v4952 = vmul.f32 %v4946, %v4951
    %v4953 = vadd.f32 %v4950, %v4952
    %4954 = vst [vmem:[#allocation10 + $0x38] sm:$0xff] %v4953
    // Predicated region
    $region50: #{tpu_custom_call.1} parent=1 // pred_check
      _
    $region51: #{tpu_custom_call.1} parent=1 // pred_check_branch
      %4956 = sbr.rel (0) target = $region53
    $region52: #{tpu_custom_call.1} parent=1 // pred_region
      %s4958 = ssub.s32 1024, 1024
      %4959 = vsyncadd [#allocation6], %s4958
      %s4960 = sshll.u32 [#allocation10], 4
      %s4961 = int_to_ptr.vmem [resolvable:$true] %s4960
      %4966 = dma.vmem_to_hbm [thread:$0]  %s4961, 1024, %s9, [#allocation6], 128, 128, 8
    $region53: #{tpu_custom_call.1} parent=1 // pred_fallthru
      _
    // Predicated region
    $region54: #{tpu_custom_call.1} parent=1 // pred_check
      _
    $region55: #{tpu_custom_call.1} parent=1 // pred_check_branch
      %4968 = sbr.rel (0) target = $region57
    $region56: #{tpu_custom_call.1} parent=1 // pred_region
      %4969 = dma.done [#allocation6], 1024
    $region57: #{tpu_custom_call.1} parent=1 // pred_fallthru
      _
    %4970 = vsyncpa [#allocation5], 1
    %4971 = vsyncpa [#allocation8], 1
    %4972 = vsyncpa [#allocation6], 1

</llo_original>
